<compile_context>
chip_gen: v6e
topology: v6e:2x2x1
jax: 0.10.0
libtpu: 0.0.40
codegen_flags: <defaults>
</compile_context>

<pallas_src>
import functools
import math

import jax
import jax.numpy as jnp
from jax.experimental import pallas as pl
from jax.experimental.pallas import tpu as pltpu  # noqa: F401  (TPU backend / params)


# ---------------------------------------------------------------------------
# Fused kernel: all encoder layers + fc + sigmoid in one pallas_call
# ---------------------------------------------------------------------------

def fused_transformer_kernel(x_ref, wqkv_ref, bqkv_ref, wo_ref, bo_ref,
                             g1_ref, be1_ref, w1_ref, b1_ref,
                             w2_ref, b2_ref, g2_ref, be2_ref,
                             fcw_ref, fcb_ref, o_ref,
                             *, num_heads, seq_len):
    NS, E = x_ref.shape                 # NS = N * S
    S = seq_len
    N = NS // S
    L = wqkv_ref.shape[0]               # number of encoder layers
    H = num_heads
    Dh = E // H
    scale = 1.0 / math.sqrt(Dh)
    eps = 1e-5                           # PyTorch LayerNorm default

    x = x_ref[...]                       # (NS, E) fp32, resident in VMEM/vregs

    for l in range(L):                   # static unroll over layers
        # ---------------- multi-head self-attention ----------------
        # Fused QKV projection on the whole flattened batch (weights pre-transposed).
        qkv = jnp.dot(x, wqkv_ref[l], preferred_element_type=jnp.float32) + bqkv_ref[l]  # (NS, 3E)
        wo = wo_ref[l]                   # (E, E) == Wo^T (pre-transposed)

        attn = jnp.zeros((NS, E), jnp.float32)
        for h in range(H):               # static unroll over heads (H = 4)
            qh = (qkv[:, h * Dh:(h + 1) * Dh] * scale).reshape(N, S, Dh)
            kh = qkv[:, E + h * Dh:E + (h + 1) * Dh].reshape(N, S, Dh)
            vh = qkv[:, 2 * E + h * Dh:2 * E + (h + 1) * Dh].reshape(N, S, Dh)

            # scores over the sequence axis, batched over N (no materialized k^T)
            s = jnp.einsum('nqd,nkd->nqk', qh, kh,
                           preferred_element_type=jnp.float32)          # (N, S, S)
            s = s - jnp.max(s, axis=-1, keepdims=True)
            p = jnp.exp(s)
            p = p * pl.reciprocal(jnp.sum(p, axis=-1, keepdims=True), approx=True)

            oh = jnp.einsum('nqk,nkd->nqd', p, vh,
                            preferred_element_type=jnp.float32)         # (N, S, Dh)

            # concat(head_outs) @ Wo^T  ==  sum_h  o_h @ Wo^T[h*Dh:(h+1)*Dh, :]
            attn = attn + jnp.dot(oh.reshape(NS, Dh),
                                  wo[h * Dh:(h + 1) * Dh, :],
                                  preferred_element_type=jnp.float32)   # (NS, E)
        attn = attn + bo_ref[l]          # (1, E) broadcast over rows

        # ---------------- residual + LayerNorm1 ----------------
        h1 = x + attn
        mu1 = jnp.mean(h1, axis=-1, keepdims=True)
        var1 = jnp.mean((h1 - mu1) ** 2, axis=-1, keepdims=True)
        h1 = (h1 - mu1) * jax.lax.rsqrt(var1 + eps) * g1_ref[l] + be1_ref[l]

        # ---------------- FFN: linear1 -> ReLU -> linear2 ----------------
        ff = jnp.dot(h1, w1_ref[l], preferred_element_type=jnp.float32) + b1_ref[l]
        ff = jnp.maximum(ff, 0.0)
        ff = jnp.dot(ff, w2_ref[l], preferred_element_type=jnp.float32) + b2_ref[l]

        # ---------------- residual + LayerNorm2 ----------------
        h2 = h1 + ff
        mu2 = jnp.mean(h2, axis=-1, keepdims=True)
        var2 = jnp.mean((h2 - mu2) ** 2, axis=-1, keepdims=True)
        x = (h2 - mu2) * jax.lax.rsqrt(var2 + eps) * g2_ref[l] + be2_ref[l]

    # ---------------- head ----------------
    # PyTorch `encoded[:, -1, :]` on (S, N, E) selects the LAST BATCH element
    # for all sequence positions -> (S, E).  In the flattened (N*S, E) layout
    # those are the last S rows.
    x_last = x[(N - 1) * S:, :]                                          # (S, E)
    logits = jnp.dot(x_last, fcw_ref[...],
                     preferred_element_type=jnp.float32) + fcb_ref[...]  # (S, 1)
    o_ref[...] = pl.reciprocal(1.0 + jnp.exp(-logits), approx=True)       # sigmoid


# ---------------------------------------------------------------------------
# Wrapper
# ---------------------------------------------------------------------------

def transformer_model_forward(src, params, num_heads):
    """src: (S, N, E) (PyTorch batch_first=False). Returns (S, 1)."""
    S, N, E = src.shape
    # One-time layout prep outside the kernel: (S,N,E) -> (N,S,E) -> (N*S, E).
    x = jnp.transpose(src, (1, 0, 2)).reshape(N * S, E).astype(jnp.float32)

    kernel = functools.partial(fused_transformer_kernel,
                               num_heads=num_heads, seq_len=S)
    # Single block, no grid: every operand (activations + all layer weights,
    # <100 KB total) lives in VMEM for the whole fused forward pass.
    return pl.pallas_call(
        kernel,
        out_shape=jax.ShapeDtypeStruct((S, 1), jnp.float32),
    )(x,
      params["wqkv_t"], params["bqkv"], params["wo_t"], params["bo"],
      params["g1"], params["be1"], params["w1_t"], params["b1"],
      params["w2_t"], params["b2"], params["g2"], params["be2"],
      params["fcw_t"], params["fcb"])


# ---------------------------------------------------------------------------
# Deterministic parameter init (PyTorch shapes, then pre-transposed + stacked)
# ---------------------------------------------------------------------------

def init_params(key, E, num_layers, F):
    scale = 0.05
    wqkv_t, bqkv, wo_t, bo = [], [], [], []
    g1, be1, w1_t, b1, w2_t, b2, g2, be2 = [], [], [], [], [], [], [], []
    for _ in range(num_layers):
        key, *ks = jax.random.split(key, 7)
        in_proj_w = scale * jax.random.normal(ks[0], (3 * E, E), jnp.float32)  # PyTorch (3E, E)
        in_proj_b = scale * jax.random.normal(ks[1], (3 * E,), jnp.float32)
        out_proj_w = scale * jax.random.normal(ks[2], (E, E), jnp.float32)     # PyTorch (E, E)
        out_proj_b = scale * jax.random.normal(ks[3], (E,), jnp.float32)
        lin1_w = scale * jax.random.normal(ks[4], (F, E), jnp.float32)         # PyTorch (F, E)
        lin2_w = scale * jax.random.normal(ks[5], (E, F), jnp.float32)         # PyTorch (E, F)

        wqkv_t.append(in_proj_w.T)                    # (E, 3E)  pre-transposed
        bqkv.append(in_proj_b.reshape(1, 3 * E))
        wo_t.append(out_proj_w.T)                     # (E, E)   pre-transposed
        bo.append(out_proj_b.reshape(1, E))
        g1.append(jnp.ones((1, E), jnp.float32))
        be1.append(jnp.zeros((1, E), jnp.float32))
        w1_t.append(lin1_w.T)                         # (E, F)   pre-transposed
        b1.append(jnp.zeros((1, F), jnp.float32))
        w2_t.append(lin2_w.T)                         # (F, E)   pre-transposed
        b2.append(jnp.zeros((1, E), jnp.float32))
        g2.append(jnp.ones((1, E), jnp.float32))
        be2.append(jnp.zeros((1, E), jnp.float32))

    key, k1, k2 = jax.random.split(key, 3)
    fc_w = scale * jax.random.normal(k1, (1, E), jnp.float32)   # PyTorch (1, E)
    fc_b = scale * jax.random.normal(k2, (1,), jnp.float32)

    return dict(
        wqkv_t=jnp.stack(wqkv_t), bqkv=jnp.stack(bqkv),
        wo_t=jnp.stack(wo_t), bo=jnp.stack(bo),
        g1=jnp.stack(g1), be1=jnp.stack(be1),
        w1_t=jnp.stack(w1_t), b1=jnp.stack(b1),
        w2_t=jnp.stack(w2_t), b2=jnp.stack(b2),
        g2=jnp.stack(g2), be2=jnp.stack(be2),
        fcw_t=fc_w.T,                                  # (E, 1)
        fcb=fc_b.reshape(1, 1),
    )


# ---------------------------------------------------------------------------
# Main
# ---------------------------------------------------------------------------

if __name__ == "__main__":
    # Model config: input_size=32, num_heads=4, num_layers=2, dim_feedforward=64
    # (dropout ignored: eval-mode identity).
    E, H, L, F = 32, 4, 2, 64
    S, N = 8, 2                                      # seq len, batch

    key = jax.random.PRNGKey(0)
    key, pk, xk = jax.random.split(key, 3)
    params = init_params(pk, E, L, F)
    src = jax.random.normal(xk, (S, N, E), jnp.float32)   # (S, N, E), batch_first=False

    fwd = jax.jit(functools.partial(transformer_model_forward, num_heads=H))
    out = fwd(src, params)                            # (S, 1)
    out = jax.block_until_ready(out)
    assert out.shape == (S, 1) and bool(jnp.all(jnp.isfinite(out)))
    print("KERNEL_OK")
</pallas_src>

<mosaic_0001>
module attributes {stable_mosaic.version = 11 : i64} {
  func.func @fused_transformer_kernel(%arg0: memref<16x32xf32, #tpu.memory_space<vmem>>, %arg1: memref<2x32x96xf32, #tpu.memory_space<vmem>>, %arg2: memref<2x1x96xf32, #tpu.memory_space<vmem>>, %arg3: memref<2x32x32xf32, #tpu.memory_space<vmem>>, %arg4: memref<2x1x32xf32, #tpu.memory_space<vmem>>, %arg5: memref<2x1x32xf32, #tpu.memory_space<vmem>>, %arg6: memref<2x1x32xf32, #tpu.memory_space<vmem>>, %arg7: memref<2x32x64xf32, #tpu.memory_space<vmem>>, %arg8: memref<2x1x64xf32, #tpu.memory_space<vmem>>, %arg9: memref<2x64x32xf32, #tpu.memory_space<vmem>>, %arg10: memref<2x1x32xf32, #tpu.memory_space<vmem>>, %arg11: memref<2x1x32xf32, #tpu.memory_space<vmem>>, %arg12: memref<2x1x32xf32, #tpu.memory_space<vmem>>, %arg13: memref<32x1xf32, #tpu.memory_space<vmem>>, %arg14: memref<1x1xf32, #tpu.memory_space<vmem>>, %arg15: memref<8x1xf32, #tpu.memory_space<vmem>>) attributes {dimension_semantics = [], scalar_prefetch = 0 : i64, scratch_operands = 0 : i64, tpu.core_type = #tpu.core_type<tc>} {
    %c0 = arith.constant 0 : index
    %c0_0 = arith.constant 0 : index
    %0 = vector.load %arg0[%c0, %c0_0] : memref<16x32xf32, #tpu.memory_space<vmem>>, vector<16x32xf32>
    %c0_1 = arith.constant 0 : index
    %c0_2 = arith.constant 0 : index
    %c0_3 = arith.constant 0 : index
    %1 = vector.load %arg1[%c0_1, %c0_2, %c0_3] : memref<2x32x96xf32, #tpu.memory_space<vmem>>, vector<1x32x96xf32>
    %2 = vector.shape_cast %1 : vector<1x32x96xf32> to vector<32x96xf32>
    %cst = arith.constant dense<0.000000e+00> : vector<16x96xf32>
    %3 = tpu.matmul %0, %2, %cst {dimension_numbers = #tpu.dot_dimension_numbers<[1], [0], [0], [1], [0, 0, 1, 1], [], []>} : vector<16x32xf32>, vector<32x96xf32>, vector<16x96xf32> -> vector<16x96xf32>
    %c0_4 = arith.constant 0 : index
    %c0_5 = arith.constant 0 : index
    %c0_6 = arith.constant 0 : index
    %4 = vector.load %arg2[%c0_4, %c0_5, %c0_6] : memref<2x1x96xf32, #tpu.memory_space<vmem>>, vector<1x1x96xf32>
    %5 = vector.shape_cast %4 : vector<1x1x96xf32> to vector<1x96xf32>
    %6 = vector.broadcast %5 : vector<1x96xf32> to vector<16x96xf32>
    %7 = arith.addf %3, %6 : vector<16x96xf32>
    %c0_7 = arith.constant 0 : index
    %c0_8 = arith.constant 0 : index
    %c0_9 = arith.constant 0 : index
    %8 = vector.load %arg3[%c0_7, %c0_8, %c0_9] : memref<2x32x32xf32, #tpu.memory_space<vmem>>, vector<1x32x32xf32>
    %9 = vector.shape_cast %8 : vector<1x32x32xf32> to vector<32x32xf32>
    %cst_10 = arith.constant 0.000000e+00 : f32
    %10 = vector.broadcast %cst_10 : f32 to vector<16x32xf32>
    %11 = vector.extract_strided_slice %7 {offsets = [0, 0], sizes = [16, 8], strides = [1, 1]} : vector<16x96xf32> to vector<16x8xf32>
    %cst_11 = arith.constant 0.353553385 : f32
    %12 = vector.broadcast %cst_11 : f32 to vector<16x8xf32>
    %13 = arith.mulf %11, %12 : vector<16x8xf32>
    %14 = vector.shape_cast %13 : vector<16x8xf32> to vector<2x8x8xf32>
    %15 = vector.extract_strided_slice %7 {offsets = [0, 32], sizes = [16, 8], strides = [1, 1]} : vector<16x96xf32> to vector<16x8xf32>
    %16 = vector.shape_cast %15 : vector<16x8xf32> to vector<2x8x8xf32>
    %17 = vector.extract_strided_slice %7 {offsets = [0, 64], sizes = [16, 8], strides = [1, 1]} : vector<16x96xf32> to vector<16x8xf32>
    %18 = vector.shape_cast %17 : vector<16x8xf32> to vector<2x8x8xf32>
    "tpu.trace_start"() <{level = 10 : i32, message = "nqd,nkd->nqk"}> : () -> ()
    %cst_12 = arith.constant dense<0.000000e+00> : vector<2x8x8xf32>
    %19 = tpu.matmul %14, %16, %cst_12 {dimension_numbers = #tpu.dot_dimension_numbers<[2], [2], [1], [1], [0, 0, 0, 1, 1, 1], [0], [0]>} : vector<2x8x8xf32>, vector<2x8x8xf32>, vector<2x8x8xf32> -> vector<2x8x8xf32>
    "tpu.trace_stop"() : () -> ()
    %cst_13 = arith.constant dense<0xFF800000> : vector<2x8xf32>
    %20 = vector.multi_reduction <maximumf>, %19, %cst_13 [2] : vector<2x8x8xf32> to vector<2x8xf32>
    %21 = vector.shape_cast %20 : vector<2x8xf32> to vector<2x8x1xf32>
    %22 = vector.broadcast %21 : vector<2x8x1xf32> to vector<2x8x8xf32>
    %23 = arith.subf %19, %22 : vector<2x8x8xf32>
    %24 = math.exp %23 : vector<2x8x8xf32>
    %cst_14 = arith.constant dense<0.000000e+00> : vector<2x8xf32>
    %25 = vector.multi_reduction <add>, %24, %cst_14 [2] : vector<2x8x8xf32> to vector<2x8xf32>
    %26 = vector.shape_cast %25 : vector<2x8xf32> to vector<2x8x1xf32>
    %27 = tpu.reciprocal %26 {approx = true} : vector<2x8x1xf32> -> vector<2x8x1xf32>
    %28 = vector.broadcast %27 : vector<2x8x1xf32> to vector<2x8x8xf32>
    %29 = arith.mulf %24, %28 : vector<2x8x8xf32>
    "tpu.trace_start"() <{level = 10 : i32, message = "nqk,nkd->nqd"}> : () -> ()
    %cst_15 = arith.constant dense<0.000000e+00> : vector<2x8x8xf32>
    %30 = tpu.matmul %29, %18, %cst_15 {dimension_numbers = #tpu.dot_dimension_numbers<[2], [1], [1], [2], [0, 0, 0, 1, 1, 2], [0], [0]>} : vector<2x8x8xf32>, vector<2x8x8xf32>, vector<2x8x8xf32> -> vector<2x8x8xf32>
    "tpu.trace_stop"() : () -> ()
    %31 = vector.shape_cast %30 : vector<2x8x8xf32> to vector<16x8xf32>
    %32 = vector.extract_strided_slice %9 {offsets = [0, 0], sizes = [8, 32], strides = [1, 1]} : vector<32x32xf32> to vector<8x32xf32>
    %cst_16 = arith.constant dense<0.000000e+00> : vector<16x32xf32>
    %33 = tpu.matmul %31, %32, %cst_16 {dimension_numbers = #tpu.dot_dimension_numbers<[1], [0], [0], [1], [0, 0, 1, 1], [], []>} : vector<16x8xf32>, vector<8x32xf32>, vector<16x32xf32> -> vector<16x32xf32>
    %34 = arith.addf %10, %33 : vector<16x32xf32>
    %35 = vector.extract_strided_slice %7 {offsets = [0, 8], sizes = [16, 8], strides = [1, 1]} : vector<16x96xf32> to vector<16x8xf32>
    %cst_17 = arith.constant 0.353553385 : f32
    %36 = vector.broadcast %cst_17 : f32 to vector<16x8xf32>
    %37 = arith.mulf %35, %36 : vector<16x8xf32>
    %38 = vector.shape_cast %37 : vector<16x8xf32> to vector<2x8x8xf32>
    %39 = vector.extract_strided_slice %7 {offsets = [0, 40], sizes = [16, 8], strides = [1, 1]} : vector<16x96xf32> to vector<16x8xf32>
    %40 = vector.shape_cast %39 : vector<16x8xf32> to vector<2x8x8xf32>
    %41 = vector.extract_strided_slice %7 {offsets = [0, 72], sizes = [16, 8], strides = [1, 1]} : vector<16x96xf32> to vector<16x8xf32>
    %42 = vector.shape_cast %41 : vector<16x8xf32> to vector<2x8x8xf32>
    "tpu.trace_start"() <{level = 10 : i32, message = "nqd,nkd->nqk"}> : () -> ()
    %cst_18 = arith.constant dense<0.000000e+00> : vector<2x8x8xf32>
    %43 = tpu.matmul %38, %40, %cst_18 {dimension_numbers = #tpu.dot_dimension_numbers<[2], [2], [1], [1], [0, 0, 0, 1, 1, 1], [0], [0]>} : vector<2x8x8xf32>, vector<2x8x8xf32>, vector<2x8x8xf32> -> vector<2x8x8xf32>
    "tpu.trace_stop"() : () -> ()
    %cst_19 = arith.constant dense<0xFF800000> : vector<2x8xf32>
    %44 = vector.multi_reduction <maximumf>, %43, %cst_19 [2] : vector<2x8x8xf32> to vector<2x8xf32>
    %45 = vector.shape_cast %44 : vector<2x8xf32> to vector<2x8x1xf32>
    %46 = vector.broadcast %45 : vector<2x8x1xf32> to vector<2x8x8xf32>
    %47 = arith.subf %43, %46 : vector<2x8x8xf32>
    %48 = math.exp %47 : vector<2x8x8xf32>
    %cst_20 = arith.constant dense<0.000000e+00> : vector<2x8xf32>
    %49 = vector.multi_reduction <add>, %48, %cst_20 [2] : vector<2x8x8xf32> to vector<2x8xf32>
    %50 = vector.shape_cast %49 : vector<2x8xf32> to vector<2x8x1xf32>
    %51 = tpu.reciprocal %50 {approx = true} : vector<2x8x1xf32> -> vector<2x8x1xf32>
    %52 = vector.broadcast %51 : vector<2x8x1xf32> to vector<2x8x8xf32>
    %53 = arith.mulf %48, %52 : vector<2x8x8xf32>
    "tpu.trace_start"() <{level = 10 : i32, message = "nqk,nkd->nqd"}> : () -> ()
    %cst_21 = arith.constant dense<0.000000e+00> : vector<2x8x8xf32>
    %54 = tpu.matmul %53, %42, %cst_21 {dimension_numbers = #tpu.dot_dimension_numbers<[2], [1], [1], [2], [0, 0, 0, 1, 1, 2], [0], [0]>} : vector<2x8x8xf32>, vector<2x8x8xf32>, vector<2x8x8xf32> -> vector<2x8x8xf32>
    "tpu.trace_stop"() : () -> ()
    %55 = vector.shape_cast %54 : vector<2x8x8xf32> to vector<16x8xf32>
    %56 = vector.extract_strided_slice %9 {offsets = [8, 0], sizes = [8, 32], strides = [1, 1]} : vector<32x32xf32> to vector<8x32xf32>
    %cst_22 = arith.constant dense<0.000000e+00> : vector<16x32xf32>
    %57 = tpu.matmul %55, %56, %cst_22 {dimension_numbers = #tpu.dot_dimension_numbers<[1], [0], [0], [1], [0, 0, 1, 1], [], []>} : vector<16x8xf32>, vector<8x32xf32>, vector<16x32xf32> -> vector<16x32xf32>
    %58 = arith.addf %34, %57 : vector<16x32xf32>
    %59 = vector.extract_strided_slice %7 {offsets = [0, 16], sizes = [16, 8], strides = [1, 1]} : vector<16x96xf32> to vector<16x8xf32>
    %cst_23 = arith.constant 0.353553385 : f32
    %60 = vector.broadcast %cst_23 : f32 to vector<16x8xf32>
    %61 = arith.mulf %59, %60 : vector<16x8xf32>
    %62 = vector.shape_cast %61 : vector<16x8xf32> to vector<2x8x8xf32>
    %63 = vector.extract_strided_slice %7 {offsets = [0, 48], sizes = [16, 8], strides = [1, 1]} : vector<16x96xf32> to vector<16x8xf32>
    %64 = vector.shape_cast %63 : vector<16x8xf32> to vector<2x8x8xf32>
    %65 = vector.extract_strided_slice %7 {offsets = [0, 80], sizes = [16, 8], strides = [1, 1]} : vector<16x96xf32> to vector<16x8xf32>
    %66 = vector.shape_cast %65 : vector<16x8xf32> to vector<2x8x8xf32>
    "tpu.trace_start"() <{level = 10 : i32, message = "nqd,nkd->nqk"}> : () -> ()
    %cst_24 = arith.constant dense<0.000000e+00> : vector<2x8x8xf32>
    %67 = tpu.matmul %62, %64, %cst_24 {dimension_numbers = #tpu.dot_dimension_numbers<[2], [2], [1], [1], [0, 0, 0, 1, 1, 1], [0], [0]>} : vector<2x8x8xf32>, vector<2x8x8xf32>, vector<2x8x8xf32> -> vector<2x8x8xf32>
    "tpu.trace_stop"() : () -> ()
    %cst_25 = arith.constant dense<0xFF800000> : vector<2x8xf32>
    %68 = vector.multi_reduction <maximumf>, %67, %cst_25 [2] : vector<2x8x8xf32> to vector<2x8xf32>
    %69 = vector.shape_cast %68 : vector<2x8xf32> to vector<2x8x1xf32>
    %70 = vector.broadcast %69 : vector<2x8x1xf32> to vector<2x8x8xf32>
    %71 = arith.subf %67, %70 : vector<2x8x8xf32>
    %72 = math.exp %71 : vector<2x8x8xf32>
    %cst_26 = arith.constant dense<0.000000e+00> : vector<2x8xf32>
    %73 = vector.multi_reduction <add>, %72, %cst_26 [2] : vector<2x8x8xf32> to vector<2x8xf32>
    %74 = vector.shape_cast %73 : vector<2x8xf32> to vector<2x8x1xf32>
    %75 = tpu.reciprocal %74 {approx = true} : vector<2x8x1xf32> -> vector<2x8x1xf32>
    %76 = vector.broadcast %75 : vector<2x8x1xf32> to vector<2x8x8xf32>
    %77 = arith.mulf %72, %76 : vector<2x8x8xf32>
    "tpu.trace_start"() <{level = 10 : i32, message = "nqk,nkd->nqd"}> : () -> ()
    %cst_27 = arith.constant dense<0.000000e+00> : vector<2x8x8xf32>
    %78 = tpu.matmul %77, %66, %cst_27 {dimension_numbers = #tpu.dot_dimension_numbers<[2], [1], [1], [2], [0, 0, 0, 1, 1, 2], [0], [0]>} : vector<2x8x8xf32>, vector<2x8x8xf32>, vector<2x8x8xf32> -> vector<2x8x8xf32>
    "tpu.trace_stop"() : () -> ()
    %79 = vector.shape_cast %78 : vector<2x8x8xf32> to vector<16x8xf32>
    %80 = vector.extract_strided_slice %9 {offsets = [16, 0], sizes = [8, 32], strides = [1, 1]} : vector<32x32xf32> to vector<8x32xf32>
    %cst_28 = arith.constant dense<0.000000e+00> : vector<16x32xf32>
    %81 = tpu.matmul %79, %80, %cst_28 {dimension_numbers = #tpu.dot_dimension_numbers<[1], [0], [0], [1], [0, 0, 1, 1], [], []>} : vector<16x8xf32>, vector<8x32xf32>, vector<16x32xf32> -> vector<16x32xf32>
    %82 = arith.addf %58, %81 : vector<16x32xf32>
    %83 = vector.extract_strided_slice %7 {offsets = [0, 24], sizes = [16, 8], strides = [1, 1]} : vector<16x96xf32> to vector<16x8xf32>
    %cst_29 = arith.constant 0.353553385 : f32
    %84 = vector.broadcast %cst_29 : f32 to vector<16x8xf32>
    %85 = arith.mulf %83, %84 : vector<16x8xf32>
    %86 = vector.shape_cast %85 : vector<16x8xf32> to vector<2x8x8xf32>
    %87 = vector.extract_strided_slice %7 {offsets = [0, 56], sizes = [16, 8], strides = [1, 1]} : vector<16x96xf32> to vector<16x8xf32>
    %88 = vector.shape_cast %87 : vector<16x8xf32> to vector<2x8x8xf32>
    %89 = vector.extract_strided_slice %7 {offsets = [0, 88], sizes = [16, 8], strides = [1, 1]} : vector<16x96xf32> to vector<16x8xf32>
    %90 = vector.shape_cast %89 : vector<16x8xf32> to vector<2x8x8xf32>
    "tpu.trace_start"() <{level = 10 : i32, message = "nqd,nkd->nqk"}> : () -> ()
    %cst_30 = arith.constant dense<0.000000e+00> : vector<2x8x8xf32>
    %91 = tpu.matmul %86, %88, %cst_30 {dimension_numbers = #tpu.dot_dimension_numbers<[2], [2], [1], [1], [0, 0, 0, 1, 1, 1], [0], [0]>} : vector<2x8x8xf32>, vector<2x8x8xf32>, vector<2x8x8xf32> -> vector<2x8x8xf32>
    "tpu.trace_stop"() : () -> ()
    %cst_31 = arith.constant dense<0xFF800000> : vector<2x8xf32>
    %92 = vector.multi_reduction <maximumf>, %91, %cst_31 [2] : vector<2x8x8xf32> to vector<2x8xf32>
    %93 = vector.shape_cast %92 : vector<2x8xf32> to vector<2x8x1xf32>
    %94 = vector.broadcast %93 : vector<2x8x1xf32> to vector<2x8x8xf32>
    %95 = arith.subf %91, %94 : vector<2x8x8xf32>
    %96 = math.exp %95 : vector<2x8x8xf32>
    %cst_32 = arith.constant dense<0.000000e+00> : vector<2x8xf32>
    %97 = vector.multi_reduction <add>, %96, %cst_32 [2] : vector<2x8x8xf32> to vector<2x8xf32>
    %98 = vector.shape_cast %97 : vector<2x8xf32> to vector<2x8x1xf32>
    %99 = tpu.reciprocal %98 {approx = true} : vector<2x8x1xf32> -> vector<2x8x1xf32>
    %100 = vector.broadcast %99 : vector<2x8x1xf32> to vector<2x8x8xf32>
    %101 = arith.mulf %96, %100 : vector<2x8x8xf32>
    "tpu.trace_start"() <{level = 10 : i32, message = "nqk,nkd->nqd"}> : () -> ()
    %cst_33 = arith.constant dense<0.000000e+00> : vector<2x8x8xf32>
    %102 = tpu.matmul %101, %90, %cst_33 {dimension_numbers = #tpu.dot_dimension_numbers<[2], [1], [1], [2], [0, 0, 0, 1, 1, 2], [0], [0]>} : vector<2x8x8xf32>, vector<2x8x8xf32>, vector<2x8x8xf32> -> vector<2x8x8xf32>
    "tpu.trace_stop"() : () -> ()
    %103 = vector.shape_cast %102 : vector<2x8x8xf32> to vector<16x8xf32>
    %104 = vector.extract_strided_slice %9 {offsets = [24, 0], sizes = [8, 32], strides = [1, 1]} : vector<32x32xf32> to vector<8x32xf32>
    %cst_34 = arith.constant dense<0.000000e+00> : vector<16x32xf32>
    %105 = tpu.matmul %103, %104, %cst_34 {dimension_numbers = #tpu.dot_dimension_numbers<[1], [0], [0], [1], [0, 0, 1, 1], [], []>} : vector<16x8xf32>, vector<8x32xf32>, vector<16x32xf32> -> vector<16x32xf32>
    %106 = arith.addf %82, %105 : vector<16x32xf32>
    %c0_35 = arith.constant 0 : index
    %c0_36 = arith.constant 0 : index
    %c0_37 = arith.constant 0 : index
    %107 = vector.load %arg4[%c0_35, %c0_36, %c0_37] : memref<2x1x32xf32, #tpu.memory_space<vmem>>, vector<1x1x32xf32>
    %108 = vector.shape_cast %107 : vector<1x1x32xf32> to vector<1x32xf32>
    %109 = vector.broadcast %108 : vector<1x32xf32> to vector<16x32xf32>
    %110 = arith.addf %106, %109 : vector<16x32xf32>
    %111 = arith.addf %0, %110 : vector<16x32xf32>
    %cst_38 = arith.constant dense<0.000000e+00> : vector<16xf32>
    %112 = vector.multi_reduction <add>, %111, %cst_38 [1] : vector<16x32xf32> to vector<16xf32>
    %113 = vector.shape_cast %112 : vector<16xf32> to vector<16x1xf32>
    %cst_39 = arith.constant 3.200000e+01 : f32
    %114 = vector.broadcast %cst_39 : f32 to vector<16x1xf32>
    %115 = arith.divf %113, %114 : vector<16x1xf32>
    %116 = vector.broadcast %115 : vector<16x1xf32> to vector<16x32xf32>
    %117 = arith.subf %111, %116 : vector<16x32xf32>
    %118 = arith.mulf %117, %117 : vector<16x32xf32>
    %cst_40 = arith.constant dense<0.000000e+00> : vector<16xf32>
    %119 = vector.multi_reduction <add>, %118, %cst_40 [1] : vector<16x32xf32> to vector<16xf32>
    %120 = vector.shape_cast %119 : vector<16xf32> to vector<16x1xf32>
    %cst_41 = arith.constant 3.200000e+01 : f32
    %121 = vector.broadcast %cst_41 : f32 to vector<16x1xf32>
    %122 = arith.divf %120, %121 : vector<16x1xf32>
    %123 = vector.broadcast %115 : vector<16x1xf32> to vector<16x32xf32>
    %124 = arith.subf %111, %123 : vector<16x32xf32>
    %cst_42 = arith.constant 9.99999974E-6 : f32
    %125 = vector.broadcast %cst_42 : f32 to vector<16x1xf32>
    %126 = arith.addf %122, %125 : vector<16x1xf32>
    %127 = math.rsqrt %126 : vector<16x1xf32>
    %128 = vector.broadcast %127 : vector<16x1xf32> to vector<16x32xf32>
    %129 = arith.mulf %124, %128 : vector<16x32xf32>
    %c0_43 = arith.constant 0 : index
    %c0_44 = arith.constant 0 : index
    %c0_45 = arith.constant 0 : index
    %130 = vector.load %arg5[%c0_43, %c0_44, %c0_45] : memref<2x1x32xf32, #tpu.memory_space<vmem>>, vector<1x1x32xf32>
    %131 = vector.shape_cast %130 : vector<1x1x32xf32> to vector<1x32xf32>
    %132 = vector.broadcast %131 : vector<1x32xf32> to vector<16x32xf32>
    %133 = arith.mulf %129, %132 : vector<16x32xf32>
    %c0_46 = arith.constant 0 : index
    %c0_47 = arith.constant 0 : index
    %c0_48 = arith.constant 0 : index
    %134 = vector.load %arg6[%c0_46, %c0_47, %c0_48] : memref<2x1x32xf32, #tpu.memory_space<vmem>>, vector<1x1x32xf32>
    %135 = vector.shape_cast %134 : vector<1x1x32xf32> to vector<1x32xf32>
    %136 = vector.broadcast %135 : vector<1x32xf32> to vector<16x32xf32>
    %137 = arith.addf %133, %136 : vector<16x32xf32>
    %c0_49 = arith.constant 0 : index
    %c0_50 = arith.constant 0 : index
    %c0_51 = arith.constant 0 : index
    %138 = vector.load %arg7[%c0_49, %c0_50, %c0_51] : memref<2x32x64xf32, #tpu.memory_space<vmem>>, vector<1x32x64xf32>
    %139 = vector.shape_cast %138 : vector<1x32x64xf32> to vector<32x64xf32>
    %cst_52 = arith.constant dense<0.000000e+00> : vector<16x64xf32>
    %140 = tpu.matmul %137, %139, %cst_52 {dimension_numbers = #tpu.dot_dimension_numbers<[1], [0], [0], [1], [0, 0, 1, 1], [], []>} : vector<16x32xf32>, vector<32x64xf32>, vector<16x64xf32> -> vector<16x64xf32>
    %c0_53 = arith.constant 0 : index
    %c0_54 = arith.constant 0 : index
    %c0_55 = arith.constant 0 : index
    %141 = vector.load %arg8[%c0_53, %c0_54, %c0_55] : memref<2x1x64xf32, #tpu.memory_space<vmem>>, vector<1x1x64xf32>
    %142 = vector.shape_cast %141 : vector<1x1x64xf32> to vector<1x64xf32>
    %143 = vector.broadcast %142 : vector<1x64xf32> to vector<16x64xf32>
    %144 = arith.addf %140, %143 : vector<16x64xf32>
    %cst_56 = arith.constant 0.000000e+00 : f32
    %145 = vector.broadcast %cst_56 : f32 to vector<16x64xf32>
    %146 = arith.maximumf %144, %145 : vector<16x64xf32>
    %c0_57 = arith.constant 0 : index
    %c0_58 = arith.constant 0 : index
    %c0_59 = arith.constant 0 : index
    %147 = vector.load %arg9[%c0_57, %c0_58, %c0_59] : memref<2x64x32xf32, #tpu.memory_space<vmem>>, vector<1x64x32xf32>
    %148 = vector.shape_cast %147 : vector<1x64x32xf32> to vector<64x32xf32>
    %cst_60 = arith.constant dense<0.000000e+00> : vector<16x32xf32>
    %149 = tpu.matmul %146, %148, %cst_60 {dimension_numbers = #tpu.dot_dimension_numbers<[1], [0], [0], [1], [0, 0, 1, 1], [], []>} : vector<16x64xf32>, vector<64x32xf32>, vector<16x32xf32> -> vector<16x32xf32>
    %c0_61 = arith.constant 0 : index
    %c0_62 = arith.constant 0 : index
    %c0_63 = arith.constant 0 : index
    %150 = vector.load %arg10[%c0_61, %c0_62, %c0_63] : memref<2x1x32xf32, #tpu.memory_space<vmem>>, vector<1x1x32xf32>
    %151 = vector.shape_cast %150 : vector<1x1x32xf32> to vector<1x32xf32>
    %152 = vector.broadcast %151 : vector<1x32xf32> to vector<16x32xf32>
    %153 = arith.addf %149, %152 : vector<16x32xf32>
    %154 = arith.addf %137, %153 : vector<16x32xf32>
    %cst_64 = arith.constant dense<0.000000e+00> : vector<16xf32>
    %155 = vector.multi_reduction <add>, %154, %cst_64 [1] : vector<16x32xf32> to vector<16xf32>
    %156 = vector.shape_cast %155 : vector<16xf32> to vector<16x1xf32>
    %cst_65 = arith.constant 3.200000e+01 : f32
    %157 = vector.broadcast %cst_65 : f32 to vector<16x1xf32>
    %158 = arith.divf %156, %157 : vector<16x1xf32>
    %159 = vector.broadcast %158 : vector<16x1xf32> to vector<16x32xf32>
    %160 = arith.subf %154, %159 : vector<16x32xf32>
    %161 = arith.mulf %160, %160 : vector<16x32xf32>
    %cst_66 = arith.constant dense<0.000000e+00> : vector<16xf32>
    %162 = vector.multi_reduction <add>, %161, %cst_66 [1] : vector<16x32xf32> to vector<16xf32>
    %163 = vector.shape_cast %162 : vector<16xf32> to vector<16x1xf32>
    %cst_67 = arith.constant 3.200000e+01 : f32
    %164 = vector.broadcast %cst_67 : f32 to vector<16x1xf32>
    %165 = arith.divf %163, %164 : vector<16x1xf32>
    %166 = vector.broadcast %158 : vector<16x1xf32> to vector<16x32xf32>
    %167 = arith.subf %154, %166 : vector<16x32xf32>
    %cst_68 = arith.constant 9.99999974E-6 : f32
    %168 = vector.broadcast %cst_68 : f32 to vector<16x1xf32>
    %169 = arith.addf %165, %168 : vector<16x1xf32>
    %170 = math.rsqrt %169 : vector<16x1xf32>
    %171 = vector.broadcast %170 : vector<16x1xf32> to vector<16x32xf32>
    %172 = arith.mulf %167, %171 : vector<16x32xf32>
    %c0_69 = arith.constant 0 : index
    %c0_70 = arith.constant 0 : index
    %c0_71 = arith.constant 0 : index
    %173 = vector.load %arg11[%c0_69, %c0_70, %c0_71] : memref<2x1x32xf32, #tpu.memory_space<vmem>>, vector<1x1x32xf32>
    %174 = vector.shape_cast %173 : vector<1x1x32xf32> to vector<1x32xf32>
    %175 = vector.broadcast %174 : vector<1x32xf32> to vector<16x32xf32>
    %176 = arith.mulf %172, %175 : vector<16x32xf32>
    %c0_72 = arith.constant 0 : index
    %c0_73 = arith.constant 0 : index
    %c0_74 = arith.constant 0 : index
    %177 = vector.load %arg12[%c0_72, %c0_73, %c0_74] : memref<2x1x32xf32, #tpu.memory_space<vmem>>, vector<1x1x32xf32>
    %178 = vector.shape_cast %177 : vector<1x1x32xf32> to vector<1x32xf32>
    %179 = vector.broadcast %178 : vector<1x32xf32> to vector<16x32xf32>
    %180 = arith.addf %176, %179 : vector<16x32xf32>
    %c1 = arith.constant 1 : index
    %c0_75 = arith.constant 0 : index
    %c0_76 = arith.constant 0 : index
    %181 = vector.load %arg1[%c1, %c0_75, %c0_76] : memref<2x32x96xf32, #tpu.memory_space<vmem>>, vector<1x32x96xf32>
    %182 = vector.shape_cast %181 : vector<1x32x96xf32> to vector<32x96xf32>
    %cst_77 = arith.constant dense<0.000000e+00> : vector<16x96xf32>
    %183 = tpu.matmul %180, %182, %cst_77 {dimension_numbers = #tpu.dot_dimension_numbers<[1], [0], [0], [1], [0, 0, 1, 1], [], []>} : vector<16x32xf32>, vector<32x96xf32>, vector<16x96xf32> -> vector<16x96xf32>
    %c1_78 = arith.constant 1 : index
    %c0_79 = arith.constant 0 : index
    %c0_80 = arith.constant 0 : index
    %184 = vector.load %arg2[%c1_78, %c0_79, %c0_80] : memref<2x1x96xf32, #tpu.memory_space<vmem>>, vector<1x1x96xf32>
    %185 = vector.shape_cast %184 : vector<1x1x96xf32> to vector<1x96xf32>
    %186 = vector.broadcast %185 : vector<1x96xf32> to vector<16x96xf32>
    %187 = arith.addf %183, %186 : vector<16x96xf32>
    %c1_81 = arith.constant 1 : index
    %c0_82 = arith.constant 0 : index
    %c0_83 = arith.constant 0 : index
    %188 = vector.load %arg3[%c1_81, %c0_82, %c0_83] : memref<2x32x32xf32, #tpu.memory_space<vmem>>, vector<1x32x32xf32>
    %189 = vector.shape_cast %188 : vector<1x32x32xf32> to vector<32x32xf32>
    %cst_84 = arith.constant 0.000000e+00 : f32
    %190 = vector.broadcast %cst_84 : f32 to vector<16x32xf32>
    %191 = vector.extract_strided_slice %187 {offsets = [0, 0], sizes = [16, 8], strides = [1, 1]} : vector<16x96xf32> to vector<16x8xf32>
    %cst_85 = arith.constant 0.353553385 : f32
    %192 = vector.broadcast %cst_85 : f32 to vector<16x8xf32>
    %193 = arith.mulf %191, %192 : vector<16x8xf32>
    %194 = vector.shape_cast %193 : vector<16x8xf32> to vector<2x8x8xf32>
    %195 = vector.extract_strided_slice %187 {offsets = [0, 32], sizes = [16, 8], strides = [1, 1]} : vector<16x96xf32> to vector<16x8xf32>
    %196 = vector.shape_cast %195 : vector<16x8xf32> to vector<2x8x8xf32>
    %197 = vector.extract_strided_slice %187 {offsets = [0, 64], sizes = [16, 8], strides = [1, 1]} : vector<16x96xf32> to vector<16x8xf32>
    %198 = vector.shape_cast %197 : vector<16x8xf32> to vector<2x8x8xf32>
    "tpu.trace_start"() <{level = 10 : i32, message = "nqd,nkd->nqk"}> : () -> ()
    %cst_86 = arith.constant dense<0.000000e+00> : vector<2x8x8xf32>
    %199 = tpu.matmul %194, %196, %cst_86 {dimension_numbers = #tpu.dot_dimension_numbers<[2], [2], [1], [1], [0, 0, 0, 1, 1, 1], [0], [0]>} : vector<2x8x8xf32>, vector<2x8x8xf32>, vector<2x8x8xf32> -> vector<2x8x8xf32>
    "tpu.trace_stop"() : () -> ()
    %cst_87 = arith.constant dense<0xFF800000> : vector<2x8xf32>
    %200 = vector.multi_reduction <maximumf>, %199, %cst_87 [2] : vector<2x8x8xf32> to vector<2x8xf32>
    %201 = vector.shape_cast %200 : vector<2x8xf32> to vector<2x8x1xf32>
    %202 = vector.broadcast %201 : vector<2x8x1xf32> to vector<2x8x8xf32>
    %203 = arith.subf %199, %202 : vector<2x8x8xf32>
    %204 = math.exp %203 : vector<2x8x8xf32>
    %cst_88 = arith.constant dense<0.000000e+00> : vector<2x8xf32>
    %205 = vector.multi_reduction <add>, %204, %cst_88 [2] : vector<2x8x8xf32> to vector<2x8xf32>
    %206 = vector.shape_cast %205 : vector<2x8xf32> to vector<2x8x1xf32>
    %207 = tpu.reciprocal %206 {approx = true} : vector<2x8x1xf32> -> vector<2x8x1xf32>
    %208 = vector.broadcast %207 : vector<2x8x1xf32> to vector<2x8x8xf32>
    %209 = arith.mulf %204, %208 : vector<2x8x8xf32>
    "tpu.trace_start"() <{level = 10 : i32, message = "nqk,nkd->nqd"}> : () -> ()
    %cst_89 = arith.constant dense<0.000000e+00> : vector<2x8x8xf32>
    %210 = tpu.matmul %209, %198, %cst_89 {dimension_numbers = #tpu.dot_dimension_numbers<[2], [1], [1], [2], [0, 0, 0, 1, 1, 2], [0], [0]>} : vector<2x8x8xf32>, vector<2x8x8xf32>, vector<2x8x8xf32> -> vector<2x8x8xf32>
    "tpu.trace_stop"() : () -> ()
    %211 = vector.shape_cast %210 : vector<2x8x8xf32> to vector<16x8xf32>
    %212 = vector.extract_strided_slice %189 {offsets = [0, 0], sizes = [8, 32], strides = [1, 1]} : vector<32x32xf32> to vector<8x32xf32>
    %cst_90 = arith.constant dense<0.000000e+00> : vector<16x32xf32>
    %213 = tpu.matmul %211, %212, %cst_90 {dimension_numbers = #tpu.dot_dimension_numbers<[1], [0], [0], [1], [0, 0, 1, 1], [], []>} : vector<16x8xf32>, vector<8x32xf32>, vector<16x32xf32> -> vector<16x32xf32>
    %214 = arith.addf %190, %213 : vector<16x32xf32>
    %215 = vector.extract_strided_slice %187 {offsets = [0, 8], sizes = [16, 8], strides = [1, 1]} : vector<16x96xf32> to vector<16x8xf32>
    %cst_91 = arith.constant 0.353553385 : f32
    %216 = vector.broadcast %cst_91 : f32 to vector<16x8xf32>
    %217 = arith.mulf %215, %216 : vector<16x8xf32>
    %218 = vector.shape_cast %217 : vector<16x8xf32> to vector<2x8x8xf32>
    %219 = vector.extract_strided_slice %187 {offsets = [0, 40], sizes = [16, 8], strides = [1, 1]} : vector<16x96xf32> to vector<16x8xf32>
    %220 = vector.shape_cast %219 : vector<16x8xf32> to vector<2x8x8xf32>
    %221 = vector.extract_strided_slice %187 {offsets = [0, 72], sizes = [16, 8], strides = [1, 1]} : vector<16x96xf32> to vector<16x8xf32>
    %222 = vector.shape_cast %221 : vector<16x8xf32> to vector<2x8x8xf32>
    "tpu.trace_start"() <{level = 10 : i32, message = "nqd,nkd->nqk"}> : () -> ()
    %cst_92 = arith.constant dense<0.000000e+00> : vector<2x8x8xf32>
    %223 = tpu.matmul %218, %220, %cst_92 {dimension_numbers = #tpu.dot_dimension_numbers<[2], [2], [1], [1], [0, 0, 0, 1, 1, 1], [0], [0]>} : vector<2x8x8xf32>, vector<2x8x8xf32>, vector<2x8x8xf32> -> vector<2x8x8xf32>
    "tpu.trace_stop"() : () -> ()
    %cst_93 = arith.constant dense<0xFF800000> : vector<2x8xf32>
    %224 = vector.multi_reduction <maximumf>, %223, %cst_93 [2] : vector<2x8x8xf32> to vector<2x8xf32>
    %225 = vector.shape_cast %224 : vector<2x8xf32> to vector<2x8x1xf32>
    %226 = vector.broadcast %225 : vector<2x8x1xf32> to vector<2x8x8xf32>
    %227 = arith.subf %223, %226 : vector<2x8x8xf32>
    %228 = math.exp %227 : vector<2x8x8xf32>
    %cst_94 = arith.constant dense<0.000000e+00> : vector<2x8xf32>
    %229 = vector.multi_reduction <add>, %228, %cst_94 [2] : vector<2x8x8xf32> to vector<2x8xf32>
    %230 = vector.shape_cast %229 : vector<2x8xf32> to vector<2x8x1xf32>
    %231 = tpu.reciprocal %230 {approx = true} : vector<2x8x1xf32> -> vector<2x8x1xf32>
    %232 = vector.broadcast %231 : vector<2x8x1xf32> to vector<2x8x8xf32>
    %233 = arith.mulf %228, %232 : vector<2x8x8xf32>
    "tpu.trace_start"() <{level = 10 : i32, message = "nqk,nkd->nqd"}> : () -> ()
    %cst_95 = arith.constant dense<0.000000e+00> : vector<2x8x8xf32>
    %234 = tpu.matmul %233, %222, %cst_95 {dimension_numbers = #tpu.dot_dimension_numbers<[2], [1], [1], [2], [0, 0, 0, 1, 1, 2], [0], [0]>} : vector<2x8x8xf32>, vector<2x8x8xf32>, vector<2x8x8xf32> -> vector<2x8x8xf32>
    "tpu.trace_stop"() : () -> ()
    %235 = vector.shape_cast %234 : vector<2x8x8xf32> to vector<16x8xf32>
    %236 = vector.extract_strided_slice %189 {offsets = [8, 0], sizes = [8, 32], strides = [1, 1]} : vector<32x32xf32> to vector<8x32xf32>
    %cst_96 = arith.constant dense<0.000000e+00> : vector<16x32xf32>
    %237 = tpu.matmul %235, %236, %cst_96 {dimension_numbers = #tpu.dot_dimension_numbers<[1], [0], [0], [1], [0, 0, 1, 1], [], []>} : vector<16x8xf32>, vector<8x32xf32>, vector<16x32xf32> -> vector<16x32xf32>
    %238 = arith.addf %214, %237 : vector<16x32xf32>
    %239 = vector.extract_strided_slice %187 {offsets = [0, 16], sizes = [16, 8], strides = [1, 1]} : vector<16x96xf32> to vector<16x8xf32>
    %cst_97 = arith.constant 0.353553385 : f32
    %240 = vector.broadcast %cst_97 : f32 to vector<16x8xf32>
    %241 = arith.mulf %239, %240 : vector<16x8xf32>
    %242 = vector.shape_cast %241 : vector<16x8xf32> to vector<2x8x8xf32>
    %243 = vector.extract_strided_slice %187 {offsets = [0, 48], sizes = [16, 8], strides = [1, 1]} : vector<16x96xf32> to vector<16x8xf32>
    %244 = vector.shape_cast %243 : vector<16x8xf32> to vector<2x8x8xf32>
    %245 = vector.extract_strided_slice %187 {offsets = [0, 80], sizes = [16, 8], strides = [1, 1]} : vector<16x96xf32> to vector<16x8xf32>
    %246 = vector.shape_cast %245 : vector<16x8xf32> to vector<2x8x8xf32>
    "tpu.trace_start"() <{level = 10 : i32, message = "nqd,nkd->nqk"}> : () -> ()
    %cst_98 = arith.constant dense<0.000000e+00> : vector<2x8x8xf32>
    %247 = tpu.matmul %242, %244, %cst_98 {dimension_numbers = #tpu.dot_dimension_numbers<[2], [2], [1], [1], [0, 0, 0, 1, 1, 1], [0], [0]>} : vector<2x8x8xf32>, vector<2x8x8xf32>, vector<2x8x8xf32> -> vector<2x8x8xf32>
    "tpu.trace_stop"() : () -> ()
    %cst_99 = arith.constant dense<0xFF800000> : vector<2x8xf32>
    %248 = vector.multi_reduction <maximumf>, %247, %cst_99 [2] : vector<2x8x8xf32> to vector<2x8xf32>
    %249 = vector.shape_cast %248 : vector<2x8xf32> to vector<2x8x1xf32>
    %250 = vector.broadcast %249 : vector<2x8x1xf32> to vector<2x8x8xf32>
    %251 = arith.subf %247, %250 : vector<2x8x8xf32>
    %252 = math.exp %251 : vector<2x8x8xf32>
    %cst_100 = arith.constant dense<0.000000e+00> : vector<2x8xf32>
    %253 = vector.multi_reduction <add>, %252, %cst_100 [2] : vector<2x8x8xf32> to vector<2x8xf32>
    %254 = vector.shape_cast %253 : vector<2x8xf32> to vector<2x8x1xf32>
    %255 = tpu.reciprocal %254 {approx = true} : vector<2x8x1xf32> -> vector<2x8x1xf32>
    %256 = vector.broadcast %255 : vector<2x8x1xf32> to vector<2x8x8xf32>
    %257 = arith.mulf %252, %256 : vector<2x8x8xf32>
    "tpu.trace_start"() <{level = 10 : i32, message = "nqk,nkd->nqd"}> : () -> ()
    %cst_101 = arith.constant dense<0.000000e+00> : vector<2x8x8xf32>
    %258 = tpu.matmul %257, %246, %cst_101 {dimension_numbers = #tpu.dot_dimension_numbers<[2], [1], [1], [2], [0, 0, 0, 1, 1, 2], [0], [0]>} : vector<2x8x8xf32>, vector<2x8x8xf32>, vector<2x8x8xf32> -> vector<2x8x8xf32>
    "tpu.trace_stop"() : () -> ()
    %259 = vector.shape_cast %258 : vector<2x8x8xf32> to vector<16x8xf32>
    %260 = vector.extract_strided_slice %189 {offsets = [16, 0], sizes = [8, 32], strides = [1, 1]} : vector<32x32xf32> to vector<8x32xf32>
    %cst_102 = arith.constant dense<0.000000e+00> : vector<16x32xf32>
    %261 = tpu.matmul %259, %260, %cst_102 {dimension_numbers = #tpu.dot_dimension_numbers<[1], [0], [0], [1], [0, 0, 1, 1], [], []>} : vector<16x8xf32>, vector<8x32xf32>, vector<16x32xf32> -> vector<16x32xf32>
    %262 = arith.addf %238, %261 : vector<16x32xf32>
    %263 = vector.extract_strided_slice %187 {offsets = [0, 24], sizes = [16, 8], strides = [1, 1]} : vector<16x96xf32> to vector<16x8xf32>
    %cst_103 = arith.constant 0.353553385 : f32
    %264 = vector.broadcast %cst_103 : f32 to vector<16x8xf32>
    %265 = arith.mulf %263, %264 : vector<16x8xf32>
    %266 = vector.shape_cast %265 : vector<16x8xf32> to vector<2x8x8xf32>
    %267 = vector.extract_strided_slice %187 {offsets = [0, 56], sizes = [16, 8], strides = [1, 1]} : vector<16x96xf32> to vector<16x8xf32>
    %268 = vector.shape_cast %267 : vector<16x8xf32> to vector<2x8x8xf32>
    %269 = vector.extract_strided_slice %187 {offsets = [0, 88], sizes = [16, 8], strides = [1, 1]} : vector<16x96xf32> to vector<16x8xf32>
    %270 = vector.shape_cast %269 : vector<16x8xf32> to vector<2x8x8xf32>
    "tpu.trace_start"() <{level = 10 : i32, message = "nqd,nkd->nqk"}> : () -> ()
    %cst_104 = arith.constant dense<0.000000e+00> : vector<2x8x8xf32>
    %271 = tpu.matmul %266, %268, %cst_104 {dimension_numbers = #tpu.dot_dimension_numbers<[2], [2], [1], [1], [0, 0, 0, 1, 1, 1], [0], [0]>} : vector<2x8x8xf32>, vector<2x8x8xf32>, vector<2x8x8xf32> -> vector<2x8x8xf32>
    "tpu.trace_stop"() : () -> ()
    %cst_105 = arith.constant dense<0xFF800000> : vector<2x8xf32>
    %272 = vector.multi_reduction <maximumf>, %271, %cst_105 [2] : vector<2x8x8xf32> to vector<2x8xf32>
    %273 = vector.shape_cast %272 : vector<2x8xf32> to vector<2x8x1xf32>
    %274 = vector.broadcast %273 : vector<2x8x1xf32> to vector<2x8x8xf32>
    %275 = arith.subf %271, %274 : vector<2x8x8xf32>
    %276 = math.exp %275 : vector<2x8x8xf32>
    %cst_106 = arith.constant dense<0.000000e+00> : vector<2x8xf32>
    %277 = vector.multi_reduction <add>, %276, %cst_106 [2] : vector<2x8x8xf32> to vector<2x8xf32>
    %278 = vector.shape_cast %277 : vector<2x8xf32> to vector<2x8x1xf32>
    %279 = tpu.reciprocal %278 {approx = true} : vector<2x8x1xf32> -> vector<2x8x1xf32>
    %280 = vector.broadcast %279 : vector<2x8x1xf32> to vector<2x8x8xf32>
    %281 = arith.mulf %276, %280 : vector<2x8x8xf32>
    "tpu.trace_start"() <{level = 10 : i32, message = "nqk,nkd->nqd"}> : () -> ()
    %cst_107 = arith.constant dense<0.000000e+00> : vector<2x8x8xf32>
    %282 = tpu.matmul %281, %270, %cst_107 {dimension_numbers = #tpu.dot_dimension_numbers<[2], [1], [1], [2], [0, 0, 0, 1, 1, 2], [0], [0]>} : vector<2x8x8xf32>, vector<2x8x8xf32>, vector<2x8x8xf32> -> vector<2x8x8xf32>
    "tpu.trace_stop"() : () -> ()
    %283 = vector.shape_cast %282 : vector<2x8x8xf32> to vector<16x8xf32>
    %284 = vector.extract_strided_slice %189 {offsets = [24, 0], sizes = [8, 32], strides = [1, 1]} : vector<32x32xf32> to vector<8x32xf32>
    %cst_108 = arith.constant dense<0.000000e+00> : vector<16x32xf32>
    %285 = tpu.matmul %283, %284, %cst_108 {dimension_numbers = #tpu.dot_dimension_numbers<[1], [0], [0], [1], [0, 0, 1, 1], [], []>} : vector<16x8xf32>, vector<8x32xf32>, vector<16x32xf32> -> vector<16x32xf32>
    %286 = arith.addf %262, %285 : vector<16x32xf32>
    %c1_109 = arith.constant 1 : index
    %c0_110 = arith.constant 0 : index
    %c0_111 = arith.constant 0 : index
    %287 = vector.load %arg4[%c1_109, %c0_110, %c0_111] : memref<2x1x32xf32, #tpu.memory_space<vmem>>, vector<1x1x32xf32>
    %288 = vector.shape_cast %287 : vector<1x1x32xf32> to vector<1x32xf32>
    %289 = vector.broadcast %288 : vector<1x32xf32> to vector<16x32xf32>
    %290 = arith.addf %286, %289 : vector<16x32xf32>
    %291 = arith.addf %180, %290 : vector<16x32xf32>
    %cst_112 = arith.constant dense<0.000000e+00> : vector<16xf32>
    %292 = vector.multi_reduction <add>, %291, %cst_112 [1] : vector<16x32xf32> to vector<16xf32>
    %293 = vector.shape_cast %292 : vector<16xf32> to vector<16x1xf32>
    %cst_113 = arith.constant 3.200000e+01 : f32
    %294 = vector.broadcast %cst_113 : f32 to vector<16x1xf32>
    %295 = arith.divf %293, %294 : vector<16x1xf32>
    %296 = vector.broadcast %295 : vector<16x1xf32> to vector<16x32xf32>
    %297 = arith.subf %291, %296 : vector<16x32xf32>
    %298 = arith.mulf %297, %297 : vector<16x32xf32>
    %cst_114 = arith.constant dense<0.000000e+00> : vector<16xf32>
    %299 = vector.multi_reduction <add>, %298, %cst_114 [1] : vector<16x32xf32> to vector<16xf32>
    %300 = vector.shape_cast %299 : vector<16xf32> to vector<16x1xf32>
    %cst_115 = arith.constant 3.200000e+01 : f32
    %301 = vector.broadcast %cst_115 : f32 to vector<16x1xf32>
    %302 = arith.divf %300, %301 : vector<16x1xf32>
    %303 = vector.broadcast %295 : vector<16x1xf32> to vector<16x32xf32>
    %304 = arith.subf %291, %303 : vector<16x32xf32>
    %cst_116 = arith.constant 9.99999974E-6 : f32
    %305 = vector.broadcast %cst_116 : f32 to vector<16x1xf32>
    %306 = arith.addf %302, %305 : vector<16x1xf32>
    %307 = math.rsqrt %306 : vector<16x1xf32>
    %308 = vector.broadcast %307 : vector<16x1xf32> to vector<16x32xf32>
    %309 = arith.mulf %304, %308 : vector<16x32xf32>
    %c1_117 = arith.constant 1 : index
    %c0_118 = arith.constant 0 : index
    %c0_119 = arith.constant 0 : index
    %310 = vector.load %arg5[%c1_117, %c0_118, %c0_119] : memref<2x1x32xf32, #tpu.memory_space<vmem>>, vector<1x1x32xf32>
    %311 = vector.shape_cast %310 : vector<1x1x32xf32> to vector<1x32xf32>
    %312 = vector.broadcast %311 : vector<1x32xf32> to vector<16x32xf32>
    %313 = arith.mulf %309, %312 : vector<16x32xf32>
    %c1_120 = arith.constant 1 : index
    %c0_121 = arith.constant 0 : index
    %c0_122 = arith.constant 0 : index
    %314 = vector.load %arg6[%c1_120, %c0_121, %c0_122] : memref<2x1x32xf32, #tpu.memory_space<vmem>>, vector<1x1x32xf32>
    %315 = vector.shape_cast %314 : vector<1x1x32xf32> to vector<1x32xf32>
    %316 = vector.broadcast %315 : vector<1x32xf32> to vector<16x32xf32>
    %317 = arith.addf %313, %316 : vector<16x32xf32>
    %c1_123 = arith.constant 1 : index
    %c0_124 = arith.constant 0 : index
    %c0_125 = arith.constant 0 : index
    %318 = vector.load %arg7[%c1_123, %c0_124, %c0_125] : memref<2x32x64xf32, #tpu.memory_space<vmem>>, vector<1x32x64xf32>
    %319 = vector.shape_cast %318 : vector<1x32x64xf32> to vector<32x64xf32>
    %cst_126 = arith.constant dense<0.000000e+00> : vector<16x64xf32>
    %320 = tpu.matmul %317, %319, %cst_126 {dimension_numbers = #tpu.dot_dimension_numbers<[1], [0], [0], [1], [0, 0, 1, 1], [], []>} : vector<16x32xf32>, vector<32x64xf32>, vector<16x64xf32> -> vector<16x64xf32>
    %c1_127 = arith.constant 1 : index
    %c0_128 = arith.constant 0 : index
    %c0_129 = arith.constant 0 : index
    %321 = vector.load %arg8[%c1_127, %c0_128, %c0_129] : memref<2x1x64xf32, #tpu.memory_space<vmem>>, vector<1x1x64xf32>
    %322 = vector.shape_cast %321 : vector<1x1x64xf32> to vector<1x64xf32>
    %323 = vector.broadcast %322 : vector<1x64xf32> to vector<16x64xf32>
    %324 = arith.addf %320, %323 : vector<16x64xf32>
    %cst_130 = arith.constant 0.000000e+00 : f32
    %325 = vector.broadcast %cst_130 : f32 to vector<16x64xf32>
    %326 = arith.maximumf %324, %325 : vector<16x64xf32>
    %c1_131 = arith.constant 1 : index
    %c0_132 = arith.constant 0 : index
    %c0_133 = arith.constant 0 : index
    %327 = vector.load %arg9[%c1_131, %c0_132, %c0_133] : memref<2x64x32xf32, #tpu.memory_space<vmem>>, vector<1x64x32xf32>
    %328 = vector.shape_cast %327 : vector<1x64x32xf32> to vector<64x32xf32>
    %cst_134 = arith.constant dense<0.000000e+00> : vector<16x32xf32>
    %329 = tpu.matmul %326, %328, %cst_134 {dimension_numbers = #tpu.dot_dimension_numbers<[1], [0], [0], [1], [0, 0, 1, 1], [], []>} : vector<16x64xf32>, vector<64x32xf32>, vector<16x32xf32> -> vector<16x32xf32>
    %c1_135 = arith.constant 1 : index
    %c0_136 = arith.constant 0 : index
    %c0_137 = arith.constant 0 : index
    %330 = vector.load %arg10[%c1_135, %c0_136, %c0_137] : memref<2x1x32xf32, #tpu.memory_space<vmem>>, vector<1x1x32xf32>
    %331 = vector.shape_cast %330 : vector<1x1x32xf32> to vector<1x32xf32>
    %332 = vector.broadcast %331 : vector<1x32xf32> to vector<16x32xf32>
    %333 = arith.addf %329, %332 : vector<16x32xf32>
    %334 = arith.addf %317, %333 : vector<16x32xf32>
    %cst_138 = arith.constant dense<0.000000e+00> : vector<16xf32>
    %335 = vector.multi_reduction <add>, %334, %cst_138 [1] : vector<16x32xf32> to vector<16xf32>
    %336 = vector.shape_cast %335 : vector<16xf32> to vector<16x1xf32>
    %cst_139 = arith.constant 3.200000e+01 : f32
    %337 = vector.broadcast %cst_139 : f32 to vector<16x1xf32>
    %338 = arith.divf %336, %337 : vector<16x1xf32>
    %339 = vector.broadcast %338 : vector<16x1xf32> to vector<16x32xf32>
    %340 = arith.subf %334, %339 : vector<16x32xf32>
    %341 = arith.mulf %340, %340 : vector<16x32xf32>
    %cst_140 = arith.constant dense<0.000000e+00> : vector<16xf32>
    %342 = vector.multi_reduction <add>, %341, %cst_140 [1] : vector<16x32xf32> to vector<16xf32>
    %343 = vector.shape_cast %342 : vector<16xf32> to vector<16x1xf32>
    %cst_141 = arith.constant 3.200000e+01 : f32
    %344 = vector.broadcast %cst_141 : f32 to vector<16x1xf32>
    %345 = arith.divf %343, %344 : vector<16x1xf32>
    %346 = vector.broadcast %338 : vector<16x1xf32> to vector<16x32xf32>
    %347 = arith.subf %334, %346 : vector<16x32xf32>
    %cst_142 = arith.constant 9.99999974E-6 : f32
    %348 = vector.broadcast %cst_142 : f32 to vector<16x1xf32>
    %349 = arith.addf %345, %348 : vector<16x1xf32>
    %350 = math.rsqrt %349 : vector<16x1xf32>
    %351 = vector.broadcast %350 : vector<16x1xf32> to vector<16x32xf32>
    %352 = arith.mulf %347, %351 : vector<16x32xf32>
    %c1_143 = arith.constant 1 : index
    %c0_144 = arith.constant 0 : index
    %c0_145 = arith.constant 0 : index
    %353 = vector.load %arg11[%c1_143, %c0_144, %c0_145] : memref<2x1x32xf32, #tpu.memory_space<vmem>>, vector<1x1x32xf32>
    %354 = vector.shape_cast %353 : vector<1x1x32xf32> to vector<1x32xf32>
    %355 = vector.broadcast %354 : vector<1x32xf32> to vector<16x32xf32>
    %356 = arith.mulf %352, %355 : vector<16x32xf32>
    %c1_146 = arith.constant 1 : index
    %c0_147 = arith.constant 0 : index
    %c0_148 = arith.constant 0 : index
    %357 = vector.load %arg12[%c1_146, %c0_147, %c0_148] : memref<2x1x32xf32, #tpu.memory_space<vmem>>, vector<1x1x32xf32>
    %358 = vector.shape_cast %357 : vector<1x1x32xf32> to vector<1x32xf32>
    %359 = vector.broadcast %358 : vector<1x32xf32> to vector<16x32xf32>
    %360 = arith.addf %356, %359 : vector<16x32xf32>
    %361 = vector.extract_strided_slice %360 {offsets = [8, 0], sizes = [8, 32], strides = [1, 1]} : vector<16x32xf32> to vector<8x32xf32>
    %c0_149 = arith.constant 0 : index
    %c0_150 = arith.constant 0 : index
    %362 = vector.load %arg13[%c0_149, %c0_150] : memref<32x1xf32, #tpu.memory_space<vmem>>, vector<32x1xf32>
    %cst_151 = arith.constant dense<0.000000e+00> : vector<8x1xf32>
    %363 = tpu.matmul %361, %362, %cst_151 {dimension_numbers = #tpu.dot_dimension_numbers<[1], [0], [0], [1], [0, 0, 1, 1], [], []>} : vector<8x32xf32>, vector<32x1xf32>, vector<8x1xf32> -> vector<8x1xf32>
    %c0_152 = arith.constant 0 : index
    %c0_153 = arith.constant 0 : index
    %364 = vector.load %arg14[%c0_152, %c0_153] : memref<1x1xf32, #tpu.memory_space<vmem>>, vector<1x1xf32>
    %365 = vector.broadcast %364 : vector<1x1xf32> to vector<8x1xf32>
    %366 = arith.addf %363, %365 : vector<8x1xf32>
    %cst_154 = arith.constant 0.000000e+00 : f32
    %367 = vector.broadcast %cst_154 : f32 to vector<8x1xf32>
    %368 = arith.subf %367, %366 : vector<8x1xf32>
    %369 = math.exp %368 : vector<8x1xf32>
    %cst_155 = arith.constant 1.000000e+00 : f32
    %370 = vector.broadcast %cst_155 : f32 to vector<8x1xf32>
    %371 = arith.addf %370, %369 : vector<8x1xf32>
    %372 = tpu.reciprocal %371 {approx = true} : vector<8x1xf32> -> vector<8x1xf32>
    %c0_156 = arith.constant 0 : index
    %c0_157 = arith.constant 0 : index
    %373 = vector.load %arg15[%c0_156, %c0_157] : memref<8x1xf32, #tpu.memory_space<vmem>>, vector<8x1xf32>
    tpu.vector_store %arg15[%c0_156, %c0_157], %372 {strides = array<i32>} : memref<8x1xf32, #tpu.memory_space<vmem>>, vector<8x1xf32>,
    return
  }
}

</mosaic_0001>

<llo_original>
// kernel: transformer_model_forward.1
$region0: #{transformer_model_forward.1}
  #allocation0 [shape = 'u32[]', space=smem, size = 0x4, offset = 0x4, fixed_abs, tag = 'smem constant byte address 0x4 - core index']
  #allocation1 [shape = 'u32[144,128]{1,0:T(1,128)}', space=vmem, size = 0x12000, scoped, tag = 'internal scratch']
  #allocation2 [shape = 'f32[1,1]{1,0:T(1,128)S(1)}', space=vmem, size = 0x200, scoped, tag = 'scoped memory for transformer_model_forward.1']
  %s0 = inlined_call_operand.vmem [shape: f32[16,32], index: 0, kind: input, shape index: {}]
  %s1 = inlined_call_operand.vmem [shape: f32[2,32,96], index: 1, kind: input, shape index: {}]
  %s2 = inlined_call_operand.vmem [shape: f32[2,1,96], index: 2, kind: input, shape index: {}]
  %s3 = inlined_call_operand.vmem [shape: f32[2,32,32], index: 3, kind: input, shape index: {}]
  %s4 = inlined_call_operand.vmem [shape: f32[2,1,32], index: 4, kind: input, shape index: {}]
  %s5 = inlined_call_operand.vmem [shape: f32[2,1,32], index: 5, kind: input, shape index: {}]
  %s6 = inlined_call_operand.vmem [shape: f32[2,1,32], index: 6, kind: input, shape index: {}]
  %s7 = inlined_call_operand.vmem [shape: f32[2,32,64], index: 7, kind: input, shape index: {}]
  %s8 = inlined_call_operand.vmem [shape: f32[2,1,64], index: 8, kind: input, shape index: {}]
  %s9 = inlined_call_operand.vmem [shape: f32[2,64,32], index: 9, kind: input, shape index: {}]
  %s10 = inlined_call_operand.vmem [shape: f32[2,1,32], index: 10, kind: input, shape index: {}]
  %s11 = inlined_call_operand.vmem [shape: f32[2,1,32], index: 11, kind: input, shape index: {}]
  %s12 = inlined_call_operand.vmem [shape: f32[2,1,32], index: 12, kind: input, shape index: {}]
  %s13 = inlined_call_operand.vmem [shape: f32[32,1], index: 13, kind: input, shape index: {}]
  %s14 = inlined_call_operand.<no memory space> [shape: f32[1,1], index: 14, kind: input, shape index: {}]
  %s15 = inlined_call_operand.vmem [shape: f32[8,1], index: 15, kind: output, shape index: {}]
  %s16 = sld [smem:[#allocation0]]
  $region70: #{transformer_model_forward.1} parent=0
    _
  %s18 = ssub.s32 1, %s16
  %s19 = scalar_select 0, %s18, %s16
  %v20 = vstv %s14
  %21 = vst [vmem:[#allocation2] sm:$0x1] %v20
  // Predicated region
  $region2: #{transformer_model_forward.1} parent=0 // pred_check
    _
  $region3: #{transformer_model_forward.1} parent=0 // pred_check_branch
    %23 = sbr.rel (0) target = $region5
  $region4: #{transformer_model_forward.1} parent=0 // pred_region
    _
  $region5: #{transformer_model_forward.1} parent=0 // pred_fallthru
    _
  // Predicated region
  $region6: #{transformer_model_forward.1} parent=0 // pred_check
    _
  $region7: #{transformer_model_forward.1} parent=0 // pred_check_branch
    %25 = sbr.rel (0) target = $region9
  $region8: #{transformer_model_forward.1} parent=0 // pred_region
    _
  $region9: #{transformer_model_forward.1} parent=0 // pred_fallthru
    _
  // Predicated region
  $region10: #{transformer_model_forward.1} parent=0 // pred_check
    _
  $region11: #{transformer_model_forward.1} parent=0 // pred_check_branch
    %27 = sbr.rel (0) target = $region13
  $region12: #{transformer_model_forward.1} parent=0 // pred_region
    _
  $region13: #{transformer_model_forward.1} parent=0 // pred_fallthru
    _
  // Predicated region
  $region14: #{transformer_model_forward.1} parent=0 // pred_check
    _
  $region15: #{transformer_model_forward.1} parent=0 // pred_check_branch
    %29 = sbr.rel (0) target = $region17
  $region16: #{transformer_model_forward.1} parent=0 // pred_region
    _
  $region17: #{transformer_model_forward.1} parent=0 // pred_fallthru
    _
  // Predicated region
  $region18: #{transformer_model_forward.1} parent=0 // pred_check
    _
  $region19: #{transformer_model_forward.1} parent=0 // pred_check_branch
    %31 = sbr.rel (0) target = $region21
  $region20: #{transformer_model_forward.1} parent=0 // pred_region
    _
  $region21: #{transformer_model_forward.1} parent=0 // pred_fallthru
    _
  // Predicated region
  $region22: #{transformer_model_forward.1} parent=0 // pred_check
    _
  $region23: #{transformer_model_forward.1} parent=0 // pred_check_branch
    %33 = sbr.rel (0) target = $region25
  $region24: #{transformer_model_forward.1} parent=0 // pred_region
    _
  $region25: #{transformer_model_forward.1} parent=0 // pred_fallthru
    _
  // Predicated region
  $region26: #{transformer_model_forward.1} parent=0 // pred_check
    _
  $region27: #{transformer_model_forward.1} parent=0 // pred_check_branch
    %35 = sbr.rel (0) target = $region29
  $region28: #{transformer_model_forward.1} parent=0 // pred_region
    _
  $region29: #{transformer_model_forward.1} parent=0 // pred_fallthru
    _
  // Predicated region
  $region30: #{transformer_model_forward.1} parent=0 // pred_check
    _
  $region31: #{transformer_model_forward.1} parent=0 // pred_check_branch
    %37 = sbr.rel (0) target = $region33
  $region32: #{transformer_model_forward.1} parent=0 // pred_region
    _
  $region33: #{transformer_model_forward.1} parent=0 // pred_fallthru
    _
  // Predicated region
  $region34: #{transformer_model_forward.1} parent=0 // pred_check
    _
  $region35: #{transformer_model_forward.1} parent=0 // pred_check_branch
    %39 = sbr.rel (0) target = $region37
  $region36: #{transformer_model_forward.1} parent=0 // pred_region
    _
  $region37: #{transformer_model_forward.1} parent=0 // pred_fallthru
    _
  // Predicated region
  $region38: #{transformer_model_forward.1} parent=0 // pred_check
    _
  $region39: #{transformer_model_forward.1} parent=0 // pred_check_branch
    %41 = sbr.rel (0) target = $region41
  $region40: #{transformer_model_forward.1} parent=0 // pred_region
    _
  $region41: #{transformer_model_forward.1} parent=0 // pred_fallthru
    _
  // Predicated region
  $region42: #{transformer_model_forward.1} parent=0 // pred_check
    _
  $region43: #{transformer_model_forward.1} parent=0 // pred_check_branch
    %43 = sbr.rel (0) target = $region45
  $region44: #{transformer_model_forward.1} parent=0 // pred_region
    _
  $region45: #{transformer_model_forward.1} parent=0 // pred_fallthru
    _
  // Predicated region
  $region46: #{transformer_model_forward.1} parent=0 // pred_check
    _
  $region47: #{transformer_model_forward.1} parent=0 // pred_check_branch
    %45 = sbr.rel (0) target = $region49
  $region48: #{transformer_model_forward.1} parent=0 // pred_region
    _
  $region49: #{transformer_model_forward.1} parent=0 // pred_fallthru
    _
  // Predicated region
  $region50: #{transformer_model_forward.1} parent=0 // pred_check
    _
  $region51: #{transformer_model_forward.1} parent=0 // pred_check_branch
    %47 = sbr.rel (0) target = $region53
  $region52: #{transformer_model_forward.1} parent=0 // pred_region
    _
  $region53: #{transformer_model_forward.1} parent=0 // pred_fallthru
    _
  // Predicated region
  $region54: #{transformer_model_forward.1} parent=0 // pred_check
    _
  $region55: #{transformer_model_forward.1} parent=0 // pred_check_branch
    %49 = sbr.rel (0) target = $region57
  $region56: #{transformer_model_forward.1} parent=0 // pred_region
    _
  $region57: #{transformer_model_forward.1} parent=0 // pred_fallthru
    _
  // Predicated region
  $region58: #{transformer_model_forward.1} parent=0 // pred_check
    _
  $region59: #{transformer_model_forward.1} parent=0 // pred_check_branch
    %51 = sbr.rel (0) target = $region61
  $region60: #{transformer_model_forward.1} parent=0 // pred_region
    _
  $region61: #{transformer_model_forward.1} parent=0 // pred_fallthru
    _
  %v52 = vld [vmem:[%s0] sm:$0xff]
  %v53 = vld [vmem:[%s0 + $0x8] sm:$0xff]
  %v54 = vld [vmem:[%s1] sm:$0xff]
  %v55 = vld [vmem:[%s1 + $0x8] sm:$0xff]
  %v56 = vld [vmem:[%s1 + $0x10] sm:$0xff]
  %v57 = vld [vmem:[%s1 + $0x18] sm:$0xff]
  %v58 = vld [vmem:[%s2] sm:$0x1]
  %v60 = vlaneseq
  %v61 = vshrl.u32 %v60, 7
  %v62 = vsub.s32 0, %v61
  %v63 = vrot.slane %v58, %v62
  %vm65 = vcmask 261120
  %v67 = vsel %vm65, %v52, 0
  %v70 = vsel %vm65, %v53, 0
  %72 = vmatprep.subr.mxu0 0.0
  %73 = vmatpush1.msra.mxu0 0.0
  %74 = vmatprep.subr.mxu0 0.0
  %75 = vmatpush1.msra.mxu0 0.0
  %76 = vmatprep.subr.mxu0 0.0
  %77 = vmatpush1.msra.mxu0 0.0
  %78 = vmatprep.subr.mxu0 0.0
  %79 = vmatpush1.msra.mxu0 0.0
  %80 = vmatprep.subr.mxu0 0.0
  %81 = vmatpush1.msra.mxu0 0.0
  %82 = vmatprep.subr.mxu0 0.0
  %83 = vmatpush1.msra.mxu0 0.0
  %84 = vmatprep.subr.mxu0 0.0
  %85 = vmatpush1.msra.mxu0 0.0
  %86 = vmatprep.subr.mxu0 0.0
  %87 = vmatpush1.msra.mxu0 0.0
  %88 = vmatprep.subr.mxu0 0.0
  %89 = vmatpush1.msra.mxu0 0.0
  %90 = vmatprep.subr.mxu0 0.0
  %91 = vmatpush1.msra.mxu0 0.0
  %92 = vmatprep.subr.mxu0 0.0
  %93 = vmatpush1.msra.mxu0 0.0
  %94 = vmatprep.subr.mxu0 0.0
  %95 = vmatpush1.msra.mxu0 0.0
  %96 = vmatprep.subr.mxu0 0.0
  %97 = vmatpush1.msra.mxu0 %v57
  %98 = vmatprep.subr.mxu0 0.0
  %99 = vmatpush1.msra.mxu0 %v56
  %100 = vmatprep.subr.mxu0 0.0
  %101 = vmatpush1.msra.mxu0 %v55
  %102 = vmatprep.subr.mxu0 0.0
  %103 = vmatpush1.msra.mxu0 %v54
  %104 = vmatprep.subr.mxu0 0.0
  %105 = vmatpush2.msra.mxu0 0.0
  %106 = vmatprep.subr.mxu0 0.0
  %107 = vmatpush2.msra.mxu0 0.0
  %108 = vmatprep.subr.mxu0 0.0
  %109 = vmatpush2.msra.mxu0 0.0
  %110 = vmatprep.subr.mxu0 0.0
  %111 = vmatpush2.msra.mxu0 0.0
  %112 = vmatprep.subr.mxu0 0.0
  %113 = vmatpush2.msra.mxu0 0.0
  %114 = vmatprep.subr.mxu0 0.0
  %115 = vmatpush2.msra.mxu0 0.0
  %116 = vmatprep.subr.mxu0 0.0
  %117 = vmatpush2.msra.mxu0 0.0
  %118 = vmatprep.subr.mxu0 0.0
  %119 = vmatpush2.msra.mxu0 0.0
  %120 = vmatprep.subr.mxu0 0.0
  %121 = vmatpush2.msra.mxu0 0.0
  %122 = vmatprep.subr.mxu0 0.0
  %123 = vmatpush2.msra.mxu0 0.0
  %124 = vmatprep.subr.mxu0 0.0
  %125 = vmatpush2.msra.mxu0 0.0
  %126 = vmatprep.subr.mxu0 0.0
  %127 = vmatpush2.msra.mxu0 0.0
  %128 = vmatprep.subr.mxu0 0.0
  %129 = vmatpush2.msra.mxu0 0.0
  %130 = vmatprep.subr.mxu0 0.0
  %131 = vmatpush2.msra.mxu0 0.0
  %132 = vmatprep.subr.mxu0 0.0
  %133 = vmatpush2.msra.mxu0 0.0
  %134 = vmatprep.subr.mxu0 0.0
  %135 = vmatpush2.msra.mxu0 0.0
  %136 = vmatprep.mubr.f32.mxu0 0.0
  %137 = vmatmul.mubr.f32.gmra.mxu0 %v67
  %v138 = vpop.f32.mrf.mxu0
  %v139 = vadd.f32 %v63, %v138
  %v140 = vpop.f32.mrf.mxu0
  %141 = vmatprep.mubr.f32.mxu0 0.0
  %142 = vmatmul.mubr.f32.gmra.mxu0 %v70
  %v143 = vpop.f32.mrf.mxu0
  %v144 = vadd.f32 %v63, %v143
  %v145 = vpop.f32.mrf.mxu0
  %146 = vdwg.mxu0
  %v147 = vld [vmem:[%s3] sm:$0xff]
  %v148 = vld [vmem:[%s3 + $0x8] sm:$0xff]
  %v149 = vld [vmem:[%s3 + $0x10] sm:$0xff]
  %v150 = vld [vmem:[%s3 + $0x18] sm:$0xff]
  %v151 = vmul.f32 %v139, 0.35355338
  %v152 = vmul.f32 %v144, 0.35355338
  %154 = vrot.lane.b32.xlu0 %v139, 96
  %v155 = vpop.permute.xlu0 %154
  %vm156 = vcmask 64512
  %v158 = vsel %vm156, %v151, 0
  %v160 = vsel %vm156, %v155, 0
  %162 = vmatprep.subr.mxu0 0.0
  %163 = vmatpush1.xpose.msra.mxu0 0.0
  %164 = vmatprep.subr.mxu0 0.0
  %165 = vmatpush1.xpose.msra.mxu0 0.0
  %166 = vmatprep.subr.mxu0 0.0
  %167 = vmatpush1.xpose.msra.mxu0 0.0
  %168 = vmatprep.subr.mxu0 0.0
  %169 = vmatpush1.xpose.msra.mxu0 0.0
  %170 = vmatprep.subr.mxu0 0.0
  %171 = vmatpush1.xpose.msra.mxu0 0.0
  %172 = vmatprep.subr.mxu0 0.0
  %173 = vmatpush1.xpose.msra.mxu0 0.0
  %174 = vmatprep.subr.mxu0 0.0
  %175 = vmatpush1.xpose.msra.mxu0 0.0
  %176 = vmatprep.subr.mxu0 0.0
  %177 = vmatpush1.xpose.msra.mxu0 0.0
  %178 = vmatprep.subr.mxu0 0.0
  %179 = vmatpush1.xpose.msra.mxu0 0.0
  %180 = vmatprep.subr.mxu0 0.0
  %181 = vmatpush1.xpose.msra.mxu0 0.0
  %182 = vmatprep.subr.mxu0 0.0
  %183 = vmatpush1.xpose.msra.mxu0 0.0
  %184 = vmatprep.subr.mxu0 0.0
  %185 = vmatpush1.xpose.msra.mxu0 0.0
  %186 = vmatprep.subr.mxu0 0.0
  %187 = vmatpush1.xpose.msra.mxu0 0.0
  %188 = vmatprep.subr.mxu0 0.0
  %189 = vmatpush1.xpose.msra.mxu0 0.0
  %190 = vmatprep.subr.mxu0 0.0
  %191 = vmatpush1.xpose.msra.mxu0 0.0
  %192 = vmatprep.subr.mxu0 0.0
  %193 = vmatpush1.xpose.msra.mxu0 %v160
  %194 = vmatprep.subr.mxu0 0.0
  %195 = vmatpush2.xpose.msra.mxu0 0.0
  %196 = vmatprep.subr.mxu0 0.0
  %197 = vmatpush2.xpose.msra.mxu0 0.0
  %198 = vmatprep.subr.mxu0 0.0
  %199 = vmatpush2.xpose.msra.mxu0 0.0
  %200 = vmatprep.subr.mxu0 0.0
  %201 = vmatpush2.xpose.msra.mxu0 0.0
  %202 = vmatprep.subr.mxu0 0.0
  %203 = vmatpush2.xpose.msra.mxu0 0.0
  %204 = vmatprep.subr.mxu0 0.0
  %205 = vmatpush2.xpose.msra.mxu0 0.0
  %206 = vmatprep.subr.mxu0 0.0
  %207 = vmatpush2.xpose.msra.mxu0 0.0
  %208 = vmatprep.subr.mxu0 0.0
  %209 = vmatpush2.xpose.msra.mxu0 0.0
  %210 = vmatprep.subr.mxu0 0.0
  %211 = vmatpush2.xpose.msra.mxu0 0.0
  %212 = vmatprep.subr.mxu0 0.0
  %213 = vmatpush2.xpose.msra.mxu0 0.0
  %214 = vmatprep.subr.mxu0 0.0
  %215 = vmatpush2.xpose.msra.mxu0 0.0
  %216 = vmatprep.subr.mxu0 0.0
  %217 = vmatpush2.xpose.msra.mxu0 0.0
  %218 = vmatprep.subr.mxu0 0.0
  %219 = vmatpush2.xpose.msra.mxu0 0.0
  %220 = vmatprep.subr.mxu0 0.0
  %221 = vmatpush2.xpose.msra.mxu0 0.0
  %222 = vmatprep.subr.mxu0 0.0
  %223 = vmatpush2.xpose.msra.mxu0 0.0
  %224 = vmatprep.subr.mxu0 0.0
  %225 = vmatpush2.xpose.msra.mxu0 0.0
  %226 = vmatprep.mubr.f32.mxu0 0.0
  %227 = vmatmul.mubr.f32.gmra.mxu0 %v158
  %v228 = vpop.f32.mrf.mxu0
  %v229 = vadd.f32 0.0, %v228
  %v230 = vpop.f32.mrf.mxu0
  %231 = vdwg.mxu0
  %233 = vrot.lane.b32.xlu0 %v144, 96
  %v234 = vpop.permute.xlu0 %233
  %v236 = vsel %vm156, %v152, 0
  %v238 = vsel %vm156, %v234, 0
  %240 = vmatprep.subr.mxu0 0.0
  %241 = vmatpush1.xpose.msra.mxu0 0.0
  %242 = vmatprep.subr.mxu0 0.0
  %243 = vmatpush1.xpose.msra.mxu0 0.0
  %244 = vmatprep.subr.mxu0 0.0
  %245 = vmatpush1.xpose.msra.mxu0 0.0
  %246 = vmatprep.subr.mxu0 0.0
  %247 = vmatpush1.xpose.msra.mxu0 0.0
  %248 = vmatprep.subr.mxu0 0.0
  %249 = vmatpush1.xpose.msra.mxu0 0.0
  %250 = vmatprep.subr.mxu0 0.0
  %251 = vmatpush1.xpose.msra.mxu0 0.0
  %252 = vmatprep.subr.mxu0 0.0
  %253 = vmatpush1.xpose.msra.mxu0 0.0
  %254 = vmatprep.subr.mxu0 0.0
  %255 = vmatpush1.xpose.msra.mxu0 0.0
  %256 = vmatprep.subr.mxu0 0.0
  %257 = vmatpush1.xpose.msra.mxu0 0.0
  %258 = vmatprep.subr.mxu0 0.0
  %259 = vmatpush1.xpose.msra.mxu0 0.0
  %260 = vmatprep.subr.mxu0 0.0
  %261 = vmatpush1.xpose.msra.mxu0 0.0
  %262 = vmatprep.subr.mxu0 0.0
  %263 = vmatpush1.xpose.msra.mxu0 0.0
  %264 = vmatprep.subr.mxu0 0.0
  %265 = vmatpush1.xpose.msra.mxu0 0.0
  %266 = vmatprep.subr.mxu0 0.0
  %267 = vmatpush1.xpose.msra.mxu0 0.0
  %268 = vmatprep.subr.mxu0 0.0
  %269 = vmatpush1.xpose.msra.mxu0 0.0
  %270 = vmatprep.subr.mxu0 0.0
  %271 = vmatpush1.xpose.msra.mxu0 %v238
  %272 = vmatprep.subr.mxu0 0.0
  %273 = vmatpush2.xpose.msra.mxu0 0.0
  %274 = vmatprep.subr.mxu0 0.0
  %275 = vmatpush2.xpose.msra.mxu0 0.0
  %276 = vmatprep.subr.mxu0 0.0
  %277 = vmatpush2.xpose.msra.mxu0 0.0
  %278 = vmatprep.subr.mxu0 0.0
  %279 = vmatpush2.xpose.msra.mxu0 0.0
  %280 = vmatprep.subr.mxu0 0.0
  %281 = vmatpush2.xpose.msra.mxu0 0.0
  %282 = vmatprep.subr.mxu0 0.0
  %283 = vmatpush2.xpose.msra.mxu0 0.0
  %284 = vmatprep.subr.mxu0 0.0
  %285 = vmatpush2.xpose.msra.mxu0 0.0
  %286 = vmatprep.subr.mxu0 0.0
  %287 = vmatpush2.xpose.msra.mxu0 0.0
  %288 = vmatprep.subr.mxu0 0.0
  %289 = vmatpush2.xpose.msra.mxu0 0.0
  %290 = vmatprep.subr.mxu0 0.0
  %291 = vmatpush2.xpose.msra.mxu0 0.0
  %292 = vmatprep.subr.mxu0 0.0
  %293 = vmatpush2.xpose.msra.mxu0 0.0
  %294 = vmatprep.subr.mxu0 0.0
  %295 = vmatpush2.xpose.msra.mxu0 0.0
  %296 = vmatprep.subr.mxu0 0.0
  %297 = vmatpush2.xpose.msra.mxu0 0.0
  %298 = vmatprep.subr.mxu0 0.0
  %299 = vmatpush2.xpose.msra.mxu0 0.0
  %300 = vmatprep.subr.mxu0 0.0
  %301 = vmatpush2.xpose.msra.mxu0 0.0
  %302 = vmatprep.subr.mxu0 0.0
  %303 = vmatpush2.xpose.msra.mxu0 0.0
  %304 = vmatprep.mubr.f32.mxu0 0.0
  %305 = vmatmul.mubr.f32.gmra.mxu0 %v236
  %v306 = vpop.f32.mrf.mxu0
  %v307 = vadd.f32 0.0, %v306
  %v308 = vpop.f32.mrf.mxu0
  %309 = vdwg.mxu0
  %v310 = vsel %vm156, %v229, -inf
  %311 = vmax.xlane.f32.xlu0 %v310
  %v312 = vpop.xlane.xlu0 %311
  %v313 = vsel %vm156, %v307, -inf
  %314 = vmax.xlane.f32.xlu0 %v313
  %v315 = vpop.xlane.xlu0 %314
  %v316 = vsub.f32 %v229, %v312
  %v317 = vsub.f32 %v307, %v315
  %v318 = vmul.f32 %v316, 1.442695
  %v319 = vpow.pop %v318
  %v320 = vmul.f32 %v317, 1.442695
  %v321 = vpow.pop %v320
  %v322 = vsel %vm156, %v319, 0.0
  %323 = vadd.xlane.f32.xlu0 %v322
  %v324 = vpop.xlane.xlu0 %323
  %v325 = vsel %vm156, %v321, 0.0
  %326 = vadd.xlane.f32.xlu0 %v325
  %v327 = vpop.xlane.xlu0 %326
  %v328 = vrcp.pop %v324
  %v329 = vrcp.pop %v327
  %v330 = vmul.f32 %v319, %v328
  %v331 = vmul.f32 %v321, %v329
  %332 = vrot.lane.b32.xlu0 %v139, 64
  %v333 = vpop.permute.xlu0 %332
  %v336 = vsel %vm156, %v330, 0
  %338 = vmatprep.subr.mxu0 0.0
  %339 = vmatpush1.msra.mxu0 0.0
  %340 = vmatprep.subr.mxu0 0.0
  %341 = vmatpush1.msra.mxu0 0.0
  %342 = vmatprep.subr.mxu0 0.0
  %343 = vmatpush1.msra.mxu0 0.0
  %344 = vmatprep.subr.mxu0 0.0
  %345 = vmatpush1.msra.mxu0 0.0
  %346 = vmatprep.subr.mxu0 0.0
  %347 = vmatpush1.msra.mxu0 0.0
  %348 = vmatprep.subr.mxu0 0.0
  %349 = vmatpush1.msra.mxu0 0.0
  %350 = vmatprep.subr.mxu0 0.0
  %351 = vmatpush1.msra.mxu0 0.0
  %352 = vmatprep.subr.mxu0 0.0
  %353 = vmatpush1.msra.mxu0 0.0
  %354 = vmatprep.subr.mxu0 0.0
  %355 = vmatpush1.msra.mxu0 0.0
  %356 = vmatprep.subr.mxu0 0.0
  %357 = vmatpush1.msra.mxu0 0.0
  %358 = vmatprep.subr.mxu0 0.0
  %359 = vmatpush1.msra.mxu0 0.0
  %360 = vmatprep.subr.mxu0 0.0
  %361 = vmatpush1.msra.mxu0 0.0
  %362 = vmatprep.subr.mxu0 0.0
  %363 = vmatpush1.msra.mxu0 0.0
  %364 = vmatprep.subr.mxu0 0.0
  %365 = vmatpush1.msra.mxu0 0.0
  %366 = vmatprep.subr.mxu0 0.0
  %367 = vmatpush1.msra.mxu0 0.0
  %368 = vmatprep.subr.mxu0 0.0
  %369 = vmatpush1.msra.mxu0 %v333
  %370 = vmatprep.subr.mxu0 0.0
  %371 = vmatpush2.msra.mxu0 0.0
  %372 = vmatprep.subr.mxu0 0.0
  %373 = vmatpush2.msra.mxu0 0.0
  %374 = vmatprep.subr.mxu0 0.0
  %375 = vmatpush2.msra.mxu0 0.0
  %376 = vmatprep.subr.mxu0 0.0
  %377 = vmatpush2.msra.mxu0 0.0
  %378 = vmatprep.subr.mxu0 0.0
  %379 = vmatpush2.msra.mxu0 0.0
  %380 = vmatprep.subr.mxu0 0.0
  %381 = vmatpush2.msra.mxu0 0.0
  %382 = vmatprep.subr.mxu0 0.0
  %383 = vmatpush2.msra.mxu0 0.0
  %384 = vmatprep.subr.mxu0 0.0
  %385 = vmatpush2.msra.mxu0 0.0
  %386 = vmatprep.subr.mxu0 0.0
  %387 = vmatpush2.msra.mxu0 0.0
  %388 = vmatprep.subr.mxu0 0.0
  %389 = vmatpush2.msra.mxu0 0.0
  %390 = vmatprep.subr.mxu0 0.0
  %391 = vmatpush2.msra.mxu0 0.0
  %392 = vmatprep.subr.mxu0 0.0
  %393 = vmatpush2.msra.mxu0 0.0
  %394 = vmatprep.subr.mxu0 0.0
  %395 = vmatpush2.msra.mxu0 0.0
  %396 = vmatprep.subr.mxu0 0.0
  %397 = vmatpush2.msra.mxu0 0.0
  %398 = vmatprep.subr.mxu0 0.0
  %399 = vmatpush2.msra.mxu0 0.0
  %400 = vmatprep.subr.mxu0 0.0
  %401 = vmatpush2.msra.mxu0 0.0
  %402 = vmatprep.mubr.f32.mxu0 0.0
  %403 = vmatmul.mubr.f32.gmra.mxu0 %v336
  %v404 = vpop.f32.mrf.mxu0
  %v405 = vadd.f32 0.0, %v404
  %v406 = vpop.f32.mrf.mxu0
  %407 = vdwg.mxu0
  %408 = vrot.lane.b32.xlu0 %v144, 64
  %v409 = vpop.permute.xlu0 %408
  %v412 = vsel %vm156, %v331, 0
  %414 = vmatprep.subr.mxu0 0.0
  %415 = vmatpush1.msra.mxu0 0.0
  %416 = vmatprep.subr.mxu0 0.0
  %417 = vmatpush1.msra.mxu0 0.0
  %418 = vmatprep.subr.mxu0 0.0
  %419 = vmatpush1.msra.mxu0 0.0
  %420 = vmatprep.subr.mxu0 0.0
  %421 = vmatpush1.msra.mxu0 0.0
  %422 = vmatprep.subr.mxu0 0.0
  %423 = vmatpush1.msra.mxu0 0.0
  %424 = vmatprep.subr.mxu0 0.0
  %425 = vmatpush1.msra.mxu0 0.0
  %426 = vmatprep.subr.mxu0 0.0
  %427 = vmatpush1.msra.mxu0 0.0
  %428 = vmatprep.subr.mxu0 0.0
  %429 = vmatpush1.msra.mxu0 0.0
  %430 = vmatprep.subr.mxu0 0.0
  %431 = vmatpush1.msra.mxu0 0.0
  %432 = vmatprep.subr.mxu0 0.0
  %433 = vmatpush1.msra.mxu0 0.0
  %434 = vmatprep.subr.mxu0 0.0
  %435 = vmatpush1.msra.mxu0 0.0
  %436 = vmatprep.subr.mxu0 0.0
  %437 = vmatpush1.msra.mxu0 0.0
  %438 = vmatprep.subr.mxu0 0.0
  %439 = vmatpush1.msra.mxu0 0.0
  %440 = vmatprep.subr.mxu0 0.0
  %441 = vmatpush1.msra.mxu0 0.0
  %442 = vmatprep.subr.mxu0 0.0
  %443 = vmatpush1.msra.mxu0 0.0
  %444 = vmatprep.subr.mxu0 0.0
  %445 = vmatpush1.msra.mxu0 %v409
  %446 = vmatprep.subr.mxu0 0.0
  %447 = vmatpush2.msra.mxu0 0.0
  %448 = vmatprep.subr.mxu0 0.0
  %449 = vmatpush2.msra.mxu0 0.0
  %450 = vmatprep.subr.mxu0 0.0
  %451 = vmatpush2.msra.mxu0 0.0
  %452 = vmatprep.subr.mxu0 0.0
  %453 = vmatpush2.msra.mxu0 0.0
  %454 = vmatprep.subr.mxu0 0.0
  %455 = vmatpush2.msra.mxu0 0.0
  %456 = vmatprep.subr.mxu0 0.0
  %457 = vmatpush2.msra.mxu0 0.0
  %458 = vmatprep.subr.mxu0 0.0
  %459 = vmatpush2.msra.mxu0 0.0
  %460 = vmatprep.subr.mxu0 0.0
  %461 = vmatpush2.msra.mxu0 0.0
  %462 = vmatprep.subr.mxu0 0.0
  %463 = vmatpush2.msra.mxu0 0.0
  %464 = vmatprep.subr.mxu0 0.0
  %465 = vmatpush2.msra.mxu0 0.0
  %466 = vmatprep.subr.mxu0 0.0
  %467 = vmatpush2.msra.mxu0 0.0
  %468 = vmatprep.subr.mxu0 0.0
  %469 = vmatpush2.msra.mxu0 0.0
  %470 = vmatprep.subr.mxu0 0.0
  %471 = vmatpush2.msra.mxu0 0.0
  %472 = vmatprep.subr.mxu0 0.0
  %473 = vmatpush2.msra.mxu0 0.0
  %474 = vmatprep.subr.mxu0 0.0
  %475 = vmatpush2.msra.mxu0 0.0
  %476 = vmatprep.subr.mxu0 0.0
  %477 = vmatpush2.msra.mxu0 0.0
  %478 = vmatprep.mubr.f32.mxu0 0.0
  %479 = vmatmul.mubr.f32.gmra.mxu0 %v412
  %v480 = vpop.f32.mrf.mxu0
  %v481 = vadd.f32 0.0, %v480
  %v482 = vpop.f32.mrf.mxu0
  %483 = vdwg.mxu0
  %484 = vrot.lane.b32.xlu0 %v151, 120
  %v485 = vpop.permute.xlu0 %484
  %486 = vrot.lane.b32.xlu0 %v139, 88
  %v487 = vpop.permute.xlu0 %486
  %v488 = vsel %vm156, %v485, 0
  %v490 = vsel %vm156, %v487, 0
  %492 = vmatprep.subr.mxu0 0.0
  %493 = vmatpush1.xpose.msra.mxu0 0.0
  %494 = vmatprep.subr.mxu0 0.0
  %495 = vmatpush1.xpose.msra.mxu0 0.0
  %496 = vmatprep.subr.mxu0 0.0
  %497 = vmatpush1.xpose.msra.mxu0 0.0
  %498 = vmatprep.subr.mxu0 0.0
  %499 = vmatpush1.xpose.msra.mxu0 0.0
  %500 = vmatprep.subr.mxu0 0.0
  %501 = vmatpush1.xpose.msra.mxu0 0.0
  %502 = vmatprep.subr.mxu0 0.0
  %503 = vmatpush1.xpose.msra.mxu0 0.0
  %504 = vmatprep.subr.mxu0 0.0
  %505 = vmatpush1.xpose.msra.mxu0 0.0
  %506 = vmatprep.subr.mxu0 0.0
  %507 = vmatpush1.xpose.msra.mxu0 0.0
  %508 = vmatprep.subr.mxu0 0.0
  %509 = vmatpush1.xpose.msra.mxu0 0.0
  %510 = vmatprep.subr.mxu0 0.0
  %511 = vmatpush1.xpose.msra.mxu0 0.0
  %512 = vmatprep.subr.mxu0 0.0
  %513 = vmatpush1.xpose.msra.mxu0 0.0
  %514 = vmatprep.subr.mxu0 0.0
  %515 = vmatpush1.xpose.msra.mxu0 0.0
  %516 = vmatprep.subr.mxu0 0.0
  %517 = vmatpush1.xpose.msra.mxu0 0.0
  %518 = vmatprep.subr.mxu0 0.0
  %519 = vmatpush1.xpose.msra.mxu0 0.0
  %520 = vmatprep.subr.mxu0 0.0
  %521 = vmatpush1.xpose.msra.mxu0 0.0
  %522 = vmatprep.subr.mxu0 0.0
  %523 = vmatpush1.xpose.msra.mxu0 %v490
  %524 = vmatprep.subr.mxu0 0.0
  %525 = vmatpush2.xpose.msra.mxu0 0.0
  %526 = vmatprep.subr.mxu0 0.0
  %527 = vmatpush2.xpose.msra.mxu0 0.0
  %528 = vmatprep.subr.mxu0 0.0
  %529 = vmatpush2.xpose.msra.mxu0 0.0
  %530 = vmatprep.subr.mxu0 0.0
  %531 = vmatpush2.xpose.msra.mxu0 0.0
  %532 = vmatprep.subr.mxu0 0.0
  %533 = vmatpush2.xpose.msra.mxu0 0.0
  %534 = vmatprep.subr.mxu0 0.0
  %535 = vmatpush2.xpose.msra.mxu0 0.0
  %536 = vmatprep.subr.mxu0 0.0
  %537 = vmatpush2.xpose.msra.mxu0 0.0
  %538 = vmatprep.subr.mxu0 0.0
  %539 = vmatpush2.xpose.msra.mxu0 0.0
  %540 = vmatprep.subr.mxu0 0.0
  %541 = vmatpush2.xpose.msra.mxu0 0.0
  %542 = vmatprep.subr.mxu0 0.0
  %543 = vmatpush2.xpose.msra.mxu0 0.0
  %544 = vmatprep.subr.mxu0 0.0
  %545 = vmatpush2.xpose.msra.mxu0 0.0
  %546 = vmatprep.subr.mxu0 0.0
  %547 = vmatpush2.xpose.msra.mxu0 0.0
  %548 = vmatprep.subr.mxu0 0.0
  %549 = vmatpush2.xpose.msra.mxu0 0.0
  %550 = vmatprep.subr.mxu0 0.0
  %551 = vmatpush2.xpose.msra.mxu0 0.0
  %552 = vmatprep.subr.mxu0 0.0
  %553 = vmatpush2.xpose.msra.mxu0 0.0
  %554 = vmatprep.subr.mxu0 0.0
  %555 = vmatpush2.xpose.msra.mxu0 0.0
  %556 = vmatprep.mubr.f32.mxu0 0.0
  %557 = vmatmul.mubr.f32.gmra.mxu0 %v488
  %v558 = vpop.f32.mrf.mxu0
  %v559 = vadd.f32 0.0, %v558
  %v560 = vpop.f32.mrf.mxu0
  %561 = vdwg.mxu0
  %562 = vrot.lane.b32.xlu0 %v152, 120
  %v563 = vpop.permute.xlu0 %562
  %564 = vrot.lane.b32.xlu0 %v144, 88
  %v565 = vpop.permute.xlu0 %564
  %v566 = vsel %vm156, %v563, 0
  %v568 = vsel %vm156, %v565, 0
  %570 = vmatprep.subr.mxu0 0.0
  %571 = vmatpush1.xpose.msra.mxu0 0.0
  %572 = vmatprep.subr.mxu0 0.0
  %573 = vmatpush1.xpose.msra.mxu0 0.0
  %574 = vmatprep.subr.mxu0 0.0
  %575 = vmatpush1.xpose.msra.mxu0 0.0
  %576 = vmatprep.subr.mxu0 0.0
  %577 = vmatpush1.xpose.msra.mxu0 0.0
  %578 = vmatprep.subr.mxu0 0.0
  %579 = vmatpush1.xpose.msra.mxu0 0.0
  %580 = vmatprep.subr.mxu0 0.0
  %581 = vmatpush1.xpose.msra.mxu0 0.0
  %582 = vmatprep.subr.mxu0 0.0
  %583 = vmatpush1.xpose.msra.mxu0 0.0
  %584 = vmatprep.subr.mxu0 0.0
  %585 = vmatpush1.xpose.msra.mxu0 0.0
  %586 = vmatprep.subr.mxu0 0.0
  %587 = vmatpush1.xpose.msra.mxu0 0.0
  %588 = vmatprep.subr.mxu0 0.0
  %589 = vmatpush1.xpose.msra.mxu0 0.0
  %590 = vmatprep.subr.mxu0 0.0
  %591 = vmatpush1.xpose.msra.mxu0 0.0
  %592 = vmatprep.subr.mxu0 0.0
  %593 = vmatpush1.xpose.msra.mxu0 0.0
  %594 = vmatprep.subr.mxu0 0.0
  %595 = vmatpush1.xpose.msra.mxu0 0.0
  %596 = vmatprep.subr.mxu0 0.0
  %597 = vmatpush1.xpose.msra.mxu0 0.0
  %598 = vmatprep.subr.mxu0 0.0
  %599 = vmatpush1.xpose.msra.mxu0 0.0
  %600 = vmatprep.subr.mxu0 0.0
  %601 = vmatpush1.xpose.msra.mxu0 %v568
  %602 = vmatprep.subr.mxu0 0.0
  %603 = vmatpush2.xpose.msra.mxu0 0.0
  %604 = vmatprep.subr.mxu0 0.0
  %605 = vmatpush2.xpose.msra.mxu0 0.0
  %606 = vmatprep.subr.mxu0 0.0
  %607 = vmatpush2.xpose.msra.mxu0 0.0
  %608 = vmatprep.subr.mxu0 0.0
  %609 = vmatpush2.xpose.msra.mxu0 0.0
  %610 = vmatprep.subr.mxu0 0.0
  %611 = vmatpush2.xpose.msra.mxu0 0.0
  %612 = vmatprep.subr.mxu0 0.0
  %613 = vmatpush2.xpose.msra.mxu0 0.0
  %614 = vmatprep.subr.mxu0 0.0
  %615 = vmatpush2.xpose.msra.mxu0 0.0
  %616 = vmatprep.subr.mxu0 0.0
  %617 = vmatpush2.xpose.msra.mxu0 0.0
  %618 = vmatprep.subr.mxu0 0.0
  %619 = vmatpush2.xpose.msra.mxu0 0.0
  %620 = vmatprep.subr.mxu0 0.0
  %621 = vmatpush2.xpose.msra.mxu0 0.0
  %622 = vmatprep.subr.mxu0 0.0
  %623 = vmatpush2.xpose.msra.mxu0 0.0
  %624 = vmatprep.subr.mxu0 0.0
  %625 = vmatpush2.xpose.msra.mxu0 0.0
  %626 = vmatprep.subr.mxu0 0.0
  %627 = vmatpush2.xpose.msra.mxu0 0.0
  %628 = vmatprep.subr.mxu0 0.0
  %629 = vmatpush2.xpose.msra.mxu0 0.0
  %630 = vmatprep.subr.mxu0 0.0
  %631 = vmatpush2.xpose.msra.mxu0 0.0
  %632 = vmatprep.subr.mxu0 0.0
  %633 = vmatpush2.xpose.msra.mxu0 0.0
  %634 = vmatprep.mubr.f32.mxu0 0.0
  %635 = vmatmul.mubr.f32.gmra.mxu0 %v566
  %v636 = vpop.f32.mrf.mxu0
  %v637 = vadd.f32 0.0, %v636
  %v638 = vpop.f32.mrf.mxu0
  %639 = vdwg.mxu0
  %v640 = vsel %vm156, %v559, -inf
  %641 = vmax.xlane.f32.xlu0 %v640
  %v642 = vpop.xlane.xlu0 %641
  %v643 = vsel %vm156, %v637, -inf
  %644 = vmax.xlane.f32.xlu0 %v643
  %v645 = vpop.xlane.xlu0 %644
  %v646 = vsub.f32 %v559, %v642
  %v647 = vsub.f32 %v637, %v645
  %v648 = vmul.f32 %v646, 1.442695
  %v649 = vpow.pop %v648
  %v650 = vmul.f32 %v647, 1.442695
  %v651 = vpow.pop %v650
  %v652 = vsel %vm156, %v649, 0.0
  %653 = vadd.xlane.f32.xlu0 %v652
  %v654 = vpop.xlane.xlu0 %653
  %v655 = vsel %vm156, %v651, 0.0
  %656 = vadd.xlane.f32.xlu0 %v655
  %v657 = vpop.xlane.xlu0 %656
  %v658 = vrcp.pop %v654
  %v659 = vrcp.pop %v657
  %v660 = vmul.f32 %v649, %v658
  %v661 = vmul.f32 %v651, %v659
  %662 = vrot.lane.b32.xlu0 %v139, 56
  %v663 = vpop.permute.xlu0 %662
  %v666 = vsel %vm156, %v660, 0
  %668 = vmatprep.subr.mxu0 0.0
  %669 = vmatpush1.msra.mxu0 0.0
  %670 = vmatprep.subr.mxu0 0.0
  %671 = vmatpush1.msra.mxu0 0.0
  %672 = vmatprep.subr.mxu0 0.0
  %673 = vmatpush1.msra.mxu0 0.0
  %674 = vmatprep.subr.mxu0 0.0
  %675 = vmatpush1.msra.mxu0 0.0
  %676 = vmatprep.subr.mxu0 0.0
  %677 = vmatpush1.msra.mxu0 0.0
  %678 = vmatprep.subr.mxu0 0.0
  %679 = vmatpush1.msra.mxu0 0.0
  %680 = vmatprep.subr.mxu0 0.0
  %681 = vmatpush1.msra.mxu0 0.0
  %682 = vmatprep.subr.mxu0 0.0
  %683 = vmatpush1.msra.mxu0 0.0
  %684 = vmatprep.subr.mxu0 0.0
  %685 = vmatpush1.msra.mxu0 0.0
  %686 = vmatprep.subr.mxu0 0.0
  %687 = vmatpush1.msra.mxu0 0.0
  %688 = vmatprep.subr.mxu0 0.0
  %689 = vmatpush1.msra.mxu0 0.0
  %690 = vmatprep.subr.mxu0 0.0
  %691 = vmatpush1.msra.mxu0 0.0
  %692 = vmatprep.subr.mxu0 0.0
  %693 = vmatpush1.msra.mxu0 0.0
  %694 = vmatprep.subr.mxu0 0.0
  %695 = vmatpush1.msra.mxu0 0.0
  %696 = vmatprep.subr.mxu0 0.0
  %697 = vmatpush1.msra.mxu0 0.0
  %698 = vmatprep.subr.mxu0 0.0
  %699 = vmatpush1.msra.mxu0 %v663
  %700 = vmatprep.subr.mxu0 0.0
  %701 = vmatpush2.msra.mxu0 0.0
  %702 = vmatprep.subr.mxu0 0.0
  %703 = vmatpush2.msra.mxu0 0.0
  %704 = vmatprep.subr.mxu0 0.0
  %705 = vmatpush2.msra.mxu0 0.0
  %706 = vmatprep.subr.mxu0 0.0
  %707 = vmatpush2.msra.mxu0 0.0
  %708 = vmatprep.subr.mxu0 0.0
  %709 = vmatpush2.msra.mxu0 0.0
  %710 = vmatprep.subr.mxu0 0.0
  %711 = vmatpush2.msra.mxu0 0.0
  %712 = vmatprep.subr.mxu0 0.0
  %713 = vmatpush2.msra.mxu0 0.0
  %714 = vmatprep.subr.mxu0 0.0
  %715 = vmatpush2.msra.mxu0 0.0
  %716 = vmatprep.subr.mxu0 0.0
  %717 = vmatpush2.msra.mxu0 0.0
  %718 = vmatprep.subr.mxu0 0.0
  %719 = vmatpush2.msra.mxu0 0.0
  %720 = vmatprep.subr.mxu0 0.0
  %721 = vmatpush2.msra.mxu0 0.0
  %722 = vmatprep.subr.mxu0 0.0
  %723 = vmatpush2.msra.mxu0 0.0
  %724 = vmatprep.subr.mxu0 0.0
  %725 = vmatpush2.msra.mxu0 0.0
  %726 = vmatprep.subr.mxu0 0.0
  %727 = vmatpush2.msra.mxu0 0.0
  %728 = vmatprep.subr.mxu0 0.0
  %729 = vmatpush2.msra.mxu0 0.0
  %730 = vmatprep.subr.mxu0 0.0
  %731 = vmatpush2.msra.mxu0 0.0
  %732 = vmatprep.mubr.f32.mxu0 0.0
  %733 = vmatmul.mubr.f32.gmra.mxu0 %v666
  %v734 = vpop.f32.mrf.mxu0
  %v735 = vadd.f32 0.0, %v734
  %v736 = vpop.f32.mrf.mxu0
  %737 = vdwg.mxu0
  %738 = vrot.lane.b32.xlu0 %v144, 56
  %v739 = vpop.permute.xlu0 %738
  %v742 = vsel %vm156, %v661, 0
  %744 = vmatprep.subr.mxu0 0.0
  %745 = vmatpush1.msra.mxu0 0.0
  %746 = vmatprep.subr.mxu0 0.0
  %747 = vmatpush1.msra.mxu0 0.0
  %748 = vmatprep.subr.mxu0 0.0
  %749 = vmatpush1.msra.mxu0 0.0
  %750 = vmatprep.subr.mxu0 0.0
  %751 = vmatpush1.msra.mxu0 0.0
  %752 = vmatprep.subr.mxu0 0.0
  %753 = vmatpush1.msra.mxu0 0.0
  %754 = vmatprep.subr.mxu0 0.0
  %755 = vmatpush1.msra.mxu0 0.0
  %756 = vmatprep.subr.mxu0 0.0
  %757 = vmatpush1.msra.mxu0 0.0
  %758 = vmatprep.subr.mxu0 0.0
  %759 = vmatpush1.msra.mxu0 0.0
  %760 = vmatprep.subr.mxu0 0.0
  %761 = vmatpush1.msra.mxu0 0.0
  %762 = vmatprep.subr.mxu0 0.0
  %763 = vmatpush1.msra.mxu0 0.0
  %764 = vmatprep.subr.mxu0 0.0
  %765 = vmatpush1.msra.mxu0 0.0
  %766 = vmatprep.subr.mxu0 0.0
  %767 = vmatpush1.msra.mxu0 0.0
  %768 = vmatprep.subr.mxu0 0.0
  %769 = vmatpush1.msra.mxu0 0.0
  %770 = vmatprep.subr.mxu0 0.0
  %771 = vmatpush1.msra.mxu0 0.0
  %772 = vmatprep.subr.mxu0 0.0
  %773 = vmatpush1.msra.mxu0 0.0
  %774 = vmatprep.subr.mxu0 0.0
  %775 = vmatpush1.msra.mxu0 %v739
  %776 = vmatprep.subr.mxu0 0.0
  %777 = vmatpush2.msra.mxu0 0.0
  %778 = vmatprep.subr.mxu0 0.0
  %779 = vmatpush2.msra.mxu0 0.0
  %780 = vmatprep.subr.mxu0 0.0
  %781 = vmatpush2.msra.mxu0 0.0
  %782 = vmatprep.subr.mxu0 0.0
  %783 = vmatpush2.msra.mxu0 0.0
  %784 = vmatprep.subr.mxu0 0.0
  %785 = vmatpush2.msra.mxu0 0.0
  %786 = vmatprep.subr.mxu0 0.0
  %787 = vmatpush2.msra.mxu0 0.0
  %788 = vmatprep.subr.mxu0 0.0
  %789 = vmatpush2.msra.mxu0 0.0
  %790 = vmatprep.subr.mxu0 0.0
  %791 = vmatpush2.msra.mxu0 0.0
  %792 = vmatprep.subr.mxu0 0.0
  %793 = vmatpush2.msra.mxu0 0.0
  %794 = vmatprep.subr.mxu0 0.0
  %795 = vmatpush2.msra.mxu0 0.0
  %796 = vmatprep.subr.mxu0 0.0
  %797 = vmatpush2.msra.mxu0 0.0
  %798 = vmatprep.subr.mxu0 0.0
  %799 = vmatpush2.msra.mxu0 0.0
  %800 = vmatprep.subr.mxu0 0.0
  %801 = vmatpush2.msra.mxu0 0.0
  %802 = vmatprep.subr.mxu0 0.0
  %803 = vmatpush2.msra.mxu0 0.0
  %804 = vmatprep.subr.mxu0 0.0
  %805 = vmatpush2.msra.mxu0 0.0
  %806 = vmatprep.subr.mxu0 0.0
  %807 = vmatpush2.msra.mxu0 0.0
  %808 = vmatprep.mubr.f32.mxu0 0.0
  %809 = vmatmul.mubr.f32.gmra.mxu0 %v742
  %v810 = vpop.f32.mrf.mxu0
  %v811 = vadd.f32 0.0, %v810
  %v812 = vpop.f32.mrf.mxu0
  %813 = vdwg.mxu0
  %v815 = vsel %vm156, %v735, 0
  %v818 = vsel %vm156, %v811, 0
  %820 = vmatprep.subr.mxu0 0.0
  %821 = vmatpush1.msra.mxu0 0.0
  %822 = vmatprep.subr.mxu0 0.0
  %823 = vmatpush1.msra.mxu0 0.0
  %824 = vmatprep.subr.mxu0 0.0
  %825 = vmatpush1.msra.mxu0 0.0
  %826 = vmatprep.subr.mxu0 0.0
  %827 = vmatpush1.msra.mxu0 0.0
  %828 = vmatprep.subr.mxu0 0.0
  %829 = vmatpush1.msra.mxu0 0.0
  %830 = vmatprep.subr.mxu0 0.0
  %831 = vmatpush1.msra.mxu0 0.0
  %832 = vmatprep.subr.mxu0 0.0
  %833 = vmatpush1.msra.mxu0 0.0
  %834 = vmatprep.subr.mxu0 0.0
  %835 = vmatpush1.msra.mxu0 0.0
  %836 = vmatprep.subr.mxu0 0.0
  %837 = vmatpush1.msra.mxu0 0.0
  %838 = vmatprep.subr.mxu0 0.0
  %839 = vmatpush1.msra.mxu0 0.0
  %840 = vmatprep.subr.mxu0 0.0
  %841 = vmatpush1.msra.mxu0 0.0
  %842 = vmatprep.subr.mxu0 0.0
  %843 = vmatpush1.msra.mxu0 0.0
  %844 = vmatprep.subr.mxu0 0.0
  %845 = vmatpush1.msra.mxu0 0.0
  %846 = vmatprep.subr.mxu0 0.0
  %847 = vmatpush1.msra.mxu0 0.0
  %848 = vmatprep.subr.mxu0 0.0
  %849 = vmatpush1.msra.mxu0 0.0
  %850 = vmatprep.subr.mxu0 0.0
  %851 = vmatpush1.msra.mxu0 %v148
  %852 = vmatprep.subr.mxu0 0.0
  %853 = vmatpush2.msra.mxu0 0.0
  %854 = vmatprep.subr.mxu0 0.0
  %855 = vmatpush2.msra.mxu0 0.0
  %856 = vmatprep.subr.mxu0 0.0
  %857 = vmatpush2.msra.mxu0 0.0
  %858 = vmatprep.subr.mxu0 0.0
  %859 = vmatpush2.msra.mxu0 0.0
  %860 = vmatprep.subr.mxu0 0.0
  %861 = vmatpush2.msra.mxu0 0.0
  %862 = vmatprep.subr.mxu0 0.0
  %863 = vmatpush2.msra.mxu0 0.0
  %864 = vmatprep.subr.mxu0 0.0
  %865 = vmatpush2.msra.mxu0 0.0
  %866 = vmatprep.subr.mxu0 0.0
  %867 = vmatpush2.msra.mxu0 0.0
  %868 = vmatprep.subr.mxu0 0.0
  %869 = vmatpush2.msra.mxu0 0.0
  %870 = vmatprep.subr.mxu0 0.0
  %871 = vmatpush2.msra.mxu0 0.0
  %872 = vmatprep.subr.mxu0 0.0
  %873 = vmatpush2.msra.mxu0 0.0
  %874 = vmatprep.subr.mxu0 0.0
  %875 = vmatpush2.msra.mxu0 0.0
  %876 = vmatprep.subr.mxu0 0.0
  %877 = vmatpush2.msra.mxu0 0.0
  %878 = vmatprep.subr.mxu0 0.0
  %879 = vmatpush2.msra.mxu0 0.0
  %880 = vmatprep.subr.mxu0 0.0
  %881 = vmatpush2.msra.mxu0 0.0
  %882 = vmatprep.subr.mxu0 0.0
  %883 = vmatpush2.msra.mxu0 0.0
  %884 = vmatprep.mubr.f32.mxu0 0.0
  %885 = vmatmul.mubr.f32.gmra.mxu0 %v815
  %v886 = vpop.f32.mrf.mxu0
  %v887 = vadd.f32 0.0, %v886
  %v888 = vpop.f32.mrf.mxu0
  %889 = vmatprep.mubr.f32.mxu0 0.0
  %890 = vmatmul.mubr.f32.gmra.mxu0 %v818
  %v891 = vpop.f32.mrf.mxu0
  %v892 = vadd.f32 0.0, %v891
  %v893 = vpop.f32.mrf.mxu0
  %894 = vdwg.mxu0
  %v896 = vsel %vm156, %v405, 0
  %v899 = vsel %vm156, %v481, 0
  %901 = vmatprep.subr.mxu0 0.0
  %902 = vmatpush1.msra.mxu0 0.0
  %903 = vmatprep.subr.mxu0 0.0
  %904 = vmatpush1.msra.mxu0 0.0
  %905 = vmatprep.subr.mxu0 0.0
  %906 = vmatpush1.msra.mxu0 0.0
  %907 = vmatprep.subr.mxu0 0.0
  %908 = vmatpush1.msra.mxu0 0.0
  %909 = vmatprep.subr.mxu0 0.0
  %910 = vmatpush1.msra.mxu0 0.0
  %911 = vmatprep.subr.mxu0 0.0
  %912 = vmatpush1.msra.mxu0 0.0
  %913 = vmatprep.subr.mxu0 0.0
  %914 = vmatpush1.msra.mxu0 0.0
  %915 = vmatprep.subr.mxu0 0.0
  %916 = vmatpush1.msra.mxu0 0.0
  %917 = vmatprep.subr.mxu0 0.0
  %918 = vmatpush1.msra.mxu0 0.0
  %919 = vmatprep.subr.mxu0 0.0
  %920 = vmatpush1.msra.mxu0 0.0
  %921 = vmatprep.subr.mxu0 0.0
  %922 = vmatpush1.msra.mxu0 0.0
  %923 = vmatprep.subr.mxu0 0.0
  %924 = vmatpush1.msra.mxu0 0.0
  %925 = vmatprep.subr.mxu0 0.0
  %926 = vmatpush1.msra.mxu0 0.0
  %927 = vmatprep.subr.mxu0 0.0
  %928 = vmatpush1.msra.mxu0 0.0
  %929 = vmatprep.subr.mxu0 0.0
  %930 = vmatpush1.msra.mxu0 0.0
  %931 = vmatprep.subr.mxu0 0.0
  %932 = vmatpush1.msra.mxu0 %v147
  %933 = vmatprep.subr.mxu0 0.0
  %934 = vmatpush2.msra.mxu0 0.0
  %935 = vmatprep.subr.mxu0 0.0
  %936 = vmatpush2.msra.mxu0 0.0
  %937 = vmatprep.subr.mxu0 0.0
  %938 = vmatpush2.msra.mxu0 0.0
  %939 = vmatprep.subr.mxu0 0.0
  %940 = vmatpush2.msra.mxu0 0.0
  %941 = vmatprep.subr.mxu0 0.0
  %942 = vmatpush2.msra.mxu0 0.0
  %943 = vmatprep.subr.mxu0 0.0
  %944 = vmatpush2.msra.mxu0 0.0
  %945 = vmatprep.subr.mxu0 0.0
  %946 = vmatpush2.msra.mxu0 0.0
  %947 = vmatprep.subr.mxu0 0.0
  %948 = vmatpush2.msra.mxu0 0.0
  %949 = vmatprep.subr.mxu0 0.0
  %950 = vmatpush2.msra.mxu0 0.0
  %951 = vmatprep.subr.mxu0 0.0
  %952 = vmatpush2.msra.mxu0 0.0
  %953 = vmatprep.subr.mxu0 0.0
  %954 = vmatpush2.msra.mxu0 0.0
  %955 = vmatprep.subr.mxu0 0.0
  %956 = vmatpush2.msra.mxu0 0.0
  %957 = vmatprep.subr.mxu0 0.0
  %958 = vmatpush2.msra.mxu0 0.0
  %959 = vmatprep.subr.mxu0 0.0
  %960 = vmatpush2.msra.mxu0 0.0
  %961 = vmatprep.subr.mxu0 0.0
  %962 = vmatpush2.msra.mxu0 0.0
  %963 = vmatprep.subr.mxu0 0.0
  %964 = vmatpush2.msra.mxu0 0.0
  %965 = vmatprep.mubr.f32.mxu0 0.0
  %966 = vmatmul.mubr.f32.gmra.mxu0 %v896
  %v967 = vpop.f32.mrf.mxu0
  %v968 = vadd.f32 %v887, %v967
  %v969 = vpop.f32.mrf.mxu0
  %970 = vmatprep.mubr.f32.mxu0 0.0
  %971 = vmatmul.mubr.f32.gmra.mxu0 %v899
  %v972 = vpop.f32.mrf.mxu0
  %v973 = vadd.f32 %v892, %v972
  %v974 = vpop.f32.mrf.mxu0
  %975 = vdwg.mxu0
  %976 = vrot.lane.b32.xlu0 %v151, 112
  %v977 = vpop.permute.xlu0 %976
  %978 = vrot.lane.b32.xlu0 %v139, 80
  %v979 = vpop.permute.xlu0 %978
  %v980 = vsel %vm156, %v977, 0
  %v982 = vsel %vm156, %v979, 0
  %984 = vmatprep.subr.mxu0 0.0
  %985 = vmatpush1.xpose.msra.mxu0 0.0
  %986 = vmatprep.subr.mxu0 0.0
  %987 = vmatpush1.xpose.msra.mxu0 0.0
  %988 = vmatprep.subr.mxu0 0.0
  %989 = vmatpush1.xpose.msra.mxu0 0.0
  %990 = vmatprep.subr.mxu0 0.0
  %991 = vmatpush1.xpose.msra.mxu0 0.0
  %992 = vmatprep.subr.mxu0 0.0
  %993 = vmatpush1.xpose.msra.mxu0 0.0
  %994 = vmatprep.subr.mxu0 0.0
  %995 = vmatpush1.xpose.msra.mxu0 0.0
  %996 = vmatprep.subr.mxu0 0.0
  %997 = vmatpush1.xpose.msra.mxu0 0.0
  %998 = vmatprep.subr.mxu0 0.0
  %999 = vmatpush1.xpose.msra.mxu0 0.0
  %1000 = vmatprep.subr.mxu0 0.0
  %1001 = vmatpush1.xpose.msra.mxu0 0.0
  %1002 = vmatprep.subr.mxu0 0.0
  %1003 = vmatpush1.xpose.msra.mxu0 0.0
  %1004 = vmatprep.subr.mxu0 0.0
  %1005 = vmatpush1.xpose.msra.mxu0 0.0
  %1006 = vmatprep.subr.mxu0 0.0
  %1007 = vmatpush1.xpose.msra.mxu0 0.0
  %1008 = vmatprep.subr.mxu0 0.0
  %1009 = vmatpush1.xpose.msra.mxu0 0.0
  %1010 = vmatprep.subr.mxu0 0.0
  %1011 = vmatpush1.xpose.msra.mxu0 0.0
  %1012 = vmatprep.subr.mxu0 0.0
  %1013 = vmatpush1.xpose.msra.mxu0 0.0
  %1014 = vmatprep.subr.mxu0 0.0
  %1015 = vmatpush1.xpose.msra.mxu0 %v982
  %1016 = vmatprep.subr.mxu0 0.0
  %1017 = vmatpush2.xpose.msra.mxu0 0.0
  %1018 = vmatprep.subr.mxu0 0.0
  %1019 = vmatpush2.xpose.msra.mxu0 0.0
  %1020 = vmatprep.subr.mxu0 0.0
  %1021 = vmatpush2.xpose.msra.mxu0 0.0
  %1022 = vmatprep.subr.mxu0 0.0
  %1023 = vmatpush2.xpose.msra.mxu0 0.0
  %1024 = vmatprep.subr.mxu0 0.0
  %1025 = vmatpush2.xpose.msra.mxu0 0.0
  %1026 = vmatprep.subr.mxu0 0.0
  %1027 = vmatpush2.xpose.msra.mxu0 0.0
  %1028 = vmatprep.subr.mxu0 0.0
  %1029 = vmatpush2.xpose.msra.mxu0 0.0
  %1030 = vmatprep.subr.mxu0 0.0
  %1031 = vmatpush2.xpose.msra.mxu0 0.0
  %1032 = vmatprep.subr.mxu0 0.0
  %1033 = vmatpush2.xpose.msra.mxu0 0.0
  %1034 = vmatprep.subr.mxu0 0.0
  %1035 = vmatpush2.xpose.msra.mxu0 0.0
  %1036 = vmatprep.subr.mxu0 0.0
  %1037 = vmatpush2.xpose.msra.mxu0 0.0
  %1038 = vmatprep.subr.mxu0 0.0
  %1039 = vmatpush2.xpose.msra.mxu0 0.0
  %1040 = vmatprep.subr.mxu0 0.0
  %1041 = vmatpush2.xpose.msra.mxu0 0.0
  %1042 = vmatprep.subr.mxu0 0.0
  %1043 = vmatpush2.xpose.msra.mxu0 0.0
  %1044 = vmatprep.subr.mxu0 0.0
  %1045 = vmatpush2.xpose.msra.mxu0 0.0
  %1046 = vmatprep.subr.mxu0 0.0
  %1047 = vmatpush2.xpose.msra.mxu0 0.0
  %1048 = vmatprep.mubr.f32.mxu0 0.0
  %1049 = vmatmul.mubr.f32.gmra.mxu0 %v980
  %v1050 = vpop.f32.mrf.mxu0
  %v1051 = vadd.f32 0.0, %v1050
  %v1052 = vpop.f32.mrf.mxu0
  %1053 = vdwg.mxu0
  %1054 = vrot.lane.b32.xlu0 %v152, 112
  %v1055 = vpop.permute.xlu0 %1054
  %1056 = vrot.lane.b32.xlu0 %v144, 80
  %v1057 = vpop.permute.xlu0 %1056
  %v1058 = vsel %vm156, %v1055, 0
  %v1060 = vsel %vm156, %v1057, 0
  %1062 = vmatprep.subr.mxu0 0.0
  %1063 = vmatpush1.xpose.msra.mxu0 0.0
  %1064 = vmatprep.subr.mxu0 0.0
  %1065 = vmatpush1.xpose.msra.mxu0 0.0
  %1066 = vmatprep.subr.mxu0 0.0
  %1067 = vmatpush1.xpose.msra.mxu0 0.0
  %1068 = vmatprep.subr.mxu0 0.0
  %1069 = vmatpush1.xpose.msra.mxu0 0.0
  %1070 = vmatprep.subr.mxu0 0.0
  %1071 = vmatpush1.xpose.msra.mxu0 0.0
  %1072 = vmatprep.subr.mxu0 0.0
  %1073 = vmatpush1.xpose.msra.mxu0 0.0
  %1074 = vmatprep.subr.mxu0 0.0
  %1075 = vmatpush1.xpose.msra.mxu0 0.0
  %1076 = vmatprep.subr.mxu0 0.0
  %1077 = vmatpush1.xpose.msra.mxu0 0.0
  %1078 = vmatprep.subr.mxu0 0.0
  %1079 = vmatpush1.xpose.msra.mxu0 0.0
  %1080 = vmatprep.subr.mxu0 0.0
  %1081 = vmatpush1.xpose.msra.mxu0 0.0
  %1082 = vmatprep.subr.mxu0 0.0
  %1083 = vmatpush1.xpose.msra.mxu0 0.0
  %1084 = vmatprep.subr.mxu0 0.0
  %1085 = vmatpush1.xpose.msra.mxu0 0.0
  %1086 = vmatprep.subr.mxu0 0.0
  %1087 = vmatpush1.xpose.msra.mxu0 0.0
  %1088 = vmatprep.subr.mxu0 0.0
  %1089 = vmatpush1.xpose.msra.mxu0 0.0
  %1090 = vmatprep.subr.mxu0 0.0
  %1091 = vmatpush1.xpose.msra.mxu0 0.0
  %1092 = vmatprep.subr.mxu0 0.0
  %1093 = vmatpush1.xpose.msra.mxu0 %v1060
  %1094 = vmatprep.subr.mxu0 0.0
  %1095 = vmatpush2.xpose.msra.mxu0 0.0
  %1096 = vmatprep.subr.mxu0 0.0
  %1097 = vmatpush2.xpose.msra.mxu0 0.0
  %1098 = vmatprep.subr.mxu0 0.0
  %1099 = vmatpush2.xpose.msra.mxu0 0.0
  %1100 = vmatprep.subr.mxu0 0.0
  %1101 = vmatpush2.xpose.msra.mxu0 0.0
  %1102 = vmatprep.subr.mxu0 0.0
  %1103 = vmatpush2.xpose.msra.mxu0 0.0
  %1104 = vmatprep.subr.mxu0 0.0
  %1105 = vmatpush2.xpose.msra.mxu0 0.0
  %1106 = vmatprep.subr.mxu0 0.0
  %1107 = vmatpush2.xpose.msra.mxu0 0.0
  %1108 = vmatprep.subr.mxu0 0.0
  %1109 = vmatpush2.xpose.msra.mxu0 0.0
  %1110 = vmatprep.subr.mxu0 0.0
  %1111 = vmatpush2.xpose.msra.mxu0 0.0
  %1112 = vmatprep.subr.mxu0 0.0
  %1113 = vmatpush2.xpose.msra.mxu0 0.0
  %1114 = vmatprep.subr.mxu0 0.0
  %1115 = vmatpush2.xpose.msra.mxu0 0.0
  %1116 = vmatprep.subr.mxu0 0.0
  %1117 = vmatpush2.xpose.msra.mxu0 0.0
  %1118 = vmatprep.subr.mxu0 0.0
  %1119 = vmatpush2.xpose.msra.mxu0 0.0
  %1120 = vmatprep.subr.mxu0 0.0
  %1121 = vmatpush2.xpose.msra.mxu0 0.0
  %1122 = vmatprep.subr.mxu0 0.0
  %1123 = vmatpush2.xpose.msra.mxu0 0.0
  %1124 = vmatprep.subr.mxu0 0.0
  %1125 = vmatpush2.xpose.msra.mxu0 0.0
  %1126 = vmatprep.mubr.f32.mxu0 0.0
  %1127 = vmatmul.mubr.f32.gmra.mxu0 %v1058
  %v1128 = vpop.f32.mrf.mxu0
  %v1129 = vadd.f32 0.0, %v1128
  %v1130 = vpop.f32.mrf.mxu0
  %1131 = vdwg.mxu0
  %v1132 = vsel %vm156, %v1051, -inf
  %1133 = vmax.xlane.f32.xlu0 %v1132
  %v1134 = vpop.xlane.xlu0 %1133
  %v1135 = vsel %vm156, %v1129, -inf
  %1136 = vmax.xlane.f32.xlu0 %v1135
  %v1137 = vpop.xlane.xlu0 %1136
  %v1138 = vsub.f32 %v1051, %v1134
  %v1139 = vsub.f32 %v1129, %v1137
  %v1140 = vmul.f32 %v1138, 1.442695
  %v1141 = vpow.pop %v1140
  %v1142 = vmul.f32 %v1139, 1.442695
  %v1143 = vpow.pop %v1142
  %v1144 = vsel %vm156, %v1141, 0.0
  %1145 = vadd.xlane.f32.xlu0 %v1144
  %v1146 = vpop.xlane.xlu0 %1145
  %v1147 = vsel %vm156, %v1143, 0.0
  %1148 = vadd.xlane.f32.xlu0 %v1147
  %v1149 = vpop.xlane.xlu0 %1148
  %v1150 = vrcp.pop %v1146
  %v1151 = vrcp.pop %v1149
  %v1152 = vmul.f32 %v1141, %v1150
  %v1153 = vmul.f32 %v1143, %v1151
  %1154 = vrot.lane.b32.xlu0 %v139, 48
  %v1155 = vpop.permute.xlu0 %1154
  %v1158 = vsel %vm156, %v1152, 0
  %1160 = vmatprep.subr.mxu0 0.0
  %1161 = vmatpush1.msra.mxu0 0.0
  %1162 = vmatprep.subr.mxu0 0.0
  %1163 = vmatpush1.msra.mxu0 0.0
  %1164 = vmatprep.subr.mxu0 0.0
  %1165 = vmatpush1.msra.mxu0 0.0
  %1166 = vmatprep.subr.mxu0 0.0
  %1167 = vmatpush1.msra.mxu0 0.0
  %1168 = vmatprep.subr.mxu0 0.0
  %1169 = vmatpush1.msra.mxu0 0.0
  %1170 = vmatprep.subr.mxu0 0.0
  %1171 = vmatpush1.msra.mxu0 0.0
  %1172 = vmatprep.subr.mxu0 0.0
  %1173 = vmatpush1.msra.mxu0 0.0
  %1174 = vmatprep.subr.mxu0 0.0
  %1175 = vmatpush1.msra.mxu0 0.0
  %1176 = vmatprep.subr.mxu0 0.0
  %1177 = vmatpush1.msra.mxu0 0.0
  %1178 = vmatprep.subr.mxu0 0.0
  %1179 = vmatpush1.msra.mxu0 0.0
  %1180 = vmatprep.subr.mxu0 0.0
  %1181 = vmatpush1.msra.mxu0 0.0
  %1182 = vmatprep.subr.mxu0 0.0
  %1183 = vmatpush1.msra.mxu0 0.0
  %1184 = vmatprep.subr.mxu0 0.0
  %1185 = vmatpush1.msra.mxu0 0.0
  %1186 = vmatprep.subr.mxu0 0.0
  %1187 = vmatpush1.msra.mxu0 0.0
  %1188 = vmatprep.subr.mxu0 0.0
  %1189 = vmatpush1.msra.mxu0 0.0
  %1190 = vmatprep.subr.mxu0 0.0
  %1191 = vmatpush1.msra.mxu0 %v1155
  %1192 = vmatprep.subr.mxu0 0.0
  %1193 = vmatpush2.msra.mxu0 0.0
  %1194 = vmatprep.subr.mxu0 0.0
  %1195 = vmatpush2.msra.mxu0 0.0
  %1196 = vmatprep.subr.mxu0 0.0
  %1197 = vmatpush2.msra.mxu0 0.0
  %1198 = vmatprep.subr.mxu0 0.0
  %1199 = vmatpush2.msra.mxu0 0.0
  %1200 = vmatprep.subr.mxu0 0.0
  %1201 = vmatpush2.msra.mxu0 0.0
  %1202 = vmatprep.subr.mxu0 0.0
  %1203 = vmatpush2.msra.mxu0 0.0
  %1204 = vmatprep.subr.mxu0 0.0
  %1205 = vmatpush2.msra.mxu0 0.0
  %1206 = vmatprep.subr.mxu0 0.0
  %1207 = vmatpush2.msra.mxu0 0.0
  %1208 = vmatprep.subr.mxu0 0.0
  %1209 = vmatpush2.msra.mxu0 0.0
  %1210 = vmatprep.subr.mxu0 0.0
  %1211 = vmatpush2.msra.mxu0 0.0
  %1212 = vmatprep.subr.mxu0 0.0
  %1213 = vmatpush2.msra.mxu0 0.0
  %1214 = vmatprep.subr.mxu0 0.0
  %1215 = vmatpush2.msra.mxu0 0.0
  %1216 = vmatprep.subr.mxu0 0.0
  %1217 = vmatpush2.msra.mxu0 0.0
  %1218 = vmatprep.subr.mxu0 0.0
  %1219 = vmatpush2.msra.mxu0 0.0
  %1220 = vmatprep.subr.mxu0 0.0
  %1221 = vmatpush2.msra.mxu0 0.0
  %1222 = vmatprep.subr.mxu0 0.0
  %1223 = vmatpush2.msra.mxu0 0.0
  %1224 = vmatprep.mubr.f32.mxu0 0.0
  %1225 = vmatmul.mubr.f32.gmra.mxu0 %v1158
  %v1226 = vpop.f32.mrf.mxu0
  %v1227 = vadd.f32 0.0, %v1226
  %v1228 = vpop.f32.mrf.mxu0
  %1229 = vdwg.mxu0
  %1230 = vrot.lane.b32.xlu0 %v144, 48
  %v1231 = vpop.permute.xlu0 %1230
  %v1234 = vsel %vm156, %v1153, 0
  %1236 = vmatprep.subr.mxu0 0.0
  %1237 = vmatpush1.msra.mxu0 0.0
  %1238 = vmatprep.subr.mxu0 0.0
  %1239 = vmatpush1.msra.mxu0 0.0
  %1240 = vmatprep.subr.mxu0 0.0
  %1241 = vmatpush1.msra.mxu0 0.0
  %1242 = vmatprep.subr.mxu0 0.0
  %1243 = vmatpush1.msra.mxu0 0.0
  %1244 = vmatprep.subr.mxu0 0.0
  %1245 = vmatpush1.msra.mxu0 0.0
  %1246 = vmatprep.subr.mxu0 0.0
  %1247 = vmatpush1.msra.mxu0 0.0
  %1248 = vmatprep.subr.mxu0 0.0
  %1249 = vmatpush1.msra.mxu0 0.0
  %1250 = vmatprep.subr.mxu0 0.0
  %1251 = vmatpush1.msra.mxu0 0.0
  %1252 = vmatprep.subr.mxu0 0.0
  %1253 = vmatpush1.msra.mxu0 0.0
  %1254 = vmatprep.subr.mxu0 0.0
  %1255 = vmatpush1.msra.mxu0 0.0
  %1256 = vmatprep.subr.mxu0 0.0
  %1257 = vmatpush1.msra.mxu0 0.0
  %1258 = vmatprep.subr.mxu0 0.0
  %1259 = vmatpush1.msra.mxu0 0.0
  %1260 = vmatprep.subr.mxu0 0.0
  %1261 = vmatpush1.msra.mxu0 0.0
  %1262 = vmatprep.subr.mxu0 0.0
  %1263 = vmatpush1.msra.mxu0 0.0
  %1264 = vmatprep.subr.mxu0 0.0
  %1265 = vmatpush1.msra.mxu0 0.0
  %1266 = vmatprep.subr.mxu0 0.0
  %1267 = vmatpush1.msra.mxu0 %v1231
  %1268 = vmatprep.subr.mxu0 0.0
  %1269 = vmatpush2.msra.mxu0 0.0
  %1270 = vmatprep.subr.mxu0 0.0
  %1271 = vmatpush2.msra.mxu0 0.0
  %1272 = vmatprep.subr.mxu0 0.0
  %1273 = vmatpush2.msra.mxu0 0.0
  %1274 = vmatprep.subr.mxu0 0.0
  %1275 = vmatpush2.msra.mxu0 0.0
  %1276 = vmatprep.subr.mxu0 0.0
  %1277 = vmatpush2.msra.mxu0 0.0
  %1278 = vmatprep.subr.mxu0 0.0
  %1279 = vmatpush2.msra.mxu0 0.0
  %1280 = vmatprep.subr.mxu0 0.0
  %1281 = vmatpush2.msra.mxu0 0.0
  %1282 = vmatprep.subr.mxu0 0.0
  %1283 = vmatpush2.msra.mxu0 0.0
  %1284 = vmatprep.subr.mxu0 0.0
  %1285 = vmatpush2.msra.mxu0 0.0
  %1286 = vmatprep.subr.mxu0 0.0
  %1287 = vmatpush2.msra.mxu0 0.0
  %1288 = vmatprep.subr.mxu0 0.0
  %1289 = vmatpush2.msra.mxu0 0.0
  %1290 = vmatprep.subr.mxu0 0.0
  %1291 = vmatpush2.msra.mxu0 0.0
  %1292 = vmatprep.subr.mxu0 0.0
  %1293 = vmatpush2.msra.mxu0 0.0
  %1294 = vmatprep.subr.mxu0 0.0
  %1295 = vmatpush2.msra.mxu0 0.0
  %1296 = vmatprep.subr.mxu0 0.0
  %1297 = vmatpush2.msra.mxu0 0.0
  %1298 = vmatprep.subr.mxu0 0.0
  %1299 = vmatpush2.msra.mxu0 0.0
  %1300 = vmatprep.mubr.f32.mxu0 0.0
  %1301 = vmatmul.mubr.f32.gmra.mxu0 %v1234
  %v1302 = vpop.f32.mrf.mxu0
  %v1303 = vadd.f32 0.0, %v1302
  %v1304 = vpop.f32.mrf.mxu0
  %1305 = vdwg.mxu0
  %v1307 = vsel %vm156, %v1227, 0
  %v1310 = vsel %vm156, %v1303, 0
  %1312 = vmatprep.subr.mxu0 0.0
  %1313 = vmatpush1.msra.mxu0 0.0
  %1314 = vmatprep.subr.mxu0 0.0
  %1315 = vmatpush1.msra.mxu0 0.0
  %1316 = vmatprep.subr.mxu0 0.0
  %1317 = vmatpush1.msra.mxu0 0.0
  %1318 = vmatprep.subr.mxu0 0.0
  %1319 = vmatpush1.msra.mxu0 0.0
  %1320 = vmatprep.subr.mxu0 0.0
  %1321 = vmatpush1.msra.mxu0 0.0
  %1322 = vmatprep.subr.mxu0 0.0
  %1323 = vmatpush1.msra.mxu0 0.0
  %1324 = vmatprep.subr.mxu0 0.0
  %1325 = vmatpush1.msra.mxu0 0.0
  %1326 = vmatprep.subr.mxu0 0.0
  %1327 = vmatpush1.msra.mxu0 0.0
  %1328 = vmatprep.subr.mxu0 0.0
  %1329 = vmatpush1.msra.mxu0 0.0
  %1330 = vmatprep.subr.mxu0 0.0
  %1331 = vmatpush1.msra.mxu0 0.0
  %1332 = vmatprep.subr.mxu0 0.0
  %1333 = vmatpush1.msra.mxu0 0.0
  %1334 = vmatprep.subr.mxu0 0.0
  %1335 = vmatpush1.msra.mxu0 0.0
  %1336 = vmatprep.subr.mxu0 0.0
  %1337 = vmatpush1.msra.mxu0 0.0
  %1338 = vmatprep.subr.mxu0 0.0
  %1339 = vmatpush1.msra.mxu0 0.0
  %1340 = vmatprep.subr.mxu0 0.0
  %1341 = vmatpush1.msra.mxu0 0.0
  %1342 = vmatprep.subr.mxu0 0.0
  %1343 = vmatpush1.msra.mxu0 %v149
  %1344 = vmatprep.subr.mxu0 0.0
  %1345 = vmatpush2.msra.mxu0 0.0
  %1346 = vmatprep.subr.mxu0 0.0
  %1347 = vmatpush2.msra.mxu0 0.0
  %1348 = vmatprep.subr.mxu0 0.0
  %1349 = vmatpush2.msra.mxu0 0.0
  %1350 = vmatprep.subr.mxu0 0.0
  %1351 = vmatpush2.msra.mxu0 0.0
  %1352 = vmatprep.subr.mxu0 0.0
  %1353 = vmatpush2.msra.mxu0 0.0
  %1354 = vmatprep.subr.mxu0 0.0
  %1355 = vmatpush2.msra.mxu0 0.0
  %1356 = vmatprep.subr.mxu0 0.0
  %1357 = vmatpush2.msra.mxu0 0.0
  %1358 = vmatprep.subr.mxu0 0.0
  %1359 = vmatpush2.msra.mxu0 0.0
  %1360 = vmatprep.subr.mxu0 0.0
  %1361 = vmatpush2.msra.mxu0 0.0
  %1362 = vmatprep.subr.mxu0 0.0
  %1363 = vmatpush2.msra.mxu0 0.0
  %1364 = vmatprep.subr.mxu0 0.0
  %1365 = vmatpush2.msra.mxu0 0.0
  %1366 = vmatprep.subr.mxu0 0.0
  %1367 = vmatpush2.msra.mxu0 0.0
  %1368 = vmatprep.subr.mxu0 0.0
  %1369 = vmatpush2.msra.mxu0 0.0
  %1370 = vmatprep.subr.mxu0 0.0
  %1371 = vmatpush2.msra.mxu0 0.0
  %1372 = vmatprep.subr.mxu0 0.0
  %1373 = vmatpush2.msra.mxu0 0.0
  %1374 = vmatprep.subr.mxu0 0.0
  %1375 = vmatpush2.msra.mxu0 0.0
  %1376 = vmatprep.mubr.f32.mxu0 0.0
  %1377 = vmatmul.mubr.f32.gmra.mxu0 %v1307
  %v1378 = vpop.f32.mrf.mxu0
  %v1379 = vadd.f32 0.0, %v1378
  %v1380 = vpop.f32.mrf.mxu0
  %1381 = vmatprep.mubr.f32.mxu0 0.0
  %1382 = vmatmul.mubr.f32.gmra.mxu0 %v1310
  %v1383 = vpop.f32.mrf.mxu0
  %v1384 = vadd.f32 0.0, %v1383
  %v1385 = vpop.f32.mrf.mxu0
  %1386 = vdwg.mxu0
  %v1387 = vadd.f32 %v968, %v1379
  %v1388 = vadd.f32 %v973, %v1384
  %1389 = vrot.lane.b32.xlu0 %v151, 104
  %v1390 = vpop.permute.xlu0 %1389
  %1391 = vrot.lane.b32.xlu0 %v139, 72
  %v1392 = vpop.permute.xlu0 %1391
  %v1393 = vsel %vm156, %v1390, 0
  %v1395 = vsel %vm156, %v1392, 0
  %1397 = vmatprep.subr.mxu0 0.0
  %1398 = vmatpush1.xpose.msra.mxu0 0.0
  %1399 = vmatprep.subr.mxu0 0.0
  %1400 = vmatpush1.xpose.msra.mxu0 0.0
  %1401 = vmatprep.subr.mxu0 0.0
  %1402 = vmatpush1.xpose.msra.mxu0 0.0
  %1403 = vmatprep.subr.mxu0 0.0
  %1404 = vmatpush1.xpose.msra.mxu0 0.0
  %1405 = vmatprep.subr.mxu0 0.0
  %1406 = vmatpush1.xpose.msra.mxu0 0.0
  %1407 = vmatprep.subr.mxu0 0.0
  %1408 = vmatpush1.xpose.msra.mxu0 0.0
  %1409 = vmatprep.subr.mxu0 0.0
  %1410 = vmatpush1.xpose.msra.mxu0 0.0
  %1411 = vmatprep.subr.mxu0 0.0
  %1412 = vmatpush1.xpose.msra.mxu0 0.0
  %1413 = vmatprep.subr.mxu0 0.0
  %1414 = vmatpush1.xpose.msra.mxu0 0.0
  %1415 = vmatprep.subr.mxu0 0.0
  %1416 = vmatpush1.xpose.msra.mxu0 0.0
  %1417 = vmatprep.subr.mxu0 0.0
  %1418 = vmatpush1.xpose.msra.mxu0 0.0
  %1419 = vmatprep.subr.mxu0 0.0
  %1420 = vmatpush1.xpose.msra.mxu0 0.0
  %1421 = vmatprep.subr.mxu0 0.0
  %1422 = vmatpush1.xpose.msra.mxu0 0.0
  %1423 = vmatprep.subr.mxu0 0.0
  %1424 = vmatpush1.xpose.msra.mxu0 0.0
  %1425 = vmatprep.subr.mxu0 0.0
  %1426 = vmatpush1.xpose.msra.mxu0 0.0
  %1427 = vmatprep.subr.mxu0 0.0
  %1428 = vmatpush1.xpose.msra.mxu0 %v1395
  %1429 = vmatprep.subr.mxu0 0.0
  %1430 = vmatpush2.xpose.msra.mxu0 0.0
  %1431 = vmatprep.subr.mxu0 0.0
  %1432 = vmatpush2.xpose.msra.mxu0 0.0
  %1433 = vmatprep.subr.mxu0 0.0
  %1434 = vmatpush2.xpose.msra.mxu0 0.0
  %1435 = vmatprep.subr.mxu0 0.0
  %1436 = vmatpush2.xpose.msra.mxu0 0.0
  %1437 = vmatprep.subr.mxu0 0.0
  %1438 = vmatpush2.xpose.msra.mxu0 0.0
  %1439 = vmatprep.subr.mxu0 0.0
  %1440 = vmatpush2.xpose.msra.mxu0 0.0
  %1441 = vmatprep.subr.mxu0 0.0
  %1442 = vmatpush2.xpose.msra.mxu0 0.0
  %1443 = vmatprep.subr.mxu0 0.0
  %1444 = vmatpush2.xpose.msra.mxu0 0.0
  %1445 = vmatprep.subr.mxu0 0.0
  %1446 = vmatpush2.xpose.msra.mxu0 0.0
  %1447 = vmatprep.subr.mxu0 0.0
  %1448 = vmatpush2.xpose.msra.mxu0 0.0
  %1449 = vmatprep.subr.mxu0 0.0
  %1450 = vmatpush2.xpose.msra.mxu0 0.0
  %1451 = vmatprep.subr.mxu0 0.0
  %1452 = vmatpush2.xpose.msra.mxu0 0.0
  %1453 = vmatprep.subr.mxu0 0.0
  %1454 = vmatpush2.xpose.msra.mxu0 0.0
  %1455 = vmatprep.subr.mxu0 0.0
  %1456 = vmatpush2.xpose.msra.mxu0 0.0
  %1457 = vmatprep.subr.mxu0 0.0
  %1458 = vmatpush2.xpose.msra.mxu0 0.0
  %1459 = vmatprep.subr.mxu0 0.0
  %1460 = vmatpush2.xpose.msra.mxu0 0.0
  %1461 = vmatprep.mubr.f32.mxu0 0.0
  %1462 = vmatmul.mubr.f32.gmra.mxu0 %v1393
  %v1463 = vpop.f32.mrf.mxu0
  %v1464 = vadd.f32 0.0, %v1463
  %v1465 = vpop.f32.mrf.mxu0
  %1466 = vdwg.mxu0
  %1467 = vrot.lane.b32.xlu0 %v152, 104
  %v1468 = vpop.permute.xlu0 %1467
  %1469 = vrot.lane.b32.xlu0 %v144, 72
  %v1470 = vpop.permute.xlu0 %1469
  %v1471 = vsel %vm156, %v1468, 0
  %v1473 = vsel %vm156, %v1470, 0
  %1475 = vmatprep.subr.mxu0 0.0
  %1476 = vmatpush1.xpose.msra.mxu0 0.0
  %1477 = vmatprep.subr.mxu0 0.0
  %1478 = vmatpush1.xpose.msra.mxu0 0.0
  %1479 = vmatprep.subr.mxu0 0.0
  %1480 = vmatpush1.xpose.msra.mxu0 0.0
  %1481 = vmatprep.subr.mxu0 0.0
  %1482 = vmatpush1.xpose.msra.mxu0 0.0
  %1483 = vmatprep.subr.mxu0 0.0
  %1484 = vmatpush1.xpose.msra.mxu0 0.0
  %1485 = vmatprep.subr.mxu0 0.0
  %1486 = vmatpush1.xpose.msra.mxu0 0.0
  %1487 = vmatprep.subr.mxu0 0.0
  %1488 = vmatpush1.xpose.msra.mxu0 0.0
  %1489 = vmatprep.subr.mxu0 0.0
  %1490 = vmatpush1.xpose.msra.mxu0 0.0
  %1491 = vmatprep.subr.mxu0 0.0
  %1492 = vmatpush1.xpose.msra.mxu0 0.0
  %1493 = vmatprep.subr.mxu0 0.0
  %1494 = vmatpush1.xpose.msra.mxu0 0.0
  %1495 = vmatprep.subr.mxu0 0.0
  %1496 = vmatpush1.xpose.msra.mxu0 0.0
  %1497 = vmatprep.subr.mxu0 0.0
  %1498 = vmatpush1.xpose.msra.mxu0 0.0
  %1499 = vmatprep.subr.mxu0 0.0
  %1500 = vmatpush1.xpose.msra.mxu0 0.0
  %1501 = vmatprep.subr.mxu0 0.0
  %1502 = vmatpush1.xpose.msra.mxu0 0.0
  %1503 = vmatprep.subr.mxu0 0.0
  %1504 = vmatpush1.xpose.msra.mxu0 0.0
  %1505 = vmatprep.subr.mxu0 0.0
  %1506 = vmatpush1.xpose.msra.mxu0 %v1473
  %1507 = vmatprep.subr.mxu0 0.0
  %1508 = vmatpush2.xpose.msra.mxu0 0.0
  %1509 = vmatprep.subr.mxu0 0.0
  %1510 = vmatpush2.xpose.msra.mxu0 0.0
  %1511 = vmatprep.subr.mxu0 0.0
  %1512 = vmatpush2.xpose.msra.mxu0 0.0
  %1513 = vmatprep.subr.mxu0 0.0
  %1514 = vmatpush2.xpose.msra.mxu0 0.0
  %1515 = vmatprep.subr.mxu0 0.0
  %1516 = vmatpush2.xpose.msra.mxu0 0.0
  %1517 = vmatprep.subr.mxu0 0.0
  %1518 = vmatpush2.xpose.msra.mxu0 0.0
  %1519 = vmatprep.subr.mxu0 0.0
  %1520 = vmatpush2.xpose.msra.mxu0 0.0
  %1521 = vmatprep.subr.mxu0 0.0
  %1522 = vmatpush2.xpose.msra.mxu0 0.0
  %1523 = vmatprep.subr.mxu0 0.0
  %1524 = vmatpush2.xpose.msra.mxu0 0.0
  %1525 = vmatprep.subr.mxu0 0.0
  %1526 = vmatpush2.xpose.msra.mxu0 0.0
  %1527 = vmatprep.subr.mxu0 0.0
  %1528 = vmatpush2.xpose.msra.mxu0 0.0
  %1529 = vmatprep.subr.mxu0 0.0
  %1530 = vmatpush2.xpose.msra.mxu0 0.0
  %1531 = vmatprep.subr.mxu0 0.0
  %1532 = vmatpush2.xpose.msra.mxu0 0.0
  %1533 = vmatprep.subr.mxu0 0.0
  %1534 = vmatpush2.xpose.msra.mxu0 0.0
  %1535 = vmatprep.subr.mxu0 0.0
  %1536 = vmatpush2.xpose.msra.mxu0 0.0
  %1537 = vmatprep.subr.mxu0 0.0
  %1538 = vmatpush2.xpose.msra.mxu0 0.0
  %1539 = vmatprep.mubr.f32.mxu0 0.0
  %1540 = vmatmul.mubr.f32.gmra.mxu0 %v1471
  %v1541 = vpop.f32.mrf.mxu0
  %v1542 = vadd.f32 0.0, %v1541
  %v1543 = vpop.f32.mrf.mxu0
  %1544 = vdwg.mxu0
  %v1545 = vsel %vm156, %v1464, -inf
  %1546 = vmax.xlane.f32.xlu0 %v1545
  %v1547 = vpop.xlane.xlu0 %1546
  %v1548 = vsel %vm156, %v1542, -inf
  %1549 = vmax.xlane.f32.xlu0 %v1548
  %v1550 = vpop.xlane.xlu0 %1549
  %v1551 = vsub.f32 %v1464, %v1547
  %v1552 = vsub.f32 %v1542, %v1550
  %v1553 = vmul.f32 %v1551, 1.442695
  %v1554 = vpow.pop %v1553
  %v1555 = vmul.f32 %v1552, 1.442695
  %v1556 = vpow.pop %v1555
  %v1557 = vsel %vm156, %v1554, 0.0
  %1558 = vadd.xlane.f32.xlu0 %v1557
  %v1559 = vpop.xlane.xlu0 %1558
  %v1560 = vsel %vm156, %v1556, 0.0
  %1561 = vadd.xlane.f32.xlu0 %v1560
  %v1562 = vpop.xlane.xlu0 %1561
  %v1563 = vrcp.pop %v1559
  %v1564 = vrcp.pop %v1562
  %v1565 = vmul.f32 %v1554, %v1563
  %v1566 = vmul.f32 %v1556, %v1564
  %1567 = vrot.lane.b32.xlu0 %v139, 40
  %v1568 = vpop.permute.xlu0 %1567
  %v1571 = vsel %vm156, %v1565, 0
  %1573 = vmatprep.subr.mxu0 0.0
  %1574 = vmatpush1.msra.mxu0 0.0
  %1575 = vmatprep.subr.mxu0 0.0
  %1576 = vmatpush1.msra.mxu0 0.0
  %1577 = vmatprep.subr.mxu0 0.0
  %1578 = vmatpush1.msra.mxu0 0.0
  %1579 = vmatprep.subr.mxu0 0.0
  %1580 = vmatpush1.msra.mxu0 0.0
  %1581 = vmatprep.subr.mxu0 0.0
  %1582 = vmatpush1.msra.mxu0 0.0
  %1583 = vmatprep.subr.mxu0 0.0
  %1584 = vmatpush1.msra.mxu0 0.0
  %1585 = vmatprep.subr.mxu0 0.0
  %1586 = vmatpush1.msra.mxu0 0.0
  %1587 = vmatprep.subr.mxu0 0.0
  %1588 = vmatpush1.msra.mxu0 0.0
  %1589 = vmatprep.subr.mxu0 0.0
  %1590 = vmatpush1.msra.mxu0 0.0
  %1591 = vmatprep.subr.mxu0 0.0
  %1592 = vmatpush1.msra.mxu0 0.0
  %1593 = vmatprep.subr.mxu0 0.0
  %1594 = vmatpush1.msra.mxu0 0.0
  %1595 = vmatprep.subr.mxu0 0.0
  %1596 = vmatpush1.msra.mxu0 0.0
  %1597 = vmatprep.subr.mxu0 0.0
  %1598 = vmatpush1.msra.mxu0 0.0
  %1599 = vmatprep.subr.mxu0 0.0
  %1600 = vmatpush1.msra.mxu0 0.0
  %1601 = vmatprep.subr.mxu0 0.0
  %1602 = vmatpush1.msra.mxu0 0.0
  %1603 = vmatprep.subr.mxu0 0.0
  %1604 = vmatpush1.msra.mxu0 %v1568
  %1605 = vmatprep.subr.mxu0 0.0
  %1606 = vmatpush2.msra.mxu0 0.0
  %1607 = vmatprep.subr.mxu0 0.0
  %1608 = vmatpush2.msra.mxu0 0.0
  %1609 = vmatprep.subr.mxu0 0.0
  %1610 = vmatpush2.msra.mxu0 0.0
  %1611 = vmatprep.subr.mxu0 0.0
  %1612 = vmatpush2.msra.mxu0 0.0
  %1613 = vmatprep.subr.mxu0 0.0
  %1614 = vmatpush2.msra.mxu0 0.0
  %1615 = vmatprep.subr.mxu0 0.0
  %1616 = vmatpush2.msra.mxu0 0.0
  %1617 = vmatprep.subr.mxu0 0.0
  %1618 = vmatpush2.msra.mxu0 0.0
  %1619 = vmatprep.subr.mxu0 0.0
  %1620 = vmatpush2.msra.mxu0 0.0
  %1621 = vmatprep.subr.mxu0 0.0
  %1622 = vmatpush2.msra.mxu0 0.0
  %1623 = vmatprep.subr.mxu0 0.0
  %1624 = vmatpush2.msra.mxu0 0.0
  %1625 = vmatprep.subr.mxu0 0.0
  %1626 = vmatpush2.msra.mxu0 0.0
  %1627 = vmatprep.subr.mxu0 0.0
  %1628 = vmatpush2.msra.mxu0 0.0
  %1629 = vmatprep.subr.mxu0 0.0
  %1630 = vmatpush2.msra.mxu0 0.0
  %1631 = vmatprep.subr.mxu0 0.0
  %1632 = vmatpush2.msra.mxu0 0.0
  %1633 = vmatprep.subr.mxu0 0.0
  %1634 = vmatpush2.msra.mxu0 0.0
  %1635 = vmatprep.subr.mxu0 0.0
  %1636 = vmatpush2.msra.mxu0 0.0
  %1637 = vmatprep.mubr.f32.mxu0 0.0
  %1638 = vmatmul.mubr.f32.gmra.mxu0 %v1571
  %v1639 = vpop.f32.mrf.mxu0
  %v1640 = vadd.f32 0.0, %v1639
  %v1641 = vpop.f32.mrf.mxu0
  %1642 = vdwg.mxu0
  %1643 = vrot.lane.b32.xlu0 %v144, 40
  %v1644 = vpop.permute.xlu0 %1643
  %v1647 = vsel %vm156, %v1566, 0
  %1649 = vmatprep.subr.mxu0 0.0
  %1650 = vmatpush1.msra.mxu0 0.0
  %1651 = vmatprep.subr.mxu0 0.0
  %1652 = vmatpush1.msra.mxu0 0.0
  %1653 = vmatprep.subr.mxu0 0.0
  %1654 = vmatpush1.msra.mxu0 0.0
  %1655 = vmatprep.subr.mxu0 0.0
  %1656 = vmatpush1.msra.mxu0 0.0
  %1657 = vmatprep.subr.mxu0 0.0
  %1658 = vmatpush1.msra.mxu0 0.0
  %1659 = vmatprep.subr.mxu0 0.0
  %1660 = vmatpush1.msra.mxu0 0.0
  %1661 = vmatprep.subr.mxu0 0.0
  %1662 = vmatpush1.msra.mxu0 0.0
  %1663 = vmatprep.subr.mxu0 0.0
  %1664 = vmatpush1.msra.mxu0 0.0
  %1665 = vmatprep.subr.mxu0 0.0
  %1666 = vmatpush1.msra.mxu0 0.0
  %1667 = vmatprep.subr.mxu0 0.0
  %1668 = vmatpush1.msra.mxu0 0.0
  %1669 = vmatprep.subr.mxu0 0.0
  %1670 = vmatpush1.msra.mxu0 0.0
  %1671 = vmatprep.subr.mxu0 0.0
  %1672 = vmatpush1.msra.mxu0 0.0
  %1673 = vmatprep.subr.mxu0 0.0
  %1674 = vmatpush1.msra.mxu0 0.0
  %1675 = vmatprep.subr.mxu0 0.0
  %1676 = vmatpush1.msra.mxu0 0.0
  %1677 = vmatprep.subr.mxu0 0.0
  %1678 = vmatpush1.msra.mxu0 0.0
  %1679 = vmatprep.subr.mxu0 0.0
  %1680 = vmatpush1.msra.mxu0 %v1644
  %1681 = vmatprep.subr.mxu0 0.0
  %1682 = vmatpush2.msra.mxu0 0.0
  %1683 = vmatprep.subr.mxu0 0.0
  %1684 = vmatpush2.msra.mxu0 0.0
  %1685 = vmatprep.subr.mxu0 0.0
  %1686 = vmatpush2.msra.mxu0 0.0
  %1687 = vmatprep.subr.mxu0 0.0
  %1688 = vmatpush2.msra.mxu0 0.0
  %1689 = vmatprep.subr.mxu0 0.0
  %1690 = vmatpush2.msra.mxu0 0.0
  %1691 = vmatprep.subr.mxu0 0.0
  %1692 = vmatpush2.msra.mxu0 0.0
  %1693 = vmatprep.subr.mxu0 0.0
  %1694 = vmatpush2.msra.mxu0 0.0
  %1695 = vmatprep.subr.mxu0 0.0
  %1696 = vmatpush2.msra.mxu0 0.0
  %1697 = vmatprep.subr.mxu0 0.0
  %1698 = vmatpush2.msra.mxu0 0.0
  %1699 = vmatprep.subr.mxu0 0.0
  %1700 = vmatpush2.msra.mxu0 0.0
  %1701 = vmatprep.subr.mxu0 0.0
  %1702 = vmatpush2.msra.mxu0 0.0
  %1703 = vmatprep.subr.mxu0 0.0
  %1704 = vmatpush2.msra.mxu0 0.0
  %1705 = vmatprep.subr.mxu0 0.0
  %1706 = vmatpush2.msra.mxu0 0.0
  %1707 = vmatprep.subr.mxu0 0.0
  %1708 = vmatpush2.msra.mxu0 0.0
  %1709 = vmatprep.subr.mxu0 0.0
  %1710 = vmatpush2.msra.mxu0 0.0
  %1711 = vmatprep.subr.mxu0 0.0
  %1712 = vmatpush2.msra.mxu0 0.0
  %1713 = vmatprep.mubr.f32.mxu0 0.0
  %1714 = vmatmul.mubr.f32.gmra.mxu0 %v1647
  %v1715 = vpop.f32.mrf.mxu0
  %v1716 = vadd.f32 0.0, %v1715
  %v1717 = vpop.f32.mrf.mxu0
  %1718 = vdwg.mxu0
  %v1720 = vsel %vm156, %v1640, 0
  %v1723 = vsel %vm156, %v1716, 0
  %1725 = vmatprep.subr.mxu0 0.0
  %1726 = vmatpush1.msra.mxu0 0.0
  %1727 = vmatprep.subr.mxu0 0.0
  %1728 = vmatpush1.msra.mxu0 0.0
  %1729 = vmatprep.subr.mxu0 0.0
  %1730 = vmatpush1.msra.mxu0 0.0
  %1731 = vmatprep.subr.mxu0 0.0
  %1732 = vmatpush1.msra.mxu0 0.0
  %1733 = vmatprep.subr.mxu0 0.0
  %1734 = vmatpush1.msra.mxu0 0.0
  %1735 = vmatprep.subr.mxu0 0.0
  %1736 = vmatpush1.msra.mxu0 0.0
  %1737 = vmatprep.subr.mxu0 0.0
  %1738 = vmatpush1.msra.mxu0 0.0
  %1739 = vmatprep.subr.mxu0 0.0
  %1740 = vmatpush1.msra.mxu0 0.0
  %1741 = vmatprep.subr.mxu0 0.0
  %1742 = vmatpush1.msra.mxu0 0.0
  %1743 = vmatprep.subr.mxu0 0.0
  %1744 = vmatpush1.msra.mxu0 0.0
  %1745 = vmatprep.subr.mxu0 0.0
  %1746 = vmatpush1.msra.mxu0 0.0
  %1747 = vmatprep.subr.mxu0 0.0
  %1748 = vmatpush1.msra.mxu0 0.0
  %1749 = vmatprep.subr.mxu0 0.0
  %1750 = vmatpush1.msra.mxu0 0.0
  %1751 = vmatprep.subr.mxu0 0.0
  %1752 = vmatpush1.msra.mxu0 0.0
  %1753 = vmatprep.subr.mxu0 0.0
  %1754 = vmatpush1.msra.mxu0 0.0
  %1755 = vmatprep.subr.mxu0 0.0
  %1756 = vmatpush1.msra.mxu0 %v150
  %1757 = vmatprep.subr.mxu0 0.0
  %1758 = vmatpush2.msra.mxu0 0.0
  %1759 = vmatprep.subr.mxu0 0.0
  %1760 = vmatpush2.msra.mxu0 0.0
  %1761 = vmatprep.subr.mxu0 0.0
  %1762 = vmatpush2.msra.mxu0 0.0
  %1763 = vmatprep.subr.mxu0 0.0
  %1764 = vmatpush2.msra.mxu0 0.0
  %1765 = vmatprep.subr.mxu0 0.0
  %1766 = vmatpush2.msra.mxu0 0.0
  %1767 = vmatprep.subr.mxu0 0.0
  %1768 = vmatpush2.msra.mxu0 0.0
  %1769 = vmatprep.subr.mxu0 0.0
  %1770 = vmatpush2.msra.mxu0 0.0
  %1771 = vmatprep.subr.mxu0 0.0
  %1772 = vmatpush2.msra.mxu0 0.0
  %1773 = vmatprep.subr.mxu0 0.0
  %1774 = vmatpush2.msra.mxu0 0.0
  %1775 = vmatprep.subr.mxu0 0.0
  %1776 = vmatpush2.msra.mxu0 0.0
  %1777 = vmatprep.subr.mxu0 0.0
  %1778 = vmatpush2.msra.mxu0 0.0
  %1779 = vmatprep.subr.mxu0 0.0
  %1780 = vmatpush2.msra.mxu0 0.0
  %1781 = vmatprep.subr.mxu0 0.0
  %1782 = vmatpush2.msra.mxu0 0.0
  %1783 = vmatprep.subr.mxu0 0.0
  %1784 = vmatpush2.msra.mxu0 0.0
  %1785 = vmatprep.subr.mxu0 0.0
  %1786 = vmatpush2.msra.mxu0 0.0
  %1787 = vmatprep.subr.mxu0 0.0
  %1788 = vmatpush2.msra.mxu0 0.0
  %1789 = vmatprep.mubr.f32.mxu0 0.0
  %1790 = vmatmul.mubr.f32.gmra.mxu0 %v1720
  %v1791 = vpop.f32.mrf.mxu0
  %v1792 = vadd.f32 0.0, %v1791
  %v1793 = vpop.f32.mrf.mxu0
  %1794 = vmatprep.mubr.f32.mxu0 0.0
  %1795 = vmatmul.mubr.f32.gmra.mxu0 %v1723
  %v1796 = vpop.f32.mrf.mxu0
  %v1797 = vadd.f32 0.0, %v1796
  %v1798 = vpop.f32.mrf.mxu0
  %1799 = vdwg.mxu0
  %v1800 = vadd.f32 %v1387, %v1792
  %v1801 = vadd.f32 %v1388, %v1797
  %v1802 = vld [vmem:[%s4] sm:$0x1]
  %v1804 = vlaneseq
  %v1805 = vshrl.u32 %v1804, 7
  %v1806 = vsub.s32 0, %v1805
  %v1807 = vrot.slane %v1802, %v1806
  %v1809 = vadd.f32 %v1800, %v1807
  %v1810 = vadd.f32 %v1801, %v1807
  %v1811 = vadd.f32 %v52, %v1809
  %v1812 = vadd.f32 %v53, %v1810
  %v1813 = vsel %vm65, %v1811, 0.0
  %1814 = vadd.xlane.f32.xlu0 %v1813
  %v1815 = vpop.xlane.xlu0 %1814
  %v1816 = vsel %vm65, %v1812, 0.0
  %1817 = vadd.xlane.f32.xlu0 %v1816
  %v1818 = vpop.xlane.xlu0 %1817
  %v1819 = vrcp.pop 32.0
  %v1820 = vmul.f32 %v1815, %v1819
  %v1821 = vmul.f32 %v1818, %v1819
  %v1822 = vsub.f32 %v1811, %v1820
  %v1823 = vsub.f32 %v1812, %v1821
  %v1824 = vmul.f32 %v1822, %v1822
  %v1825 = vmul.f32 %v1823, %v1823
  %v1826 = vsel %vm65, %v1824, 0.0
  %1827 = vadd.xlane.f32.xlu0 %v1826
  %v1828 = vpop.xlane.xlu0 %1827
  %v1829 = vsel %vm65, %v1825, 0.0
  %1830 = vadd.xlane.f32.xlu0 %v1829
  %v1831 = vpop.xlane.xlu0 %1830
  %v1832 = vmul.f32 %v1828, %v1819
  %v1833 = vmul.f32 %v1831, %v1819
  %v1834 = vadd.f32 %v1832, 1e-05
  %v1835 = vadd.f32 %v1833, 1e-05
  %v1836 = vrsqrt.pop %v1834
  %v1837 = vrsqrt.pop %v1835
  %v1838 = vmul.f32 %v1822, %v1836
  %v1839 = vmul.f32 %v1823, %v1837
  %v1840 = vld [vmem:[%s5] sm:$0x1]
  %v1842 = vlaneseq
  %v1843 = vshrl.u32 %v1842, 7
  %v1844 = vsub.s32 0, %v1843
  %v1845 = vrot.slane %v1840, %v1844
  %v1847 = vmul.f32 %v1838, %v1845
  %v1848 = vmul.f32 %v1839, %v1845
  %v1849 = vld [vmem:[%s6] sm:$0x1]
  %v1851 = vlaneseq
  %v1852 = vshrl.u32 %v1851, 7
  %v1853 = vsub.s32 0, %v1852
  %v1854 = vrot.slane %v1849, %v1853
  %v1856 = vadd.f32 %v1847, %v1854
  %v1857 = vadd.f32 %v1848, %v1854
  %v1858 = vld [vmem:[%s7] sm:$0xff]
  %v1859 = vld [vmem:[%s7 + $0x8] sm:$0xff]
  %v1860 = vld [vmem:[%s7 + $0x10] sm:$0xff]
  %v1861 = vld [vmem:[%s7 + $0x18] sm:$0xff]
  %v1862 = vld [vmem:[%s8] sm:$0x1]
  %v1864 = vlaneseq
  %v1865 = vshrl.u32 %v1864, 7
  %v1866 = vsub.s32 0, %v1865
  %v1867 = vrot.slane %v1862, %v1866
  %v1870 = vsel %vm65, %v1856, 0
  %v1873 = vsel %vm65, %v1857, 0
  %1875 = vmatprep.subr.mxu0 0.0
  %1876 = vmatpush1.msra.mxu0 0.0
  %1877 = vmatprep.subr.mxu0 0.0
  %1878 = vmatpush1.msra.mxu0 0.0
  %1879 = vmatprep.subr.mxu0 0.0
  %1880 = vmatpush1.msra.mxu0 0.0
  %1881 = vmatprep.subr.mxu0 0.0
  %1882 = vmatpush1.msra.mxu0 0.0
  %1883 = vmatprep.subr.mxu0 0.0
  %1884 = vmatpush1.msra.mxu0 0.0
  %1885 = vmatprep.subr.mxu0 0.0
  %1886 = vmatpush1.msra.mxu0 0.0
  %1887 = vmatprep.subr.mxu0 0.0
  %1888 = vmatpush1.msra.mxu0 0.0
  %1889 = vmatprep.subr.mxu0 0.0
  %1890 = vmatpush1.msra.mxu0 0.0
  %1891 = vmatprep.subr.mxu0 0.0
  %1892 = vmatpush1.msra.mxu0 0.0
  %1893 = vmatprep.subr.mxu0 0.0
  %1894 = vmatpush1.msra.mxu0 0.0
  %1895 = vmatprep.subr.mxu0 0.0
  %1896 = vmatpush1.msra.mxu0 0.0
  %1897 = vmatprep.subr.mxu0 0.0
  %1898 = vmatpush1.msra.mxu0 0.0
  %1899 = vmatprep.subr.mxu0 0.0
  %1900 = vmatpush1.msra.mxu0 %v1861
  %1901 = vmatprep.subr.mxu0 0.0
  %1902 = vmatpush1.msra.mxu0 %v1860
  %1903 = vmatprep.subr.mxu0 0.0
  %1904 = vmatpush1.msra.mxu0 %v1859
  %1905 = vmatprep.subr.mxu0 0.0
  %1906 = vmatpush1.msra.mxu0 %v1858
  %1907 = vmatprep.subr.mxu0 0.0
  %1908 = vmatpush2.msra.mxu0 0.0
  %1909 = vmatprep.subr.mxu0 0.0
  %1910 = vmatpush2.msra.mxu0 0.0
  %1911 = vmatprep.subr.mxu0 0.0
  %1912 = vmatpush2.msra.mxu0 0.0
  %1913 = vmatprep.subr.mxu0 0.0
  %1914 = vmatpush2.msra.mxu0 0.0
  %1915 = vmatprep.subr.mxu0 0.0
  %1916 = vmatpush2.msra.mxu0 0.0
  %1917 = vmatprep.subr.mxu0 0.0
  %1918 = vmatpush2.msra.mxu0 0.0
  %1919 = vmatprep.subr.mxu0 0.0
  %1920 = vmatpush2.msra.mxu0 0.0
  %1921 = vmatprep.subr.mxu0 0.0
  %1922 = vmatpush2.msra.mxu0 0.0
  %1923 = vmatprep.subr.mxu0 0.0
  %1924 = vmatpush2.msra.mxu0 0.0
  %1925 = vmatprep.subr.mxu0 0.0
  %1926 = vmatpush2.msra.mxu0 0.0
  %1927 = vmatprep.subr.mxu0 0.0
  %1928 = vmatpush2.msra.mxu0 0.0
  %1929 = vmatprep.subr.mxu0 0.0
  %1930 = vmatpush2.msra.mxu0 0.0
  %1931 = vmatprep.subr.mxu0 0.0
  %1932 = vmatpush2.msra.mxu0 0.0
  %1933 = vmatprep.subr.mxu0 0.0
  %1934 = vmatpush2.msra.mxu0 0.0
  %1935 = vmatprep.subr.mxu0 0.0
  %1936 = vmatpush2.msra.mxu0 0.0
  %1937 = vmatprep.subr.mxu0 0.0
  %1938 = vmatpush2.msra.mxu0 0.0
  %1939 = vmatprep.mubr.f32.mxu0 0.0
  %1940 = vmatmul.mubr.f32.gmra.mxu0 %v1870
  %v1941 = vpop.f32.mrf.mxu0
  %v1942 = vadd.f32 %v1867, %v1941
  %v1943 = vpop.f32.mrf.mxu0
  %1944 = vmatprep.mubr.f32.mxu0 0.0
  %1945 = vmatmul.mubr.f32.gmra.mxu0 %v1873
  %v1946 = vpop.f32.mrf.mxu0
  %v1947 = vadd.f32 %v1867, %v1946
  %v1948 = vpop.f32.mrf.mxu0
  %1949 = vdwg.mxu0
  %v1950 = vmax.f32 %v1942, 0.0
  %v1951 = vmax.f32 %v1947, 0.0
  %v1952 = vld [vmem:[%s9] sm:$0xff]
  %v1953 = vld [vmem:[%s9 + $0x8] sm:$0xff]
  %v1954 = vld [vmem:[%s9 + $0x10] sm:$0xff]
  %v1955 = vld [vmem:[%s9 + $0x18] sm:$0xff]
  %v1956 = vld [vmem:[%s9 + $0x20] sm:$0xff]
  %v1957 = vld [vmem:[%s9 + $0x28] sm:$0xff]
  %v1958 = vld [vmem:[%s9 + $0x30] sm:$0xff]
  %v1959 = vld [vmem:[%s9 + $0x38] sm:$0xff]
  %v1960 = vld [vmem:[%s10] sm:$0x1]
  %v1962 = vlaneseq
  %v1963 = vshrl.u32 %v1962, 7
  %v1964 = vsub.s32 0, %v1963
  %v1965 = vrot.slane %v1960, %v1964
  %vm1967 = vcmask 523264
  %v1969 = vsel %vm1967, %v1950, 0
  %v1972 = vsel %vm1967, %v1951, 0
  %1974 = vmatprep.subr.mxu0 0.0
  %1975 = vmatpush1.msra.mxu0 0.0
  %1976 = vmatprep.subr.mxu0 0.0
  %1977 = vmatpush1.msra.mxu0 0.0
  %1978 = vmatprep.subr.mxu0 0.0
  %1979 = vmatpush1.msra.mxu0 0.0
  %1980 = vmatprep.subr.mxu0 0.0
  %1981 = vmatpush1.msra.mxu0 0.0
  %1982 = vmatprep.subr.mxu0 0.0
  %1983 = vmatpush1.msra.mxu0 0.0
  %1984 = vmatprep.subr.mxu0 0.0
  %1985 = vmatpush1.msra.mxu0 0.0
  %1986 = vmatprep.subr.mxu0 0.0
  %1987 = vmatpush1.msra.mxu0 0.0
  %1988 = vmatprep.subr.mxu0 0.0
  %1989 = vmatpush1.msra.mxu0 0.0
  %1990 = vmatprep.subr.mxu0 0.0
  %1991 = vmatpush1.msra.mxu0 %v1959
  %1992 = vmatprep.subr.mxu0 0.0
  %1993 = vmatpush1.msra.mxu0 %v1958
  %1994 = vmatprep.subr.mxu0 0.0
  %1995 = vmatpush1.msra.mxu0 %v1957
  %1996 = vmatprep.subr.mxu0 0.0
  %1997 = vmatpush1.msra.mxu0 %v1956
  %1998 = vmatprep.subr.mxu0 0.0
  %1999 = vmatpush1.msra.mxu0 %v1955
  %2000 = vmatprep.subr.mxu0 0.0
  %2001 = vmatpush1.msra.mxu0 %v1954
  %2002 = vmatprep.subr.mxu0 0.0
  %2003 = vmatpush1.msra.mxu0 %v1953
  %2004 = vmatprep.subr.mxu0 0.0
  %2005 = vmatpush1.msra.mxu0 %v1952
  %2006 = vmatprep.subr.mxu0 0.0
  %2007 = vmatpush2.msra.mxu0 0.0
  %2008 = vmatprep.subr.mxu0 0.0
  %2009 = vmatpush2.msra.mxu0 0.0
  %2010 = vmatprep.subr.mxu0 0.0
  %2011 = vmatpush2.msra.mxu0 0.0
  %2012 = vmatprep.subr.mxu0 0.0
  %2013 = vmatpush2.msra.mxu0 0.0
  %2014 = vmatprep.subr.mxu0 0.0
  %2015 = vmatpush2.msra.mxu0 0.0
  %2016 = vmatprep.subr.mxu0 0.0
  %2017 = vmatpush2.msra.mxu0 0.0
  %2018 = vmatprep.subr.mxu0 0.0
  %2019 = vmatpush2.msra.mxu0 0.0
  %2020 = vmatprep.subr.mxu0 0.0
  %2021 = vmatpush2.msra.mxu0 0.0
  %2022 = vmatprep.subr.mxu0 0.0
  %2023 = vmatpush2.msra.mxu0 0.0
  %2024 = vmatprep.subr.mxu0 0.0
  %2025 = vmatpush2.msra.mxu0 0.0
  %2026 = vmatprep.subr.mxu0 0.0
  %2027 = vmatpush2.msra.mxu0 0.0
  %2028 = vmatprep.subr.mxu0 0.0
  %2029 = vmatpush2.msra.mxu0 0.0
  %2030 = vmatprep.subr.mxu0 0.0
  %2031 = vmatpush2.msra.mxu0 0.0
  %2032 = vmatprep.subr.mxu0 0.0
  %2033 = vmatpush2.msra.mxu0 0.0
  %2034 = vmatprep.subr.mxu0 0.0
  %2035 = vmatpush2.msra.mxu0 0.0
  %2036 = vmatprep.subr.mxu0 0.0
  %2037 = vmatpush2.msra.mxu0 0.0
  %2038 = vmatprep.mubr.f32.mxu0 0.0
  %2039 = vmatmul.mubr.f32.gmra.mxu0 %v1969
  %v2040 = vpop.f32.mrf.mxu0
  %v2041 = vadd.f32 %v1965, %v2040
  %v2042 = vpop.f32.mrf.mxu0
  %2043 = vmatprep.mubr.f32.mxu0 0.0
  %2044 = vmatmul.mubr.f32.gmra.mxu0 %v1972
  %v2045 = vpop.f32.mrf.mxu0
  %v2046 = vadd.f32 %v1965, %v2045
  %v2047 = vpop.f32.mrf.mxu0
  %2048 = vdwg.mxu0
  %v2049 = vadd.f32 %v1856, %v2041
  %v2050 = vadd.f32 %v1857, %v2046
  %v2051 = vsel %vm65, %v2049, 0.0
  %2052 = vadd.xlane.f32.xlu0 %v2051
  %v2053 = vpop.xlane.xlu0 %2052
  %v2054 = vsel %vm65, %v2050, 0.0
  %2055 = vadd.xlane.f32.xlu0 %v2054
  %v2056 = vpop.xlane.xlu0 %2055
  %v2057 = vmul.f32 %v2053, %v1819
  %v2058 = vmul.f32 %v2056, %v1819
  %v2059 = vsub.f32 %v2049, %v2057
  %v2060 = vsub.f32 %v2050, %v2058
  %v2061 = vmul.f32 %v2059, %v2059
  %v2062 = vmul.f32 %v2060, %v2060
  %v2063 = vsel %vm65, %v2061, 0.0
  %2064 = vadd.xlane.f32.xlu0 %v2063
  %v2065 = vpop.xlane.xlu0 %2064
  %v2066 = vsel %vm65, %v2062, 0.0
  %2067 = vadd.xlane.f32.xlu0 %v2066
  %v2068 = vpop.xlane.xlu0 %2067
  %v2069 = vmul.f32 %v2065, %v1819
  %v2070 = vmul.f32 %v2068, %v1819
  %v2071 = vadd.f32 %v2069, 1e-05
  %v2072 = vadd.f32 %v2070, 1e-05
  %v2073 = vrsqrt.pop %v2071
  %v2074 = vrsqrt.pop %v2072
  %v2075 = vmul.f32 %v2059, %v2073
  %v2076 = vmul.f32 %v2060, %v2074
  %v2077 = vld [vmem:[%s11] sm:$0x1]
  %v2079 = vlaneseq
  %v2080 = vshrl.u32 %v2079, 7
  %v2081 = vsub.s32 0, %v2080
  %v2082 = vrot.slane %v2077, %v2081
  %v2084 = vmul.f32 %v2075, %v2082
  %v2085 = vmul.f32 %v2076, %v2082
  %v2086 = vld [vmem:[%s12] sm:$0x1]
  %v2088 = vlaneseq
  %v2089 = vshrl.u32 %v2088, 7
  %v2090 = vsub.s32 0, %v2089
  %v2091 = vrot.slane %v2086, %v2090
  %v2093 = vadd.f32 %v2084, %v2091
  %v2094 = vadd.f32 %v2085, %v2091
  %s2095 = scalar_lea.vmem %s1, 32
  %v2096 = vld [vmem:[%s2095] sm:$0xff]
  %v2097 = vld [vmem:[%s2095 + $0x8] sm:$0xff]
  %v2098 = vld [vmem:[%s2095 + $0x10] sm:$0xff]
  %v2099 = vld [vmem:[%s2095 + $0x18] sm:$0xff]
  %s2100 = scalar_lea.vmem %s2, 1
  %v2101 = vld [vmem:[%s2100] sm:$0x1]
  %v2103 = vlaneseq
  %v2104 = vshrl.u32 %v2103, 7
  %v2105 = vsub.s32 0, %v2104
  %v2106 = vrot.slane %v2101, %v2105
  %v2109 = vsel %vm65, %v2093, 0
  %v2112 = vsel %vm65, %v2094, 0
  %2114 = vmatprep.subr.mxu0 0.0
  %2115 = vmatpush1.msra.mxu0 0.0
  %2116 = vmatprep.subr.mxu0 0.0
  %2117 = vmatpush1.msra.mxu0 0.0
  %2118 = vmatprep.subr.mxu0 0.0
  %2119 = vmatpush1.msra.mxu0 0.0
  %2120 = vmatprep.subr.mxu0 0.0
  %2121 = vmatpush1.msra.mxu0 0.0
  %2122 = vmatprep.subr.mxu0 0.0
  %2123 = vmatpush1.msra.mxu0 0.0
  %2124 = vmatprep.subr.mxu0 0.0
  %2125 = vmatpush1.msra.mxu0 0.0
  %2126 = vmatprep.subr.mxu0 0.0
  %2127 = vmatpush1.msra.mxu0 0.0
  %2128 = vmatprep.subr.mxu0 0.0
  %2129 = vmatpush1.msra.mxu0 0.0
  %2130 = vmatprep.subr.mxu0 0.0
  %2131 = vmatpush1.msra.mxu0 0.0
  %2132 = vmatprep.subr.mxu0 0.0
  %2133 = vmatpush1.msra.mxu0 0.0
  %2134 = vmatprep.subr.mxu0 0.0
  %2135 = vmatpush1.msra.mxu0 0.0
  %2136 = vmatprep.subr.mxu0 0.0
  %2137 = vmatpush1.msra.mxu0 0.0
  %2138 = vmatprep.subr.mxu0 0.0
  %2139 = vmatpush1.msra.mxu0 %v2099
  %2140 = vmatprep.subr.mxu0 0.0
  %2141 = vmatpush1.msra.mxu0 %v2098
  %2142 = vmatprep.subr.mxu0 0.0
  %2143 = vmatpush1.msra.mxu0 %v2097
  %2144 = vmatprep.subr.mxu0 0.0
  %2145 = vmatpush1.msra.mxu0 %v2096
  %2146 = vmatprep.subr.mxu0 0.0
  %2147 = vmatpush2.msra.mxu0 0.0
  %2148 = vmatprep.subr.mxu0 0.0
  %2149 = vmatpush2.msra.mxu0 0.0
  %2150 = vmatprep.subr.mxu0 0.0
  %2151 = vmatpush2.msra.mxu0 0.0
  %2152 = vmatprep.subr.mxu0 0.0
  %2153 = vmatpush2.msra.mxu0 0.0
  %2154 = vmatprep.subr.mxu0 0.0
  %2155 = vmatpush2.msra.mxu0 0.0
  %2156 = vmatprep.subr.mxu0 0.0
  %2157 = vmatpush2.msra.mxu0 0.0
  %2158 = vmatprep.subr.mxu0 0.0
  %2159 = vmatpush2.msra.mxu0 0.0
  %2160 = vmatprep.subr.mxu0 0.0
  %2161 = vmatpush2.msra.mxu0 0.0
  %2162 = vmatprep.subr.mxu0 0.0
  %2163 = vmatpush2.msra.mxu0 0.0
  %2164 = vmatprep.subr.mxu0 0.0
  %2165 = vmatpush2.msra.mxu0 0.0
  %2166 = vmatprep.subr.mxu0 0.0
  %2167 = vmatpush2.msra.mxu0 0.0
  %2168 = vmatprep.subr.mxu0 0.0
  %2169 = vmatpush2.msra.mxu0 0.0
  %2170 = vmatprep.subr.mxu0 0.0
  %2171 = vmatpush2.msra.mxu0 0.0
  %2172 = vmatprep.subr.mxu0 0.0
  %2173 = vmatpush2.msra.mxu0 0.0
  %2174 = vmatprep.subr.mxu0 0.0
  %2175 = vmatpush2.msra.mxu0 0.0
  %2176 = vmatprep.subr.mxu0 0.0
  %2177 = vmatpush2.msra.mxu0 0.0
  %2178 = vmatprep.mubr.f32.mxu0 0.0
  %2179 = vmatmul.mubr.f32.gmra.mxu0 %v2109
  %v2180 = vpop.f32.mrf.mxu0
  %v2181 = vadd.f32 %v2106, %v2180
  %v2182 = vpop.f32.mrf.mxu0
  %2183 = vmatprep.mubr.f32.mxu0 0.0
  %2184 = vmatmul.mubr.f32.gmra.mxu0 %v2112
  %v2185 = vpop.f32.mrf.mxu0
  %v2186 = vadd.f32 %v2106, %v2185
  %v2187 = vpop.f32.mrf.mxu0
  %2188 = vdwg.mxu0
  %s2189 = scalar_lea.vmem %s3, 32
  %v2190 = vld [vmem:[%s2189] sm:$0xff]
  %v2191 = vld [vmem:[%s2189 + $0x8] sm:$0xff]
  %v2192 = vld [vmem:[%s2189 + $0x10] sm:$0xff]
  %v2193 = vld [vmem:[%s2189 + $0x18] sm:$0xff]
  %v2194 = vmul.f32 %v2181, 0.35355338
  %v2195 = vmul.f32 %v2186, 0.35355338
  %2197 = vrot.lane.b32.xlu0 %v2181, 96
  %v2198 = vpop.permute.xlu0 %2197
  %v2200 = vsel %vm156, %v2194, 0
  %v2202 = vsel %vm156, %v2198, 0
  %2204 = vmatprep.subr.mxu0 0.0
  %2205 = vmatpush1.xpose.msra.mxu0 0.0
  %2206 = vmatprep.subr.mxu0 0.0
  %2207 = vmatpush1.xpose.msra.mxu0 0.0
  %2208 = vmatprep.subr.mxu0 0.0
  %2209 = vmatpush1.xpose.msra.mxu0 0.0
  %2210 = vmatprep.subr.mxu0 0.0
  %2211 = vmatpush1.xpose.msra.mxu0 0.0
  %2212 = vmatprep.subr.mxu0 0.0
  %2213 = vmatpush1.xpose.msra.mxu0 0.0
  %2214 = vmatprep.subr.mxu0 0.0
  %2215 = vmatpush1.xpose.msra.mxu0 0.0
  %2216 = vmatprep.subr.mxu0 0.0
  %2217 = vmatpush1.xpose.msra.mxu0 0.0
  %2218 = vmatprep.subr.mxu0 0.0
  %2219 = vmatpush1.xpose.msra.mxu0 0.0
  %2220 = vmatprep.subr.mxu0 0.0
  %2221 = vmatpush1.xpose.msra.mxu0 0.0
  %2222 = vmatprep.subr.mxu0 0.0
  %2223 = vmatpush1.xpose.msra.mxu0 0.0
  %2224 = vmatprep.subr.mxu0 0.0
  %2225 = vmatpush1.xpose.msra.mxu0 0.0
  %2226 = vmatprep.subr.mxu0 0.0
  %2227 = vmatpush1.xpose.msra.mxu0 0.0
  %2228 = vmatprep.subr.mxu0 0.0
  %2229 = vmatpush1.xpose.msra.mxu0 0.0
  %2230 = vmatprep.subr.mxu0 0.0
  %2231 = vmatpush1.xpose.msra.mxu0 0.0
  %2232 = vmatprep.subr.mxu0 0.0
  %2233 = vmatpush1.xpose.msra.mxu0 0.0
  %2234 = vmatprep.subr.mxu0 0.0
  %2235 = vmatpush1.xpose.msra.mxu0 %v2202
  %2236 = vmatprep.subr.mxu0 0.0
  %2237 = vmatpush2.xpose.msra.mxu0 0.0
  %2238 = vmatprep.subr.mxu0 0.0
  %2239 = vmatpush2.xpose.msra.mxu0 0.0
  %2240 = vmatprep.subr.mxu0 0.0
  %2241 = vmatpush2.xpose.msra.mxu0 0.0
  %2242 = vmatprep.subr.mxu0 0.0
  %2243 = vmatpush2.xpose.msra.mxu0 0.0
  %2244 = vmatprep.subr.mxu0 0.0
  %2245 = vmatpush2.xpose.msra.mxu0 0.0
  %2246 = vmatprep.subr.mxu0 0.0
  %2247 = vmatpush2.xpose.msra.mxu0 0.0
  %2248 = vmatprep.subr.mxu0 0.0
  %2249 = vmatpush2.xpose.msra.mxu0 0.0
  %2250 = vmatprep.subr.mxu0 0.0
  %2251 = vmatpush2.xpose.msra.mxu0 0.0
  %2252 = vmatprep.subr.mxu0 0.0
  %2253 = vmatpush2.xpose.msra.mxu0 0.0
  %2254 = vmatprep.subr.mxu0 0.0
  %2255 = vmatpush2.xpose.msra.mxu0 0.0
  %2256 = vmatprep.subr.mxu0 0.0
  %2257 = vmatpush2.xpose.msra.mxu0 0.0
  %2258 = vmatprep.subr.mxu0 0.0
  %2259 = vmatpush2.xpose.msra.mxu0 0.0
  %2260 = vmatprep.subr.mxu0 0.0
  %2261 = vmatpush2.xpose.msra.mxu0 0.0
  %2262 = vmatprep.subr.mxu0 0.0
  %2263 = vmatpush2.xpose.msra.mxu0 0.0
  %2264 = vmatprep.subr.mxu0 0.0
  %2265 = vmatpush2.xpose.msra.mxu0 0.0
  %2266 = vmatprep.subr.mxu0 0.0
  %2267 = vmatpush2.xpose.msra.mxu0 0.0
  %2268 = vmatprep.mubr.f32.mxu0 0.0
  %2269 = vmatmul.mubr.f32.gmra.mxu0 %v2200
  %v2270 = vpop.f32.mrf.mxu0
  %v2271 = vadd.f32 0.0, %v2270
  %v2272 = vpop.f32.mrf.mxu0
  %2273 = vdwg.mxu0
  %2275 = vrot.lane.b32.xlu0 %v2186, 96
  %v2276 = vpop.permute.xlu0 %2275
  %v2278 = vsel %vm156, %v2195, 0
  %v2280 = vsel %vm156, %v2276, 0
  %2282 = vmatprep.subr.mxu0 0.0
  %2283 = vmatpush1.xpose.msra.mxu0 0.0
  %2284 = vmatprep.subr.mxu0 0.0
  %2285 = vmatpush1.xpose.msra.mxu0 0.0
  %2286 = vmatprep.subr.mxu0 0.0
  %2287 = vmatpush1.xpose.msra.mxu0 0.0
  %2288 = vmatprep.subr.mxu0 0.0
  %2289 = vmatpush1.xpose.msra.mxu0 0.0
  %2290 = vmatprep.subr.mxu0 0.0
  %2291 = vmatpush1.xpose.msra.mxu0 0.0
  %2292 = vmatprep.subr.mxu0 0.0
  %2293 = vmatpush1.xpose.msra.mxu0 0.0
  %2294 = vmatprep.subr.mxu0 0.0
  %2295 = vmatpush1.xpose.msra.mxu0 0.0
  %2296 = vmatprep.subr.mxu0 0.0
  %2297 = vmatpush1.xpose.msra.mxu0 0.0
  %2298 = vmatprep.subr.mxu0 0.0
  %2299 = vmatpush1.xpose.msra.mxu0 0.0
  %2300 = vmatprep.subr.mxu0 0.0
  %2301 = vmatpush1.xpose.msra.mxu0 0.0
  %2302 = vmatprep.subr.mxu0 0.0
  %2303 = vmatpush1.xpose.msra.mxu0 0.0
  %2304 = vmatprep.subr.mxu0 0.0
  %2305 = vmatpush1.xpose.msra.mxu0 0.0
  %2306 = vmatprep.subr.mxu0 0.0
  %2307 = vmatpush1.xpose.msra.mxu0 0.0
  %2308 = vmatprep.subr.mxu0 0.0
  %2309 = vmatpush1.xpose.msra.mxu0 0.0
  %2310 = vmatprep.subr.mxu0 0.0
  %2311 = vmatpush1.xpose.msra.mxu0 0.0
  %2312 = vmatprep.subr.mxu0 0.0
  %2313 = vmatpush1.xpose.msra.mxu0 %v2280
  %2314 = vmatprep.subr.mxu0 0.0
  %2315 = vmatpush2.xpose.msra.mxu0 0.0
  %2316 = vmatprep.subr.mxu0 0.0
  %2317 = vmatpush2.xpose.msra.mxu0 0.0
  %2318 = vmatprep.subr.mxu0 0.0
  %2319 = vmatpush2.xpose.msra.mxu0 0.0
  %2320 = vmatprep.subr.mxu0 0.0
  %2321 = vmatpush2.xpose.msra.mxu0 0.0
  %2322 = vmatprep.subr.mxu0 0.0
  %2323 = vmatpush2.xpose.msra.mxu0 0.0
  %2324 = vmatprep.subr.mxu0 0.0
  %2325 = vmatpush2.xpose.msra.mxu0 0.0
  %2326 = vmatprep.subr.mxu0 0.0
  %2327 = vmatpush2.xpose.msra.mxu0 0.0
  %2328 = vmatprep.subr.mxu0 0.0
  %2329 = vmatpush2.xpose.msra.mxu0 0.0
  %2330 = vmatprep.subr.mxu0 0.0
  %2331 = vmatpush2.xpose.msra.mxu0 0.0
  %2332 = vmatprep.subr.mxu0 0.0
  %2333 = vmatpush2.xpose.msra.mxu0 0.0
  %2334 = vmatprep.subr.mxu0 0.0
  %2335 = vmatpush2.xpose.msra.mxu0 0.0
  %2336 = vmatprep.subr.mxu0 0.0
  %2337 = vmatpush2.xpose.msra.mxu0 0.0
  %2338 = vmatprep.subr.mxu0 0.0
  %2339 = vmatpush2.xpose.msra.mxu0 0.0
  %2340 = vmatprep.subr.mxu0 0.0
  %2341 = vmatpush2.xpose.msra.mxu0 0.0
  %2342 = vmatprep.subr.mxu0 0.0
  %2343 = vmatpush2.xpose.msra.mxu0 0.0
  %2344 = vmatprep.subr.mxu0 0.0
  %2345 = vmatpush2.xpose.msra.mxu0 0.0
  %2346 = vmatprep.mubr.f32.mxu0 0.0
  %2347 = vmatmul.mubr.f32.gmra.mxu0 %v2278
  %v2348 = vpop.f32.mrf.mxu0
  %v2349 = vadd.f32 0.0, %v2348
  %v2350 = vpop.f32.mrf.mxu0
  %2351 = vdwg.mxu0
  %v2352 = vsel %vm156, %v2271, -inf
  %2353 = vmax.xlane.f32.xlu0 %v2352
  %v2354 = vpop.xlane.xlu0 %2353
  %v2355 = vsel %vm156, %v2349, -inf
  %2356 = vmax.xlane.f32.xlu0 %v2355
  %v2357 = vpop.xlane.xlu0 %2356
  %v2358 = vsub.f32 %v2271, %v2354
  %v2359 = vsub.f32 %v2349, %v2357
  %v2360 = vmul.f32 %v2358, 1.442695
  %v2361 = vpow.pop %v2360
  %v2362 = vmul.f32 %v2359, 1.442695
  %v2363 = vpow.pop %v2362
  %v2364 = vsel %vm156, %v2361, 0.0
  %2365 = vadd.xlane.f32.xlu0 %v2364
  %v2366 = vpop.xlane.xlu0 %2365
  %v2367 = vsel %vm156, %v2363, 0.0
  %2368 = vadd.xlane.f32.xlu0 %v2367
  %v2369 = vpop.xlane.xlu0 %2368
  %v2370 = vrcp.pop %v2366
  %v2371 = vrcp.pop %v2369
  %v2372 = vmul.f32 %v2361, %v2370
  %v2373 = vmul.f32 %v2363, %v2371
  %2374 = vrot.lane.b32.xlu0 %v2181, 64
  %v2375 = vpop.permute.xlu0 %2374
  %v2378 = vsel %vm156, %v2372, 0
  %2380 = vmatprep.subr.mxu0 0.0
  %2381 = vmatpush1.msra.mxu0 0.0
  %2382 = vmatprep.subr.mxu0 0.0
  %2383 = vmatpush1.msra.mxu0 0.0
  %2384 = vmatprep.subr.mxu0 0.0
  %2385 = vmatpush1.msra.mxu0 0.0
  %2386 = vmatprep.subr.mxu0 0.0
  %2387 = vmatpush1.msra.mxu0 0.0
  %2388 = vmatprep.subr.mxu0 0.0
  %2389 = vmatpush1.msra.mxu0 0.0
  %2390 = vmatprep.subr.mxu0 0.0
  %2391 = vmatpush1.msra.mxu0 0.0
  %2392 = vmatprep.subr.mxu0 0.0
  %2393 = vmatpush1.msra.mxu0 0.0
  %2394 = vmatprep.subr.mxu0 0.0
  %2395 = vmatpush1.msra.mxu0 0.0
  %2396 = vmatprep.subr.mxu0 0.0
  %2397 = vmatpush1.msra.mxu0 0.0
  %2398 = vmatprep.subr.mxu0 0.0
  %2399 = vmatpush1.msra.mxu0 0.0
  %2400 = vmatprep.subr.mxu0 0.0
  %2401 = vmatpush1.msra.mxu0 0.0
  %2402 = vmatprep.subr.mxu0 0.0
  %2403 = vmatpush1.msra.mxu0 0.0
  %2404 = vmatprep.subr.mxu0 0.0
  %2405 = vmatpush1.msra.mxu0 0.0
  %2406 = vmatprep.subr.mxu0 0.0
  %2407 = vmatpush1.msra.mxu0 0.0
  %2408 = vmatprep.subr.mxu0 0.0
  %2409 = vmatpush1.msra.mxu0 0.0
  %2410 = vmatprep.subr.mxu0 0.0
  %2411 = vmatpush1.msra.mxu0 %v2375
  %2412 = vmatprep.subr.mxu0 0.0
  %2413 = vmatpush2.msra.mxu0 0.0
  %2414 = vmatprep.subr.mxu0 0.0
  %2415 = vmatpush2.msra.mxu0 0.0
  %2416 = vmatprep.subr.mxu0 0.0
  %2417 = vmatpush2.msra.mxu0 0.0
  %2418 = vmatprep.subr.mxu0 0.0
  %2419 = vmatpush2.msra.mxu0 0.0
  %2420 = vmatprep.subr.mxu0 0.0
  %2421 = vmatpush2.msra.mxu0 0.0
  %2422 = vmatprep.subr.mxu0 0.0
  %2423 = vmatpush2.msra.mxu0 0.0
  %2424 = vmatprep.subr.mxu0 0.0
  %2425 = vmatpush2.msra.mxu0 0.0
  %2426 = vmatprep.subr.mxu0 0.0
  %2427 = vmatpush2.msra.mxu0 0.0
  %2428 = vmatprep.subr.mxu0 0.0
  %2429 = vmatpush2.msra.mxu0 0.0
  %2430 = vmatprep.subr.mxu0 0.0
  %2431 = vmatpush2.msra.mxu0 0.0
  %2432 = vmatprep.subr.mxu0 0.0
  %2433 = vmatpush2.msra.mxu0 0.0
  %2434 = vmatprep.subr.mxu0 0.0
  %2435 = vmatpush2.msra.mxu0 0.0
  %2436 = vmatprep.subr.mxu0 0.0
  %2437 = vmatpush2.msra.mxu0 0.0
  %2438 = vmatprep.subr.mxu0 0.0
  %2439 = vmatpush2.msra.mxu0 0.0
  %2440 = vmatprep.subr.mxu0 0.0
  %2441 = vmatpush2.msra.mxu0 0.0
  %2442 = vmatprep.subr.mxu0 0.0
  %2443 = vmatpush2.msra.mxu0 0.0
  %2444 = vmatprep.mubr.f32.mxu0 0.0
  %2445 = vmatmul.mubr.f32.gmra.mxu0 %v2378
  %v2446 = vpop.f32.mrf.mxu0
  %v2447 = vadd.f32 0.0, %v2446
  %v2448 = vpop.f32.mrf.mxu0
  %2449 = vdwg.mxu0
  %2450 = vrot.lane.b32.xlu0 %v2186, 64
  %v2451 = vpop.permute.xlu0 %2450
  %v2454 = vsel %vm156, %v2373, 0
  %2456 = vmatprep.subr.mxu0 0.0
  %2457 = vmatpush1.msra.mxu0 0.0
  %2458 = vmatprep.subr.mxu0 0.0
  %2459 = vmatpush1.msra.mxu0 0.0
  %2460 = vmatprep.subr.mxu0 0.0
  %2461 = vmatpush1.msra.mxu0 0.0
  %2462 = vmatprep.subr.mxu0 0.0
  %2463 = vmatpush1.msra.mxu0 0.0
  %2464 = vmatprep.subr.mxu0 0.0
  %2465 = vmatpush1.msra.mxu0 0.0
  %2466 = vmatprep.subr.mxu0 0.0
  %2467 = vmatpush1.msra.mxu0 0.0
  %2468 = vmatprep.subr.mxu0 0.0
  %2469 = vmatpush1.msra.mxu0 0.0
  %2470 = vmatprep.subr.mxu0 0.0
  %2471 = vmatpush1.msra.mxu0 0.0
  %2472 = vmatprep.subr.mxu0 0.0
  %2473 = vmatpush1.msra.mxu0 0.0
  %2474 = vmatprep.subr.mxu0 0.0
  %2475 = vmatpush1.msra.mxu0 0.0
  %2476 = vmatprep.subr.mxu0 0.0
  %2477 = vmatpush1.msra.mxu0 0.0
  %2478 = vmatprep.subr.mxu0 0.0
  %2479 = vmatpush1.msra.mxu0 0.0
  %2480 = vmatprep.subr.mxu0 0.0
  %2481 = vmatpush1.msra.mxu0 0.0
  %2482 = vmatprep.subr.mxu0 0.0
  %2483 = vmatpush1.msra.mxu0 0.0
  %2484 = vmatprep.subr.mxu0 0.0
  %2485 = vmatpush1.msra.mxu0 0.0
  %2486 = vmatprep.subr.mxu0 0.0
  %2487 = vmatpush1.msra.mxu0 %v2451
  %2488 = vmatprep.subr.mxu0 0.0
  %2489 = vmatpush2.msra.mxu0 0.0
  %2490 = vmatprep.subr.mxu0 0.0
  %2491 = vmatpush2.msra.mxu0 0.0
  %2492 = vmatprep.subr.mxu0 0.0
  %2493 = vmatpush2.msra.mxu0 0.0
  %2494 = vmatprep.subr.mxu0 0.0
  %2495 = vmatpush2.msra.mxu0 0.0
  %2496 = vmatprep.subr.mxu0 0.0
  %2497 = vmatpush2.msra.mxu0 0.0
  %2498 = vmatprep.subr.mxu0 0.0
  %2499 = vmatpush2.msra.mxu0 0.0
  %2500 = vmatprep.subr.mxu0 0.0
  %2501 = vmatpush2.msra.mxu0 0.0
  %2502 = vmatprep.subr.mxu0 0.0
  %2503 = vmatpush2.msra.mxu0 0.0
  %2504 = vmatprep.subr.mxu0 0.0
  %2505 = vmatpush2.msra.mxu0 0.0
  %2506 = vmatprep.subr.mxu0 0.0
  %2507 = vmatpush2.msra.mxu0 0.0
  %2508 = vmatprep.subr.mxu0 0.0
  %2509 = vmatpush2.msra.mxu0 0.0
  %2510 = vmatprep.subr.mxu0 0.0
  %2511 = vmatpush2.msra.mxu0 0.0
  %2512 = vmatprep.subr.mxu0 0.0
  %2513 = vmatpush2.msra.mxu0 0.0
  %2514 = vmatprep.subr.mxu0 0.0
  %2515 = vmatpush2.msra.mxu0 0.0
  %2516 = vmatprep.subr.mxu0 0.0
  %2517 = vmatpush2.msra.mxu0 0.0
  %2518 = vmatprep.subr.mxu0 0.0
  %2519 = vmatpush2.msra.mxu0 0.0
  %2520 = vmatprep.mubr.f32.mxu0 0.0
  %2521 = vmatmul.mubr.f32.gmra.mxu0 %v2454
  %v2522 = vpop.f32.mrf.mxu0
  %v2523 = vadd.f32 0.0, %v2522
  %v2524 = vpop.f32.mrf.mxu0
  %2525 = vdwg.mxu0
  %2526 = vrot.lane.b32.xlu0 %v2194, 120
  %v2527 = vpop.permute.xlu0 %2526
  %2528 = vrot.lane.b32.xlu0 %v2181, 88
  %v2529 = vpop.permute.xlu0 %2528
  %v2530 = vsel %vm156, %v2527, 0
  %v2532 = vsel %vm156, %v2529, 0
  %2534 = vmatprep.subr.mxu0 0.0
  %2535 = vmatpush1.xpose.msra.mxu0 0.0
  %2536 = vmatprep.subr.mxu0 0.0
  %2537 = vmatpush1.xpose.msra.mxu0 0.0
  %2538 = vmatprep.subr.mxu0 0.0
  %2539 = vmatpush1.xpose.msra.mxu0 0.0
  %2540 = vmatprep.subr.mxu0 0.0
  %2541 = vmatpush1.xpose.msra.mxu0 0.0
  %2542 = vmatprep.subr.mxu0 0.0
  %2543 = vmatpush1.xpose.msra.mxu0 0.0
  %2544 = vmatprep.subr.mxu0 0.0
  %2545 = vmatpush1.xpose.msra.mxu0 0.0
  %2546 = vmatprep.subr.mxu0 0.0
  %2547 = vmatpush1.xpose.msra.mxu0 0.0
  %2548 = vmatprep.subr.mxu0 0.0
  %2549 = vmatpush1.xpose.msra.mxu0 0.0
  %2550 = vmatprep.subr.mxu0 0.0
  %2551 = vmatpush1.xpose.msra.mxu0 0.0
  %2552 = vmatprep.subr.mxu0 0.0
  %2553 = vmatpush1.xpose.msra.mxu0 0.0
  %2554 = vmatprep.subr.mxu0 0.0
  %2555 = vmatpush1.xpose.msra.mxu0 0.0
  %2556 = vmatprep.subr.mxu0 0.0
  %2557 = vmatpush1.xpose.msra.mxu0 0.0
  %2558 = vmatprep.subr.mxu0 0.0
  %2559 = vmatpush1.xpose.msra.mxu0 0.0
  %2560 = vmatprep.subr.mxu0 0.0
  %2561 = vmatpush1.xpose.msra.mxu0 0.0
  %2562 = vmatprep.subr.mxu0 0.0
  %2563 = vmatpush1.xpose.msra.mxu0 0.0
  %2564 = vmatprep.subr.mxu0 0.0
  %2565 = vmatpush1.xpose.msra.mxu0 %v2532
  %2566 = vmatprep.subr.mxu0 0.0
  %2567 = vmatpush2.xpose.msra.mxu0 0.0
  %2568 = vmatprep.subr.mxu0 0.0
  %2569 = vmatpush2.xpose.msra.mxu0 0.0
  %2570 = vmatprep.subr.mxu0 0.0
  %2571 = vmatpush2.xpose.msra.mxu0 0.0
  %2572 = vmatprep.subr.mxu0 0.0
  %2573 = vmatpush2.xpose.msra.mxu0 0.0
  %2574 = vmatprep.subr.mxu0 0.0
  %2575 = vmatpush2.xpose.msra.mxu0 0.0
  %2576 = vmatprep.subr.mxu0 0.0
  %2577 = vmatpush2.xpose.msra.mxu0 0.0
  %2578 = vmatprep.subr.mxu0 0.0
  %2579 = vmatpush2.xpose.msra.mxu0 0.0
  %2580 = vmatprep.subr.mxu0 0.0
  %2581 = vmatpush2.xpose.msra.mxu0 0.0
  %2582 = vmatprep.subr.mxu0 0.0
  %2583 = vmatpush2.xpose.msra.mxu0 0.0
  %2584 = vmatprep.subr.mxu0 0.0
  %2585 = vmatpush2.xpose.msra.mxu0 0.0
  %2586 = vmatprep.subr.mxu0 0.0
  %2587 = vmatpush2.xpose.msra.mxu0 0.0
  %2588 = vmatprep.subr.mxu0 0.0
  %2589 = vmatpush2.xpose.msra.mxu0 0.0
  %2590 = vmatprep.subr.mxu0 0.0
  %2591 = vmatpush2.xpose.msra.mxu0 0.0
  %2592 = vmatprep.subr.mxu0 0.0
  %2593 = vmatpush2.xpose.msra.mxu0 0.0
  %2594 = vmatprep.subr.mxu0 0.0
  %2595 = vmatpush2.xpose.msra.mxu0 0.0
  %2596 = vmatprep.subr.mxu0 0.0
  %2597 = vmatpush2.xpose.msra.mxu0 0.0
  %2598 = vmatprep.mubr.f32.mxu0 0.0
  %2599 = vmatmul.mubr.f32.gmra.mxu0 %v2530
  %v2600 = vpop.f32.mrf.mxu0
  %v2601 = vadd.f32 0.0, %v2600
  %v2602 = vpop.f32.mrf.mxu0
  %2603 = vdwg.mxu0
  %2604 = vrot.lane.b32.xlu0 %v2195, 120
  %v2605 = vpop.permute.xlu0 %2604
  %2606 = vrot.lane.b32.xlu0 %v2186, 88
  %v2607 = vpop.permute.xlu0 %2606
  %v2608 = vsel %vm156, %v2605, 0
  %v2610 = vsel %vm156, %v2607, 0
  %2612 = vmatprep.subr.mxu0 0.0
  %2613 = vmatpush1.xpose.msra.mxu0 0.0
  %2614 = vmatprep.subr.mxu0 0.0
  %2615 = vmatpush1.xpose.msra.mxu0 0.0
  %2616 = vmatprep.subr.mxu0 0.0
  %2617 = vmatpush1.xpose.msra.mxu0 0.0
  %2618 = vmatprep.subr.mxu0 0.0
  %2619 = vmatpush1.xpose.msra.mxu0 0.0
  %2620 = vmatprep.subr.mxu0 0.0
  %2621 = vmatpush1.xpose.msra.mxu0 0.0
  %2622 = vmatprep.subr.mxu0 0.0
  %2623 = vmatpush1.xpose.msra.mxu0 0.0
  %2624 = vmatprep.subr.mxu0 0.0
  %2625 = vmatpush1.xpose.msra.mxu0 0.0
  %2626 = vmatprep.subr.mxu0 0.0
  %2627 = vmatpush1.xpose.msra.mxu0 0.0
  %2628 = vmatprep.subr.mxu0 0.0
  %2629 = vmatpush1.xpose.msra.mxu0 0.0
  %2630 = vmatprep.subr.mxu0 0.0
  %2631 = vmatpush1.xpose.msra.mxu0 0.0
  %2632 = vmatprep.subr.mxu0 0.0
  %2633 = vmatpush1.xpose.msra.mxu0 0.0
  %2634 = vmatprep.subr.mxu0 0.0
  %2635 = vmatpush1.xpose.msra.mxu0 0.0
  %2636 = vmatprep.subr.mxu0 0.0
  %2637 = vmatpush1.xpose.msra.mxu0 0.0
  %2638 = vmatprep.subr.mxu0 0.0
  %2639 = vmatpush1.xpose.msra.mxu0 0.0
  %2640 = vmatprep.subr.mxu0 0.0
  %2641 = vmatpush1.xpose.msra.mxu0 0.0
  %2642 = vmatprep.subr.mxu0 0.0
  %2643 = vmatpush1.xpose.msra.mxu0 %v2610
  %2644 = vmatprep.subr.mxu0 0.0
  %2645 = vmatpush2.xpose.msra.mxu0 0.0
  %2646 = vmatprep.subr.mxu0 0.0
  %2647 = vmatpush2.xpose.msra.mxu0 0.0
  %2648 = vmatprep.subr.mxu0 0.0
  %2649 = vmatpush2.xpose.msra.mxu0 0.0
  %2650 = vmatprep.subr.mxu0 0.0
  %2651 = vmatpush2.xpose.msra.mxu0 0.0
  %2652 = vmatprep.subr.mxu0 0.0
  %2653 = vmatpush2.xpose.msra.mxu0 0.0
  %2654 = vmatprep.subr.mxu0 0.0
  %2655 = vmatpush2.xpose.msra.mxu0 0.0
  %2656 = vmatprep.subr.mxu0 0.0
  %2657 = vmatpush2.xpose.msra.mxu0 0.0
  %2658 = vmatprep.subr.mxu0 0.0
  %2659 = vmatpush2.xpose.msra.mxu0 0.0
  %2660 = vmatprep.subr.mxu0 0.0
  %2661 = vmatpush2.xpose.msra.mxu0 0.0
  %2662 = vmatprep.subr.mxu0 0.0
  %2663 = vmatpush2.xpose.msra.mxu0 0.0
  %2664 = vmatprep.subr.mxu0 0.0
  %2665 = vmatpush2.xpose.msra.mxu0 0.0
  %2666 = vmatprep.subr.mxu0 0.0
  %2667 = vmatpush2.xpose.msra.mxu0 0.0
  %2668 = vmatprep.subr.mxu0 0.0
  %2669 = vmatpush2.xpose.msra.mxu0 0.0
  %2670 = vmatprep.subr.mxu0 0.0
  %2671 = vmatpush2.xpose.msra.mxu0 0.0
  %2672 = vmatprep.subr.mxu0 0.0
  %2673 = vmatpush2.xpose.msra.mxu0 0.0
  %2674 = vmatprep.subr.mxu0 0.0
  %2675 = vmatpush2.xpose.msra.mxu0 0.0
  %2676 = vmatprep.mubr.f32.mxu0 0.0
  %2677 = vmatmul.mubr.f32.gmra.mxu0 %v2608
  %v2678 = vpop.f32.mrf.mxu0
  %v2679 = vadd.f32 0.0, %v2678
  %v2680 = vpop.f32.mrf.mxu0
  %2681 = vdwg.mxu0
  %v2682 = vsel %vm156, %v2601, -inf
  %2683 = vmax.xlane.f32.xlu0 %v2682
  %v2684 = vpop.xlane.xlu0 %2683
  %v2685 = vsel %vm156, %v2679, -inf
  %2686 = vmax.xlane.f32.xlu0 %v2685
  %v2687 = vpop.xlane.xlu0 %2686
  %v2688 = vsub.f32 %v2601, %v2684
  %v2689 = vsub.f32 %v2679, %v2687
  %v2690 = vmul.f32 %v2688, 1.442695
  %v2691 = vpow.pop %v2690
  %v2692 = vmul.f32 %v2689, 1.442695
  %v2693 = vpow.pop %v2692
  %v2694 = vsel %vm156, %v2691, 0.0
  %2695 = vadd.xlane.f32.xlu0 %v2694
  %v2696 = vpop.xlane.xlu0 %2695
  %v2697 = vsel %vm156, %v2693, 0.0
  %2698 = vadd.xlane.f32.xlu0 %v2697
  %v2699 = vpop.xlane.xlu0 %2698
  %v2700 = vrcp.pop %v2696
  %v2701 = vrcp.pop %v2699
  %v2702 = vmul.f32 %v2691, %v2700
  %v2703 = vmul.f32 %v2693, %v2701
  %2704 = vrot.lane.b32.xlu0 %v2181, 56
  %v2705 = vpop.permute.xlu0 %2704
  %v2708 = vsel %vm156, %v2702, 0
  %2710 = vmatprep.subr.mxu0 0.0
  %2711 = vmatpush1.msra.mxu0 0.0
  %2712 = vmatprep.subr.mxu0 0.0
  %2713 = vmatpush1.msra.mxu0 0.0
  %2714 = vmatprep.subr.mxu0 0.0
  %2715 = vmatpush1.msra.mxu0 0.0
  %2716 = vmatprep.subr.mxu0 0.0
  %2717 = vmatpush1.msra.mxu0 0.0
  %2718 = vmatprep.subr.mxu0 0.0
  %2719 = vmatpush1.msra.mxu0 0.0
  %2720 = vmatprep.subr.mxu0 0.0
  %2721 = vmatpush1.msra.mxu0 0.0
  %2722 = vmatprep.subr.mxu0 0.0
  %2723 = vmatpush1.msra.mxu0 0.0
  %2724 = vmatprep.subr.mxu0 0.0
  %2725 = vmatpush1.msra.mxu0 0.0
  %2726 = vmatprep.subr.mxu0 0.0
  %2727 = vmatpush1.msra.mxu0 0.0
  %2728 = vmatprep.subr.mxu0 0.0
  %2729 = vmatpush1.msra.mxu0 0.0
  %2730 = vmatprep.subr.mxu0 0.0
  %2731 = vmatpush1.msra.mxu0 0.0
  %2732 = vmatprep.subr.mxu0 0.0
  %2733 = vmatpush1.msra.mxu0 0.0
  %2734 = vmatprep.subr.mxu0 0.0
  %2735 = vmatpush1.msra.mxu0 0.0
  %2736 = vmatprep.subr.mxu0 0.0
  %2737 = vmatpush1.msra.mxu0 0.0
  %2738 = vmatprep.subr.mxu0 0.0
  %2739 = vmatpush1.msra.mxu0 0.0
  %2740 = vmatprep.subr.mxu0 0.0
  %2741 = vmatpush1.msra.mxu0 %v2705
  %2742 = vmatprep.subr.mxu0 0.0
  %2743 = vmatpush2.msra.mxu0 0.0
  %2744 = vmatprep.subr.mxu0 0.0
  %2745 = vmatpush2.msra.mxu0 0.0
  %2746 = vmatprep.subr.mxu0 0.0
  %2747 = vmatpush2.msra.mxu0 0.0
  %2748 = vmatprep.subr.mxu0 0.0
  %2749 = vmatpush2.msra.mxu0 0.0
  %2750 = vmatprep.subr.mxu0 0.0
  %2751 = vmatpush2.msra.mxu0 0.0
  %2752 = vmatprep.subr.mxu0 0.0
  %2753 = vmatpush2.msra.mxu0 0.0
  %2754 = vmatprep.subr.mxu0 0.0
  %2755 = vmatpush2.msra.mxu0 0.0
  %2756 = vmatprep.subr.mxu0 0.0
  %2757 = vmatpush2.msra.mxu0 0.0
  %2758 = vmatprep.subr.mxu0 0.0
  %2759 = vmatpush2.msra.mxu0 0.0
  %2760 = vmatprep.subr.mxu0 0.0
  %2761 = vmatpush2.msra.mxu0 0.0
  %2762 = vmatprep.subr.mxu0 0.0
  %2763 = vmatpush2.msra.mxu0 0.0
  %2764 = vmatprep.subr.mxu0 0.0
  %2765 = vmatpush2.msra.mxu0 0.0
  %2766 = vmatprep.subr.mxu0 0.0
  %2767 = vmatpush2.msra.mxu0 0.0
  %2768 = vmatprep.subr.mxu0 0.0
  %2769 = vmatpush2.msra.mxu0 0.0
  %2770 = vmatprep.subr.mxu0 0.0
  %2771 = vmatpush2.msra.mxu0 0.0
  %2772 = vmatprep.subr.mxu0 0.0
  %2773 = vmatpush2.msra.mxu0 0.0
  %2774 = vmatprep.mubr.f32.mxu0 0.0
  %2775 = vmatmul.mubr.f32.gmra.mxu0 %v2708
  %v2776 = vpop.f32.mrf.mxu0
  %v2777 = vadd.f32 0.0, %v2776
  %v2778 = vpop.f32.mrf.mxu0
  %2779 = vdwg.mxu0
  %2780 = vrot.lane.b32.xlu0 %v2186, 56
  %v2781 = vpop.permute.xlu0 %2780
  %v2784 = vsel %vm156, %v2703, 0
  %2786 = vmatprep.subr.mxu0 0.0
  %2787 = vmatpush1.msra.mxu0 0.0
  %2788 = vmatprep.subr.mxu0 0.0
  %2789 = vmatpush1.msra.mxu0 0.0
  %2790 = vmatprep.subr.mxu0 0.0
  %2791 = vmatpush1.msra.mxu0 0.0
  %2792 = vmatprep.subr.mxu0 0.0
  %2793 = vmatpush1.msra.mxu0 0.0
  %2794 = vmatprep.subr.mxu0 0.0
  %2795 = vmatpush1.msra.mxu0 0.0
  %2796 = vmatprep.subr.mxu0 0.0
  %2797 = vmatpush1.msra.mxu0 0.0
  %2798 = vmatprep.subr.mxu0 0.0
  %2799 = vmatpush1.msra.mxu0 0.0
  %2800 = vmatprep.subr.mxu0 0.0
  %2801 = vmatpush1.msra.mxu0 0.0
  %2802 = vmatprep.subr.mxu0 0.0
  %2803 = vmatpush1.msra.mxu0 0.0
  %2804 = vmatprep.subr.mxu0 0.0
  %2805 = vmatpush1.msra.mxu0 0.0
  %2806 = vmatprep.subr.mxu0 0.0
  %2807 = vmatpush1.msra.mxu0 0.0
  %2808 = vmatprep.subr.mxu0 0.0
  %2809 = vmatpush1.msra.mxu0 0.0
  %2810 = vmatprep.subr.mxu0 0.0
  %2811 = vmatpush1.msra.mxu0 0.0
  %2812 = vmatprep.subr.mxu0 0.0
  %2813 = vmatpush1.msra.mxu0 0.0
  %2814 = vmatprep.subr.mxu0 0.0
  %2815 = vmatpush1.msra.mxu0 0.0
  %2816 = vmatprep.subr.mxu0 0.0
  %2817 = vmatpush1.msra.mxu0 %v2781
  %2818 = vmatprep.subr.mxu0 0.0
  %2819 = vmatpush2.msra.mxu0 0.0
  %2820 = vmatprep.subr.mxu0 0.0
  %2821 = vmatpush2.msra.mxu0 0.0
  %2822 = vmatprep.subr.mxu0 0.0
  %2823 = vmatpush2.msra.mxu0 0.0
  %2824 = vmatprep.subr.mxu0 0.0
  %2825 = vmatpush2.msra.mxu0 0.0
  %2826 = vmatprep.subr.mxu0 0.0
  %2827 = vmatpush2.msra.mxu0 0.0
  %2828 = vmatprep.subr.mxu0 0.0
  %2829 = vmatpush2.msra.mxu0 0.0
  %2830 = vmatprep.subr.mxu0 0.0
  %2831 = vmatpush2.msra.mxu0 0.0
  %2832 = vmatprep.subr.mxu0 0.0
  %2833 = vmatpush2.msra.mxu0 0.0
  %2834 = vmatprep.subr.mxu0 0.0
  %2835 = vmatpush2.msra.mxu0 0.0
  %2836 = vmatprep.subr.mxu0 0.0
  %2837 = vmatpush2.msra.mxu0 0.0
  %2838 = vmatprep.subr.mxu0 0.0
  %2839 = vmatpush2.msra.mxu0 0.0
  %2840 = vmatprep.subr.mxu0 0.0
  %2841 = vmatpush2.msra.mxu0 0.0
  %2842 = vmatprep.subr.mxu0 0.0
  %2843 = vmatpush2.msra.mxu0 0.0
  %2844 = vmatprep.subr.mxu0 0.0
  %2845 = vmatpush2.msra.mxu0 0.0
  %2846 = vmatprep.subr.mxu0 0.0
  %2847 = vmatpush2.msra.mxu0 0.0
  %2848 = vmatprep.subr.mxu0 0.0
  %2849 = vmatpush2.msra.mxu0 0.0
  %2850 = vmatprep.mubr.f32.mxu0 0.0
  %2851 = vmatmul.mubr.f32.gmra.mxu0 %v2784
  %v2852 = vpop.f32.mrf.mxu0
  %v2853 = vadd.f32 0.0, %v2852
  %v2854 = vpop.f32.mrf.mxu0
  %2855 = vdwg.mxu0
  %v2857 = vsel %vm156, %v2777, 0
  %v2860 = vsel %vm156, %v2853, 0
  %2862 = vmatprep.subr.mxu0 0.0
  %2863 = vmatpush1.msra.mxu0 0.0
  %2864 = vmatprep.subr.mxu0 0.0
  %2865 = vmatpush1.msra.mxu0 0.0
  %2866 = vmatprep.subr.mxu0 0.0
  %2867 = vmatpush1.msra.mxu0 0.0
  %2868 = vmatprep.subr.mxu0 0.0
  %2869 = vmatpush1.msra.mxu0 0.0
  %2870 = vmatprep.subr.mxu0 0.0
  %2871 = vmatpush1.msra.mxu0 0.0
  %2872 = vmatprep.subr.mxu0 0.0
  %2873 = vmatpush1.msra.mxu0 0.0
  %2874 = vmatprep.subr.mxu0 0.0
  %2875 = vmatpush1.msra.mxu0 0.0
  %2876 = vmatprep.subr.mxu0 0.0
  %2877 = vmatpush1.msra.mxu0 0.0
  %2878 = vmatprep.subr.mxu0 0.0
  %2879 = vmatpush1.msra.mxu0 0.0
  %2880 = vmatprep.subr.mxu0 0.0
  %2881 = vmatpush1.msra.mxu0 0.0
  %2882 = vmatprep.subr.mxu0 0.0
  %2883 = vmatpush1.msra.mxu0 0.0
  %2884 = vmatprep.subr.mxu0 0.0
  %2885 = vmatpush1.msra.mxu0 0.0
  %2886 = vmatprep.subr.mxu0 0.0
  %2887 = vmatpush1.msra.mxu0 0.0
  %2888 = vmatprep.subr.mxu0 0.0
  %2889 = vmatpush1.msra.mxu0 0.0
  %2890 = vmatprep.subr.mxu0 0.0
  %2891 = vmatpush1.msra.mxu0 0.0
  %2892 = vmatprep.subr.mxu0 0.0
  %2893 = vmatpush1.msra.mxu0 %v2191
  %2894 = vmatprep.subr.mxu0 0.0
  %2895 = vmatpush2.msra.mxu0 0.0
  %2896 = vmatprep.subr.mxu0 0.0
  %2897 = vmatpush2.msra.mxu0 0.0
  %2898 = vmatprep.subr.mxu0 0.0
  %2899 = vmatpush2.msra.mxu0 0.0
  %2900 = vmatprep.subr.mxu0 0.0
  %2901 = vmatpush2.msra.mxu0 0.0
  %2902 = vmatprep.subr.mxu0 0.0
  %2903 = vmatpush2.msra.mxu0 0.0
  %2904 = vmatprep.subr.mxu0 0.0
  %2905 = vmatpush2.msra.mxu0 0.0
  %2906 = vmatprep.subr.mxu0 0.0
  %2907 = vmatpush2.msra.mxu0 0.0
  %2908 = vmatprep.subr.mxu0 0.0
  %2909 = vmatpush2.msra.mxu0 0.0
  %2910 = vmatprep.subr.mxu0 0.0
  %2911 = vmatpush2.msra.mxu0 0.0
  %2912 = vmatprep.subr.mxu0 0.0
  %2913 = vmatpush2.msra.mxu0 0.0
  %2914 = vmatprep.subr.mxu0 0.0
  %2915 = vmatpush2.msra.mxu0 0.0
  %2916 = vmatprep.subr.mxu0 0.0
  %2917 = vmatpush2.msra.mxu0 0.0
  %2918 = vmatprep.subr.mxu0 0.0
  %2919 = vmatpush2.msra.mxu0 0.0
  %2920 = vmatprep.subr.mxu0 0.0
  %2921 = vmatpush2.msra.mxu0 0.0
  %2922 = vmatprep.subr.mxu0 0.0
  %2923 = vmatpush2.msra.mxu0 0.0
  %2924 = vmatprep.subr.mxu0 0.0
  %2925 = vmatpush2.msra.mxu0 0.0
  %2926 = vmatprep.mubr.f32.mxu0 0.0
  %2927 = vmatmul.mubr.f32.gmra.mxu0 %v2857
  %v2928 = vpop.f32.mrf.mxu0
  %v2929 = vadd.f32 0.0, %v2928
  %v2930 = vpop.f32.mrf.mxu0
  %2931 = vmatprep.mubr.f32.mxu0 0.0
  %2932 = vmatmul.mubr.f32.gmra.mxu0 %v2860
  %v2933 = vpop.f32.mrf.mxu0
  %v2934 = vadd.f32 0.0, %v2933
  %v2935 = vpop.f32.mrf.mxu0
  %2936 = vdwg.mxu0
  %v2938 = vsel %vm156, %v2447, 0
  %v2941 = vsel %vm156, %v2523, 0
  %2943 = vmatprep.subr.mxu0 0.0
  %2944 = vmatpush1.msra.mxu0 0.0
  %2945 = vmatprep.subr.mxu0 0.0
  %2946 = vmatpush1.msra.mxu0 0.0
  %2947 = vmatprep.subr.mxu0 0.0
  %2948 = vmatpush1.msra.mxu0 0.0
  %2949 = vmatprep.subr.mxu0 0.0
  %2950 = vmatpush1.msra.mxu0 0.0
  %2951 = vmatprep.subr.mxu0 0.0
  %2952 = vmatpush1.msra.mxu0 0.0
  %2953 = vmatprep.subr.mxu0 0.0
  %2954 = vmatpush1.msra.mxu0 0.0
  %2955 = vmatprep.subr.mxu0 0.0
  %2956 = vmatpush1.msra.mxu0 0.0
  %2957 = vmatprep.subr.mxu0 0.0
  %2958 = vmatpush1.msra.mxu0 0.0
  %2959 = vmatprep.subr.mxu0 0.0
  %2960 = vmatpush1.msra.mxu0 0.0
  %2961 = vmatprep.subr.mxu0 0.0
  %2962 = vmatpush1.msra.mxu0 0.0
  %2963 = vmatprep.subr.mxu0 0.0
  %2964 = vmatpush1.msra.mxu0 0.0
  %2965 = vmatprep.subr.mxu0 0.0
  %2966 = vmatpush1.msra.mxu0 0.0
  %2967 = vmatprep.subr.mxu0 0.0
  %2968 = vmatpush1.msra.mxu0 0.0
  %2969 = vmatprep.subr.mxu0 0.0
  %2970 = vmatpush1.msra.mxu0 0.0
  %2971 = vmatprep.subr.mxu0 0.0
  %2972 = vmatpush1.msra.mxu0 0.0
  %2973 = vmatprep.subr.mxu0 0.0
  %2974 = vmatpush1.msra.mxu0 %v2190
  %2975 = vmatprep.subr.mxu0 0.0
  %2976 = vmatpush2.msra.mxu0 0.0
  %2977 = vmatprep.subr.mxu0 0.0
  %2978 = vmatpush2.msra.mxu0 0.0
  %2979 = vmatprep.subr.mxu0 0.0
  %2980 = vmatpush2.msra.mxu0 0.0
  %2981 = vmatprep.subr.mxu0 0.0
  %2982 = vmatpush2.msra.mxu0 0.0
  %2983 = vmatprep.subr.mxu0 0.0
  %2984 = vmatpush2.msra.mxu0 0.0
  %2985 = vmatprep.subr.mxu0 0.0
  %2986 = vmatpush2.msra.mxu0 0.0
  %2987 = vmatprep.subr.mxu0 0.0
  %2988 = vmatpush2.msra.mxu0 0.0
  %2989 = vmatprep.subr.mxu0 0.0
  %2990 = vmatpush2.msra.mxu0 0.0
  %2991 = vmatprep.subr.mxu0 0.0
  %2992 = vmatpush2.msra.mxu0 0.0
  %2993 = vmatprep.subr.mxu0 0.0
  %2994 = vmatpush2.msra.mxu0 0.0
  %2995 = vmatprep.subr.mxu0 0.0
  %2996 = vmatpush2.msra.mxu0 0.0
  %2997 = vmatprep.subr.mxu0 0.0
  %2998 = vmatpush2.msra.mxu0 0.0
  %2999 = vmatprep.subr.mxu0 0.0
  %3000 = vmatpush2.msra.mxu0 0.0
  %3001 = vmatprep.subr.mxu0 0.0
  %3002 = vmatpush2.msra.mxu0 0.0
  %3003 = vmatprep.subr.mxu0 0.0
  %3004 = vmatpush2.msra.mxu0 0.0
  %3005 = vmatprep.subr.mxu0 0.0
  %3006 = vmatpush2.msra.mxu0 0.0
  %3007 = vmatprep.mubr.f32.mxu0 0.0
  %3008 = vmatmul.mubr.f32.gmra.mxu0 %v2938
  %v3009 = vpop.f32.mrf.mxu0
  %v3010 = vadd.f32 %v2929, %v3009
  %v3011 = vpop.f32.mrf.mxu0
  %3012 = vmatprep.mubr.f32.mxu0 0.0
  %3013 = vmatmul.mubr.f32.gmra.mxu0 %v2941
  %v3014 = vpop.f32.mrf.mxu0
  %v3015 = vadd.f32 %v2934, %v3014
  %v3016 = vpop.f32.mrf.mxu0
  %3017 = vdwg.mxu0
  %3018 = vrot.lane.b32.xlu0 %v2194, 112
  %v3019 = vpop.permute.xlu0 %3018
  %3020 = vrot.lane.b32.xlu0 %v2181, 80
  %v3021 = vpop.permute.xlu0 %3020
  %v3022 = vsel %vm156, %v3019, 0
  %v3024 = vsel %vm156, %v3021, 0
  %3026 = vmatprep.subr.mxu0 0.0
  %3027 = vmatpush1.xpose.msra.mxu0 0.0
  %3028 = vmatprep.subr.mxu0 0.0
  %3029 = vmatpush1.xpose.msra.mxu0 0.0
  %3030 = vmatprep.subr.mxu0 0.0
  %3031 = vmatpush1.xpose.msra.mxu0 0.0
  %3032 = vmatprep.subr.mxu0 0.0
  %3033 = vmatpush1.xpose.msra.mxu0 0.0
  %3034 = vmatprep.subr.mxu0 0.0
  %3035 = vmatpush1.xpose.msra.mxu0 0.0
  %3036 = vmatprep.subr.mxu0 0.0
  %3037 = vmatpush1.xpose.msra.mxu0 0.0
  %3038 = vmatprep.subr.mxu0 0.0
  %3039 = vmatpush1.xpose.msra.mxu0 0.0
  %3040 = vmatprep.subr.mxu0 0.0
  %3041 = vmatpush1.xpose.msra.mxu0 0.0
  %3042 = vmatprep.subr.mxu0 0.0
  %3043 = vmatpush1.xpose.msra.mxu0 0.0
  %3044 = vmatprep.subr.mxu0 0.0
  %3045 = vmatpush1.xpose.msra.mxu0 0.0
  %3046 = vmatprep.subr.mxu0 0.0
  %3047 = vmatpush1.xpose.msra.mxu0 0.0
  %3048 = vmatprep.subr.mxu0 0.0
  %3049 = vmatpush1.xpose.msra.mxu0 0.0
  %3050 = vmatprep.subr.mxu0 0.0
  %3051 = vmatpush1.xpose.msra.mxu0 0.0
  %3052 = vmatprep.subr.mxu0 0.0
  %3053 = vmatpush1.xpose.msra.mxu0 0.0
  %3054 = vmatprep.subr.mxu0 0.0
  %3055 = vmatpush1.xpose.msra.mxu0 0.0
  %3056 = vmatprep.subr.mxu0 0.0
  %3057 = vmatpush1.xpose.msra.mxu0 %v3024
  %3058 = vmatprep.subr.mxu0 0.0
  %3059 = vmatpush2.xpose.msra.mxu0 0.0
  %3060 = vmatprep.subr.mxu0 0.0
  %3061 = vmatpush2.xpose.msra.mxu0 0.0
  %3062 = vmatprep.subr.mxu0 0.0
  %3063 = vmatpush2.xpose.msra.mxu0 0.0
  %3064 = vmatprep.subr.mxu0 0.0
  %3065 = vmatpush2.xpose.msra.mxu0 0.0
  %3066 = vmatprep.subr.mxu0 0.0
  %3067 = vmatpush2.xpose.msra.mxu0 0.0
  %3068 = vmatprep.subr.mxu0 0.0
  %3069 = vmatpush2.xpose.msra.mxu0 0.0
  %3070 = vmatprep.subr.mxu0 0.0
  %3071 = vmatpush2.xpose.msra.mxu0 0.0
  %3072 = vmatprep.subr.mxu0 0.0
  %3073 = vmatpush2.xpose.msra.mxu0 0.0
  %3074 = vmatprep.subr.mxu0 0.0
  %3075 = vmatpush2.xpose.msra.mxu0 0.0
  %3076 = vmatprep.subr.mxu0 0.0
  %3077 = vmatpush2.xpose.msra.mxu0 0.0
  %3078 = vmatprep.subr.mxu0 0.0
  %3079 = vmatpush2.xpose.msra.mxu0 0.0
  %3080 = vmatprep.subr.mxu0 0.0
  %3081 = vmatpush2.xpose.msra.mxu0 0.0
  %3082 = vmatprep.subr.mxu0 0.0
  %3083 = vmatpush2.xpose.msra.mxu0 0.0
  %3084 = vmatprep.subr.mxu0 0.0
  %3085 = vmatpush2.xpose.msra.mxu0 0.0
  %3086 = vmatprep.subr.mxu0 0.0
  %3087 = vmatpush2.xpose.msra.mxu0 0.0
  %3088 = vmatprep.subr.mxu0 0.0
  %3089 = vmatpush2.xpose.msra.mxu0 0.0
  %3090 = vmatprep.mubr.f32.mxu0 0.0
  %3091 = vmatmul.mubr.f32.gmra.mxu0 %v3022
  %v3092 = vpop.f32.mrf.mxu0
  %v3093 = vadd.f32 0.0, %v3092
  %v3094 = vpop.f32.mrf.mxu0
  %3095 = vdwg.mxu0
  %3096 = vrot.lane.b32.xlu0 %v2195, 112
  %v3097 = vpop.permute.xlu0 %3096
  %3098 = vrot.lane.b32.xlu0 %v2186, 80
  %v3099 = vpop.permute.xlu0 %3098
  %v3100 = vsel %vm156, %v3097, 0
  %v3102 = vsel %vm156, %v3099, 0
  %3104 = vmatprep.subr.mxu0 0.0
  %3105 = vmatpush1.xpose.msra.mxu0 0.0
  %3106 = vmatprep.subr.mxu0 0.0
  %3107 = vmatpush1.xpose.msra.mxu0 0.0
  %3108 = vmatprep.subr.mxu0 0.0
  %3109 = vmatpush1.xpose.msra.mxu0 0.0
  %3110 = vmatprep.subr.mxu0 0.0
  %3111 = vmatpush1.xpose.msra.mxu0 0.0
  %3112 = vmatprep.subr.mxu0 0.0
  %3113 = vmatpush1.xpose.msra.mxu0 0.0
  %3114 = vmatprep.subr.mxu0 0.0
  %3115 = vmatpush1.xpose.msra.mxu0 0.0
  %3116 = vmatprep.subr.mxu0 0.0
  %3117 = vmatpush1.xpose.msra.mxu0 0.0
  %3118 = vmatprep.subr.mxu0 0.0
  %3119 = vmatpush1.xpose.msra.mxu0 0.0
  %3120 = vmatprep.subr.mxu0 0.0
  %3121 = vmatpush1.xpose.msra.mxu0 0.0
  %3122 = vmatprep.subr.mxu0 0.0
  %3123 = vmatpush1.xpose.msra.mxu0 0.0
  %3124 = vmatprep.subr.mxu0 0.0
  %3125 = vmatpush1.xpose.msra.mxu0 0.0
  %3126 = vmatprep.subr.mxu0 0.0
  %3127 = vmatpush1.xpose.msra.mxu0 0.0
  %3128 = vmatprep.subr.mxu0 0.0
  %3129 = vmatpush1.xpose.msra.mxu0 0.0
  %3130 = vmatprep.subr.mxu0 0.0
  %3131 = vmatpush1.xpose.msra.mxu0 0.0
  %3132 = vmatprep.subr.mxu0 0.0
  %3133 = vmatpush1.xpose.msra.mxu0 0.0
  %3134 = vmatprep.subr.mxu0 0.0
  %3135 = vmatpush1.xpose.msra.mxu0 %v3102
  %3136 = vmatprep.subr.mxu0 0.0
  %3137 = vmatpush2.xpose.msra.mxu0 0.0
  %3138 = vmatprep.subr.mxu0 0.0
  %3139 = vmatpush2.xpose.msra.mxu0 0.0
  %3140 = vmatprep.subr.mxu0 0.0
  %3141 = vmatpush2.xpose.msra.mxu0 0.0
  %3142 = vmatprep.subr.mxu0 0.0
  %3143 = vmatpush2.xpose.msra.mxu0 0.0
  %3144 = vmatprep.subr.mxu0 0.0
  %3145 = vmatpush2.xpose.msra.mxu0 0.0
  %3146 = vmatprep.subr.mxu0 0.0
  %3147 = vmatpush2.xpose.msra.mxu0 0.0
  %3148 = vmatprep.subr.mxu0 0.0
  %3149 = vmatpush2.xpose.msra.mxu0 0.0
  %3150 = vmatprep.subr.mxu0 0.0
  %3151 = vmatpush2.xpose.msra.mxu0 0.0
  %3152 = vmatprep.subr.mxu0 0.0
  %3153 = vmatpush2.xpose.msra.mxu0 0.0
  %3154 = vmatprep.subr.mxu0 0.0
  %3155 = vmatpush2.xpose.msra.mxu0 0.0
  %3156 = vmatprep.subr.mxu0 0.0
  %3157 = vmatpush2.xpose.msra.mxu0 0.0
  %3158 = vmatprep.subr.mxu0 0.0
  %3159 = vmatpush2.xpose.msra.mxu0 0.0
  %3160 = vmatprep.subr.mxu0 0.0
  %3161 = vmatpush2.xpose.msra.mxu0 0.0
  %3162 = vmatprep.subr.mxu0 0.0
  %3163 = vmatpush2.xpose.msra.mxu0 0.0
  %3164 = vmatprep.subr.mxu0 0.0
  %3165 = vmatpush2.xpose.msra.mxu0 0.0
  %3166 = vmatprep.subr.mxu0 0.0
  %3167 = vmatpush2.xpose.msra.mxu0 0.0
  %3168 = vmatprep.mubr.f32.mxu0 0.0
  %3169 = vmatmul.mubr.f32.gmra.mxu0 %v3100
  %v3170 = vpop.f32.mrf.mxu0
  %v3171 = vadd.f32 0.0, %v3170
  %v3172 = vpop.f32.mrf.mxu0
  %3173 = vdwg.mxu0
  %v3174 = vsel %vm156, %v3093, -inf
  %3175 = vmax.xlane.f32.xlu0 %v3174
  %v3176 = vpop.xlane.xlu0 %3175
  %v3177 = vsel %vm156, %v3171, -inf
  %3178 = vmax.xlane.f32.xlu0 %v3177
  %v3179 = vpop.xlane.xlu0 %3178
  %v3180 = vsub.f32 %v3093, %v3176
  %v3181 = vsub.f32 %v3171, %v3179
  %v3182 = vmul.f32 %v3180, 1.442695
  %v3183 = vpow.pop %v3182
  %v3184 = vmul.f32 %v3181, 1.442695
  %v3185 = vpow.pop %v3184
  %v3186 = vsel %vm156, %v3183, 0.0
  %3187 = vadd.xlane.f32.xlu0 %v3186
  %v3188 = vpop.xlane.xlu0 %3187
  %v3189 = vsel %vm156, %v3185, 0.0
  %3190 = vadd.xlane.f32.xlu0 %v3189
  %v3191 = vpop.xlane.xlu0 %3190
  %v3192 = vrcp.pop %v3188
  %v3193 = vrcp.pop %v3191
  %v3194 = vmul.f32 %v3183, %v3192
  %v3195 = vmul.f32 %v3185, %v3193
  %3196 = vrot.lane.b32.xlu0 %v2181, 48
  %v3197 = vpop.permute.xlu0 %3196
  %v3200 = vsel %vm156, %v3194, 0
  %3202 = vmatprep.subr.mxu0 0.0
  %3203 = vmatpush1.msra.mxu0 0.0
  %3204 = vmatprep.subr.mxu0 0.0
  %3205 = vmatpush1.msra.mxu0 0.0
  %3206 = vmatprep.subr.mxu0 0.0
  %3207 = vmatpush1.msra.mxu0 0.0
  %3208 = vmatprep.subr.mxu0 0.0
  %3209 = vmatpush1.msra.mxu0 0.0
  %3210 = vmatprep.subr.mxu0 0.0
  %3211 = vmatpush1.msra.mxu0 0.0
  %3212 = vmatprep.subr.mxu0 0.0
  %3213 = vmatpush1.msra.mxu0 0.0
  %3214 = vmatprep.subr.mxu0 0.0
  %3215 = vmatpush1.msra.mxu0 0.0
  %3216 = vmatprep.subr.mxu0 0.0
  %3217 = vmatpush1.msra.mxu0 0.0
  %3218 = vmatprep.subr.mxu0 0.0
  %3219 = vmatpush1.msra.mxu0 0.0
  %3220 = vmatprep.subr.mxu0 0.0
  %3221 = vmatpush1.msra.mxu0 0.0
  %3222 = vmatprep.subr.mxu0 0.0
  %3223 = vmatpush1.msra.mxu0 0.0
  %3224 = vmatprep.subr.mxu0 0.0
  %3225 = vmatpush1.msra.mxu0 0.0
  %3226 = vmatprep.subr.mxu0 0.0
  %3227 = vmatpush1.msra.mxu0 0.0
  %3228 = vmatprep.subr.mxu0 0.0
  %3229 = vmatpush1.msra.mxu0 0.0
  %3230 = vmatprep.subr.mxu0 0.0
  %3231 = vmatpush1.msra.mxu0 0.0
  %3232 = vmatprep.subr.mxu0 0.0
  %3233 = vmatpush1.msra.mxu0 %v3197
  %3234 = vmatprep.subr.mxu0 0.0
  %3235 = vmatpush2.msra.mxu0 0.0
  %3236 = vmatprep.subr.mxu0 0.0
  %3237 = vmatpush2.msra.mxu0 0.0
  %3238 = vmatprep.subr.mxu0 0.0
  %3239 = vmatpush2.msra.mxu0 0.0
  %3240 = vmatprep.subr.mxu0 0.0
  %3241 = vmatpush2.msra.mxu0 0.0
  %3242 = vmatprep.subr.mxu0 0.0
  %3243 = vmatpush2.msra.mxu0 0.0
  %3244 = vmatprep.subr.mxu0 0.0
  %3245 = vmatpush2.msra.mxu0 0.0
  %3246 = vmatprep.subr.mxu0 0.0
  %3247 = vmatpush2.msra.mxu0 0.0
  %3248 = vmatprep.subr.mxu0 0.0
  %3249 = vmatpush2.msra.mxu0 0.0
  %3250 = vmatprep.subr.mxu0 0.0
  %3251 = vmatpush2.msra.mxu0 0.0
  %3252 = vmatprep.subr.mxu0 0.0
  %3253 = vmatpush2.msra.mxu0 0.0
  %3254 = vmatprep.subr.mxu0 0.0
  %3255 = vmatpush2.msra.mxu0 0.0
  %3256 = vmatprep.subr.mxu0 0.0
  %3257 = vmatpush2.msra.mxu0 0.0
  %3258 = vmatprep.subr.mxu0 0.0
  %3259 = vmatpush2.msra.mxu0 0.0
  %3260 = vmatprep.subr.mxu0 0.0
  %3261 = vmatpush2.msra.mxu0 0.0
  %3262 = vmatprep.subr.mxu0 0.0
  %3263 = vmatpush2.msra.mxu0 0.0
  %3264 = vmatprep.subr.mxu0 0.0
  %3265 = vmatpush2.msra.mxu0 0.0
  %3266 = vmatprep.mubr.f32.mxu0 0.0
  %3267 = vmatmul.mubr.f32.gmra.mxu0 %v3200
  %v3268 = vpop.f32.mrf.mxu0
  %v3269 = vadd.f32 0.0, %v3268
  %v3270 = vpop.f32.mrf.mxu0
  %3271 = vdwg.mxu0
  %3272 = vrot.lane.b32.xlu0 %v2186, 48
  %v3273 = vpop.permute.xlu0 %3272
  %v3276 = vsel %vm156, %v3195, 0
  %3278 = vmatprep.subr.mxu0 0.0
  %3279 = vmatpush1.msra.mxu0 0.0
  %3280 = vmatprep.subr.mxu0 0.0
  %3281 = vmatpush1.msra.mxu0 0.0
  %3282 = vmatprep.subr.mxu0 0.0
  %3283 = vmatpush1.msra.mxu0 0.0
  %3284 = vmatprep.subr.mxu0 0.0
  %3285 = vmatpush1.msra.mxu0 0.0
  %3286 = vmatprep.subr.mxu0 0.0
  %3287 = vmatpush1.msra.mxu0 0.0
  %3288 = vmatprep.subr.mxu0 0.0
  %3289 = vmatpush1.msra.mxu0 0.0
  %3290 = vmatprep.subr.mxu0 0.0
  %3291 = vmatpush1.msra.mxu0 0.0
  %3292 = vmatprep.subr.mxu0 0.0
  %3293 = vmatpush1.msra.mxu0 0.0
  %3294 = vmatprep.subr.mxu0 0.0
  %3295 = vmatpush1.msra.mxu0 0.0
  %3296 = vmatprep.subr.mxu0 0.0
  %3297 = vmatpush1.msra.mxu0 0.0
  %3298 = vmatprep.subr.mxu0 0.0
  %3299 = vmatpush1.msra.mxu0 0.0
  %3300 = vmatprep.subr.mxu0 0.0
  %3301 = vmatpush1.msra.mxu0 0.0
  %3302 = vmatprep.subr.mxu0 0.0
  %3303 = vmatpush1.msra.mxu0 0.0
  %3304 = vmatprep.subr.mxu0 0.0
  %3305 = vmatpush1.msra.mxu0 0.0
  %3306 = vmatprep.subr.mxu0 0.0
  %3307 = vmatpush1.msra.mxu0 0.0
  %3308 = vmatprep.subr.mxu0 0.0
  %3309 = vmatpush1.msra.mxu0 %v3273
  %3310 = vmatprep.subr.mxu0 0.0
  %3311 = vmatpush2.msra.mxu0 0.0
  %3312 = vmatprep.subr.mxu0 0.0
  %3313 = vmatpush2.msra.mxu0 0.0
  %3314 = vmatprep.subr.mxu0 0.0
  %3315 = vmatpush2.msra.mxu0 0.0
  %3316 = vmatprep.subr.mxu0 0.0
  %3317 = vmatpush2.msra.mxu0 0.0
  %3318 = vmatprep.subr.mxu0 0.0
  %3319 = vmatpush2.msra.mxu0 0.0
  %3320 = vmatprep.subr.mxu0 0.0
  %3321 = vmatpush2.msra.mxu0 0.0
  %3322 = vmatprep.subr.mxu0 0.0
  %3323 = vmatpush2.msra.mxu0 0.0
  %3324 = vmatprep.subr.mxu0 0.0
  %3325 = vmatpush2.msra.mxu0 0.0
  %3326 = vmatprep.subr.mxu0 0.0
  %3327 = vmatpush2.msra.mxu0 0.0
  %3328 = vmatprep.subr.mxu0 0.0
  %3329 = vmatpush2.msra.mxu0 0.0
  %3330 = vmatprep.subr.mxu0 0.0
  %3331 = vmatpush2.msra.mxu0 0.0
  %3332 = vmatprep.subr.mxu0 0.0
  %3333 = vmatpush2.msra.mxu0 0.0
  %3334 = vmatprep.subr.mxu0 0.0
  %3335 = vmatpush2.msra.mxu0 0.0
  %3336 = vmatprep.subr.mxu0 0.0
  %3337 = vmatpush2.msra.mxu0 0.0
  %3338 = vmatprep.subr.mxu0 0.0
  %3339 = vmatpush2.msra.mxu0 0.0
  %3340 = vmatprep.subr.mxu0 0.0
  %3341 = vmatpush2.msra.mxu0 0.0
  %3342 = vmatprep.mubr.f32.mxu0 0.0
  %3343 = vmatmul.mubr.f32.gmra.mxu0 %v3276
  %v3344 = vpop.f32.mrf.mxu0
  %v3345 = vadd.f32 0.0, %v3344
  %v3346 = vpop.f32.mrf.mxu0
  %3347 = vdwg.mxu0
  %v3349 = vsel %vm156, %v3269, 0
  %v3352 = vsel %vm156, %v3345, 0
  %3354 = vmatprep.subr.mxu0 0.0
  %3355 = vmatpush1.msra.mxu0 0.0
  %3356 = vmatprep.subr.mxu0 0.0
  %3357 = vmatpush1.msra.mxu0 0.0
  %3358 = vmatprep.subr.mxu0 0.0
  %3359 = vmatpush1.msra.mxu0 0.0
  %3360 = vmatprep.subr.mxu0 0.0
  %3361 = vmatpush1.msra.mxu0 0.0
  %3362 = vmatprep.subr.mxu0 0.0
  %3363 = vmatpush1.msra.mxu0 0.0
  %3364 = vmatprep.subr.mxu0 0.0
  %3365 = vmatpush1.msra.mxu0 0.0
  %3366 = vmatprep.subr.mxu0 0.0
  %3367 = vmatpush1.msra.mxu0 0.0
  %3368 = vmatprep.subr.mxu0 0.0
  %3369 = vmatpush1.msra.mxu0 0.0
  %3370 = vmatprep.subr.mxu0 0.0
  %3371 = vmatpush1.msra.mxu0 0.0
  %3372 = vmatprep.subr.mxu0 0.0
  %3373 = vmatpush1.msra.mxu0 0.0
  %3374 = vmatprep.subr.mxu0 0.0
  %3375 = vmatpush1.msra.mxu0 0.0
  %3376 = vmatprep.subr.mxu0 0.0
  %3377 = vmatpush1.msra.mxu0 0.0
  %3378 = vmatprep.subr.mxu0 0.0
  %3379 = vmatpush1.msra.mxu0 0.0
  %3380 = vmatprep.subr.mxu0 0.0
  %3381 = vmatpush1.msra.mxu0 0.0
  %3382 = vmatprep.subr.mxu0 0.0
  %3383 = vmatpush1.msra.mxu0 0.0
  %3384 = vmatprep.subr.mxu0 0.0
  %3385 = vmatpush1.msra.mxu0 %v2192
  %3386 = vmatprep.subr.mxu0 0.0
  %3387 = vmatpush2.msra.mxu0 0.0
  %3388 = vmatprep.subr.mxu0 0.0
  %3389 = vmatpush2.msra.mxu0 0.0
  %3390 = vmatprep.subr.mxu0 0.0
  %3391 = vmatpush2.msra.mxu0 0.0
  %3392 = vmatprep.subr.mxu0 0.0
  %3393 = vmatpush2.msra.mxu0 0.0
  %3394 = vmatprep.subr.mxu0 0.0
  %3395 = vmatpush2.msra.mxu0 0.0
  %3396 = vmatprep.subr.mxu0 0.0
  %3397 = vmatpush2.msra.mxu0 0.0
  %3398 = vmatprep.subr.mxu0 0.0
  %3399 = vmatpush2.msra.mxu0 0.0
  %3400 = vmatprep.subr.mxu0 0.0
  %3401 = vmatpush2.msra.mxu0 0.0
  %3402 = vmatprep.subr.mxu0 0.0
  %3403 = vmatpush2.msra.mxu0 0.0
  %3404 = vmatprep.subr.mxu0 0.0
  %3405 = vmatpush2.msra.mxu0 0.0
  %3406 = vmatprep.subr.mxu0 0.0
  %3407 = vmatpush2.msra.mxu0 0.0
  %3408 = vmatprep.subr.mxu0 0.0
  %3409 = vmatpush2.msra.mxu0 0.0
  %3410 = vmatprep.subr.mxu0 0.0
  %3411 = vmatpush2.msra.mxu0 0.0
  %3412 = vmatprep.subr.mxu0 0.0
  %3413 = vmatpush2.msra.mxu0 0.0
  %3414 = vmatprep.subr.mxu0 0.0
  %3415 = vmatpush2.msra.mxu0 0.0
  %3416 = vmatprep.subr.mxu0 0.0
  %3417 = vmatpush2.msra.mxu0 0.0
  %3418 = vmatprep.mubr.f32.mxu0 0.0
  %3419 = vmatmul.mubr.f32.gmra.mxu0 %v3349
  %v3420 = vpop.f32.mrf.mxu0
  %v3421 = vadd.f32 0.0, %v3420
  %v3422 = vpop.f32.mrf.mxu0
  %3423 = vmatprep.mubr.f32.mxu0 0.0
  %3424 = vmatmul.mubr.f32.gmra.mxu0 %v3352
  %v3425 = vpop.f32.mrf.mxu0
  %v3426 = vadd.f32 0.0, %v3425
  %v3427 = vpop.f32.mrf.mxu0
  %3428 = vdwg.mxu0
  %v3429 = vadd.f32 %v3010, %v3421
  %v3430 = vadd.f32 %v3015, %v3426
  %3431 = vrot.lane.b32.xlu0 %v2194, 104
  %v3432 = vpop.permute.xlu0 %3431
  %3433 = vrot.lane.b32.xlu0 %v2181, 72
  %v3434 = vpop.permute.xlu0 %3433
  %v3435 = vsel %vm156, %v3432, 0
  %v3437 = vsel %vm156, %v3434, 0
  %3439 = vmatprep.subr.mxu0 0.0
  %3440 = vmatpush1.xpose.msra.mxu0 0.0
  %3441 = vmatprep.subr.mxu0 0.0
  %3442 = vmatpush1.xpose.msra.mxu0 0.0
  %3443 = vmatprep.subr.mxu0 0.0
  %3444 = vmatpush1.xpose.msra.mxu0 0.0
  %3445 = vmatprep.subr.mxu0 0.0
  %3446 = vmatpush1.xpose.msra.mxu0 0.0
  %3447 = vmatprep.subr.mxu0 0.0
  %3448 = vmatpush1.xpose.msra.mxu0 0.0
  %3449 = vmatprep.subr.mxu0 0.0
  %3450 = vmatpush1.xpose.msra.mxu0 0.0
  %3451 = vmatprep.subr.mxu0 0.0
  %3452 = vmatpush1.xpose.msra.mxu0 0.0
  %3453 = vmatprep.subr.mxu0 0.0
  %3454 = vmatpush1.xpose.msra.mxu0 0.0
  %3455 = vmatprep.subr.mxu0 0.0
  %3456 = vmatpush1.xpose.msra.mxu0 0.0
  %3457 = vmatprep.subr.mxu0 0.0
  %3458 = vmatpush1.xpose.msra.mxu0 0.0
  %3459 = vmatprep.subr.mxu0 0.0
  %3460 = vmatpush1.xpose.msra.mxu0 0.0
  %3461 = vmatprep.subr.mxu0 0.0
  %3462 = vmatpush1.xpose.msra.mxu0 0.0
  %3463 = vmatprep.subr.mxu0 0.0
  %3464 = vmatpush1.xpose.msra.mxu0 0.0
  %3465 = vmatprep.subr.mxu0 0.0
  %3466 = vmatpush1.xpose.msra.mxu0 0.0
  %3467 = vmatprep.subr.mxu0 0.0
  %3468 = vmatpush1.xpose.msra.mxu0 0.0
  %3469 = vmatprep.subr.mxu0 0.0
  %3470 = vmatpush1.xpose.msra.mxu0 %v3437
  %3471 = vmatprep.subr.mxu0 0.0
  %3472 = vmatpush2.xpose.msra.mxu0 0.0
  %3473 = vmatprep.subr.mxu0 0.0
  %3474 = vmatpush2.xpose.msra.mxu0 0.0
  %3475 = vmatprep.subr.mxu0 0.0
  %3476 = vmatpush2.xpose.msra.mxu0 0.0
  %3477 = vmatprep.subr.mxu0 0.0
  %3478 = vmatpush2.xpose.msra.mxu0 0.0
  %3479 = vmatprep.subr.mxu0 0.0
  %3480 = vmatpush2.xpose.msra.mxu0 0.0
  %3481 = vmatprep.subr.mxu0 0.0
  %3482 = vmatpush2.xpose.msra.mxu0 0.0
  %3483 = vmatprep.subr.mxu0 0.0
  %3484 = vmatpush2.xpose.msra.mxu0 0.0
  %3485 = vmatprep.subr.mxu0 0.0
  %3486 = vmatpush2.xpose.msra.mxu0 0.0
  %3487 = vmatprep.subr.mxu0 0.0
  %3488 = vmatpush2.xpose.msra.mxu0 0.0
  %3489 = vmatprep.subr.mxu0 0.0
  %3490 = vmatpush2.xpose.msra.mxu0 0.0
  %3491 = vmatprep.subr.mxu0 0.0
  %3492 = vmatpush2.xpose.msra.mxu0 0.0
  %3493 = vmatprep.subr.mxu0 0.0
  %3494 = vmatpush2.xpose.msra.mxu0 0.0
  %3495 = vmatprep.subr.mxu0 0.0
  %3496 = vmatpush2.xpose.msra.mxu0 0.0
  %3497 = vmatprep.subr.mxu0 0.0
  %3498 = vmatpush2.xpose.msra.mxu0 0.0
  %3499 = vmatprep.subr.mxu0 0.0
  %3500 = vmatpush2.xpose.msra.mxu0 0.0
  %3501 = vmatprep.subr.mxu0 0.0
  %3502 = vmatpush2.xpose.msra.mxu0 0.0
  %3503 = vmatprep.mubr.f32.mxu0 0.0
  %3504 = vmatmul.mubr.f32.gmra.mxu0 %v3435
  %v3505 = vpop.f32.mrf.mxu0
  %v3506 = vadd.f32 0.0, %v3505
  %v3507 = vpop.f32.mrf.mxu0
  %3508 = vdwg.mxu0
  %3509 = vrot.lane.b32.xlu0 %v2195, 104
  %v3510 = vpop.permute.xlu0 %3509
  %3511 = vrot.lane.b32.xlu0 %v2186, 72
  %v3512 = vpop.permute.xlu0 %3511
  %v3513 = vsel %vm156, %v3510, 0
  %v3515 = vsel %vm156, %v3512, 0
  %3517 = vmatprep.subr.mxu0 0.0
  %3518 = vmatpush1.xpose.msra.mxu0 0.0
  %3519 = vmatprep.subr.mxu0 0.0
  %3520 = vmatpush1.xpose.msra.mxu0 0.0
  %3521 = vmatprep.subr.mxu0 0.0
  %3522 = vmatpush1.xpose.msra.mxu0 0.0
  %3523 = vmatprep.subr.mxu0 0.0
  %3524 = vmatpush1.xpose.msra.mxu0 0.0
  %3525 = vmatprep.subr.mxu0 0.0
  %3526 = vmatpush1.xpose.msra.mxu0 0.0
  %3527 = vmatprep.subr.mxu0 0.0
  %3528 = vmatpush1.xpose.msra.mxu0 0.0
  %3529 = vmatprep.subr.mxu0 0.0
  %3530 = vmatpush1.xpose.msra.mxu0 0.0
  %3531 = vmatprep.subr.mxu0 0.0
  %3532 = vmatpush1.xpose.msra.mxu0 0.0
  %3533 = vmatprep.subr.mxu0 0.0
  %3534 = vmatpush1.xpose.msra.mxu0 0.0
  %3535 = vmatprep.subr.mxu0 0.0
  %3536 = vmatpush1.xpose.msra.mxu0 0.0
  %3537 = vmatprep.subr.mxu0 0.0
  %3538 = vmatpush1.xpose.msra.mxu0 0.0
  %3539 = vmatprep.subr.mxu0 0.0
  %3540 = vmatpush1.xpose.msra.mxu0 0.0
  %3541 = vmatprep.subr.mxu0 0.0
  %3542 = vmatpush1.xpose.msra.mxu0 0.0
  %3543 = vmatprep.subr.mxu0 0.0
  %3544 = vmatpush1.xpose.msra.mxu0 0.0
  %3545 = vmatprep.subr.mxu0 0.0
  %3546 = vmatpush1.xpose.msra.mxu0 0.0
  %3547 = vmatprep.subr.mxu0 0.0
  %3548 = vmatpush1.xpose.msra.mxu0 %v3515
  %3549 = vmatprep.subr.mxu0 0.0
  %3550 = vmatpush2.xpose.msra.mxu0 0.0
  %3551 = vmatprep.subr.mxu0 0.0
  %3552 = vmatpush2.xpose.msra.mxu0 0.0
  %3553 = vmatprep.subr.mxu0 0.0
  %3554 = vmatpush2.xpose.msra.mxu0 0.0
  %3555 = vmatprep.subr.mxu0 0.0
  %3556 = vmatpush2.xpose.msra.mxu0 0.0
  %3557 = vmatprep.subr.mxu0 0.0
  %3558 = vmatpush2.xpose.msra.mxu0 0.0
  %3559 = vmatprep.subr.mxu0 0.0
  %3560 = vmatpush2.xpose.msra.mxu0 0.0
  %3561 = vmatprep.subr.mxu0 0.0
  %3562 = vmatpush2.xpose.msra.mxu0 0.0
  %3563 = vmatprep.subr.mxu0 0.0
  %3564 = vmatpush2.xpose.msra.mxu0 0.0
  %3565 = vmatprep.subr.mxu0 0.0
  %3566 = vmatpush2.xpose.msra.mxu0 0.0
  %3567 = vmatprep.subr.mxu0 0.0
  %3568 = vmatpush2.xpose.msra.mxu0 0.0
  %3569 = vmatprep.subr.mxu0 0.0
  %3570 = vmatpush2.xpose.msra.mxu0 0.0
  %3571 = vmatprep.subr.mxu0 0.0
  %3572 = vmatpush2.xpose.msra.mxu0 0.0
  %3573 = vmatprep.subr.mxu0 0.0
  %3574 = vmatpush2.xpose.msra.mxu0 0.0
  %3575 = vmatprep.subr.mxu0 0.0
  %3576 = vmatpush2.xpose.msra.mxu0 0.0
  %3577 = vmatprep.subr.mxu0 0.0
  %3578 = vmatpush2.xpose.msra.mxu0 0.0
  %3579 = vmatprep.subr.mxu0 0.0
  %3580 = vmatpush2.xpose.msra.mxu0 0.0
  %3581 = vmatprep.mubr.f32.mxu0 0.0
  %3582 = vmatmul.mubr.f32.gmra.mxu0 %v3513
  %v3583 = vpop.f32.mrf.mxu0
  %v3584 = vadd.f32 0.0, %v3583
  %v3585 = vpop.f32.mrf.mxu0
  %3586 = vdwg.mxu0
  %v3587 = vsel %vm156, %v3506, -inf
  %3588 = vmax.xlane.f32.xlu0 %v3587
  %v3589 = vpop.xlane.xlu0 %3588
  %v3590 = vsel %vm156, %v3584, -inf
  %3591 = vmax.xlane.f32.xlu0 %v3590
  %v3592 = vpop.xlane.xlu0 %3591
  %v3593 = vsub.f32 %v3506, %v3589
  %v3594 = vsub.f32 %v3584, %v3592
  %v3595 = vmul.f32 %v3593, 1.442695
  %v3596 = vpow.pop %v3595
  %v3597 = vmul.f32 %v3594, 1.442695
  %v3598 = vpow.pop %v3597
  %v3599 = vsel %vm156, %v3596, 0.0
  %3600 = vadd.xlane.f32.xlu0 %v3599
  %v3601 = vpop.xlane.xlu0 %3600
  %v3602 = vsel %vm156, %v3598, 0.0
  %3603 = vadd.xlane.f32.xlu0 %v3602
  %v3604 = vpop.xlane.xlu0 %3603
  %v3605 = vrcp.pop %v3601
  %v3606 = vrcp.pop %v3604
  %v3607 = vmul.f32 %v3596, %v3605
  %v3608 = vmul.f32 %v3598, %v3606
  %3609 = vrot.lane.b32.xlu0 %v2181, 40
  %v3610 = vpop.permute.xlu0 %3609
  %v3613 = vsel %vm156, %v3607, 0
  %3615 = vmatprep.subr.mxu0 0.0
  %3616 = vmatpush1.msra.mxu0 0.0
  %3617 = vmatprep.subr.mxu0 0.0
  %3618 = vmatpush1.msra.mxu0 0.0
  %3619 = vmatprep.subr.mxu0 0.0
  %3620 = vmatpush1.msra.mxu0 0.0
  %3621 = vmatprep.subr.mxu0 0.0
  %3622 = vmatpush1.msra.mxu0 0.0
  %3623 = vmatprep.subr.mxu0 0.0
  %3624 = vmatpush1.msra.mxu0 0.0
  %3625 = vmatprep.subr.mxu0 0.0
  %3626 = vmatpush1.msra.mxu0 0.0
  %3627 = vmatprep.subr.mxu0 0.0
  %3628 = vmatpush1.msra.mxu0 0.0
  %3629 = vmatprep.subr.mxu0 0.0
  %3630 = vmatpush1.msra.mxu0 0.0
  %3631 = vmatprep.subr.mxu0 0.0
  %3632 = vmatpush1.msra.mxu0 0.0
  %3633 = vmatprep.subr.mxu0 0.0
  %3634 = vmatpush1.msra.mxu0 0.0
  %3635 = vmatprep.subr.mxu0 0.0
  %3636 = vmatpush1.msra.mxu0 0.0
  %3637 = vmatprep.subr.mxu0 0.0
  %3638 = vmatpush1.msra.mxu0 0.0
  %3639 = vmatprep.subr.mxu0 0.0
  %3640 = vmatpush1.msra.mxu0 0.0
  %3641 = vmatprep.subr.mxu0 0.0
  %3642 = vmatpush1.msra.mxu0 0.0
  %3643 = vmatprep.subr.mxu0 0.0
  %3644 = vmatpush1.msra.mxu0 0.0
  %3645 = vmatprep.subr.mxu0 0.0
  %3646 = vmatpush1.msra.mxu0 %v3610
  %3647 = vmatprep.subr.mxu0 0.0
  %3648 = vmatpush2.msra.mxu0 0.0
  %3649 = vmatprep.subr.mxu0 0.0
  %3650 = vmatpush2.msra.mxu0 0.0
  %3651 = vmatprep.subr.mxu0 0.0
  %3652 = vmatpush2.msra.mxu0 0.0
  %3653 = vmatprep.subr.mxu0 0.0
  %3654 = vmatpush2.msra.mxu0 0.0
  %3655 = vmatprep.subr.mxu0 0.0
  %3656 = vmatpush2.msra.mxu0 0.0
  %3657 = vmatprep.subr.mxu0 0.0
  %3658 = vmatpush2.msra.mxu0 0.0
  %3659 = vmatprep.subr.mxu0 0.0
  %3660 = vmatpush2.msra.mxu0 0.0
  %3661 = vmatprep.subr.mxu0 0.0
  %3662 = vmatpush2.msra.mxu0 0.0
  %3663 = vmatprep.subr.mxu0 0.0
  %3664 = vmatpush2.msra.mxu0 0.0
  %3665 = vmatprep.subr.mxu0 0.0
  %3666 = vmatpush2.msra.mxu0 0.0
  %3667 = vmatprep.subr.mxu0 0.0
  %3668 = vmatpush2.msra.mxu0 0.0
  %3669 = vmatprep.subr.mxu0 0.0
  %3670 = vmatpush2.msra.mxu0 0.0
  %3671 = vmatprep.subr.mxu0 0.0
  %3672 = vmatpush2.msra.mxu0 0.0
  %3673 = vmatprep.subr.mxu0 0.0
  %3674 = vmatpush2.msra.mxu0 0.0
  %3675 = vmatprep.subr.mxu0 0.0
  %3676 = vmatpush2.msra.mxu0 0.0
  %3677 = vmatprep.subr.mxu0 0.0
  %3678 = vmatpush2.msra.mxu0 0.0
  %3679 = vmatprep.mubr.f32.mxu0 0.0
  %3680 = vmatmul.mubr.f32.gmra.mxu0 %v3613
  %v3681 = vpop.f32.mrf.mxu0
  %v3682 = vadd.f32 0.0, %v3681
  %v3683 = vpop.f32.mrf.mxu0
  %3684 = vdwg.mxu0
  %3685 = vrot.lane.b32.xlu0 %v2186, 40
  %v3686 = vpop.permute.xlu0 %3685
  %v3689 = vsel %vm156, %v3608, 0
  %3691 = vmatprep.subr.mxu0 0.0
  %3692 = vmatpush1.msra.mxu0 0.0
  %3693 = vmatprep.subr.mxu0 0.0
  %3694 = vmatpush1.msra.mxu0 0.0
  %3695 = vmatprep.subr.mxu0 0.0
  %3696 = vmatpush1.msra.mxu0 0.0
  %3697 = vmatprep.subr.mxu0 0.0
  %3698 = vmatpush1.msra.mxu0 0.0
  %3699 = vmatprep.subr.mxu0 0.0
  %3700 = vmatpush1.msra.mxu0 0.0
  %3701 = vmatprep.subr.mxu0 0.0
  %3702 = vmatpush1.msra.mxu0 0.0
  %3703 = vmatprep.subr.mxu0 0.0
  %3704 = vmatpush1.msra.mxu0 0.0
  %3705 = vmatprep.subr.mxu0 0.0
  %3706 = vmatpush1.msra.mxu0 0.0
  %3707 = vmatprep.subr.mxu0 0.0
  %3708 = vmatpush1.msra.mxu0 0.0
  %3709 = vmatprep.subr.mxu0 0.0
  %3710 = vmatpush1.msra.mxu0 0.0
  %3711 = vmatprep.subr.mxu0 0.0
  %3712 = vmatpush1.msra.mxu0 0.0
  %3713 = vmatprep.subr.mxu0 0.0
  %3714 = vmatpush1.msra.mxu0 0.0
  %3715 = vmatprep.subr.mxu0 0.0
  %3716 = vmatpush1.msra.mxu0 0.0
  %3717 = vmatprep.subr.mxu0 0.0
  %3718 = vmatpush1.msra.mxu0 0.0
  %3719 = vmatprep.subr.mxu0 0.0
  %3720 = vmatpush1.msra.mxu0 0.0
  %3721 = vmatprep.subr.mxu0 0.0
  %3722 = vmatpush1.msra.mxu0 %v3686
  %3723 = vmatprep.subr.mxu0 0.0
  %3724 = vmatpush2.msra.mxu0 0.0
  %3725 = vmatprep.subr.mxu0 0.0
  %3726 = vmatpush2.msra.mxu0 0.0
  %3727 = vmatprep.subr.mxu0 0.0
  %3728 = vmatpush2.msra.mxu0 0.0
  %3729 = vmatprep.subr.mxu0 0.0
  %3730 = vmatpush2.msra.mxu0 0.0
  %3731 = vmatprep.subr.mxu0 0.0
  %3732 = vmatpush2.msra.mxu0 0.0
  %3733 = vmatprep.subr.mxu0 0.0
  %3734 = vmatpush2.msra.mxu0 0.0
  %3735 = vmatprep.subr.mxu0 0.0
  %3736 = vmatpush2.msra.mxu0 0.0
  %3737 = vmatprep.subr.mxu0 0.0
  %3738 = vmatpush2.msra.mxu0 0.0
  %3739 = vmatprep.subr.mxu0 0.0
  %3740 = vmatpush2.msra.mxu0 0.0
  %3741 = vmatprep.subr.mxu0 0.0
  %3742 = vmatpush2.msra.mxu0 0.0
  %3743 = vmatprep.subr.mxu0 0.0
  %3744 = vmatpush2.msra.mxu0 0.0
  %3745 = vmatprep.subr.mxu0 0.0
  %3746 = vmatpush2.msra.mxu0 0.0
  %3747 = vmatprep.subr.mxu0 0.0
  %3748 = vmatpush2.msra.mxu0 0.0
  %3749 = vmatprep.subr.mxu0 0.0
  %3750 = vmatpush2.msra.mxu0 0.0
  %3751 = vmatprep.subr.mxu0 0.0
  %3752 = vmatpush2.msra.mxu0 0.0
  %3753 = vmatprep.subr.mxu0 0.0
  %3754 = vmatpush2.msra.mxu0 0.0
  %3755 = vmatprep.mubr.f32.mxu0 0.0
  %3756 = vmatmul.mubr.f32.gmra.mxu0 %v3689
  %v3757 = vpop.f32.mrf.mxu0
  %v3758 = vadd.f32 0.0, %v3757
  %v3759 = vpop.f32.mrf.mxu0
  %3760 = vdwg.mxu0
  %v3762 = vsel %vm156, %v3682, 0
  %v3765 = vsel %vm156, %v3758, 0
  %3767 = vmatprep.subr.mxu0 0.0
  %3768 = vmatpush1.msra.mxu0 0.0
  %3769 = vmatprep.subr.mxu0 0.0
  %3770 = vmatpush1.msra.mxu0 0.0
  %3771 = vmatprep.subr.mxu0 0.0
  %3772 = vmatpush1.msra.mxu0 0.0
  %3773 = vmatprep.subr.mxu0 0.0
  %3774 = vmatpush1.msra.mxu0 0.0
  %3775 = vmatprep.subr.mxu0 0.0
  %3776 = vmatpush1.msra.mxu0 0.0
  %3777 = vmatprep.subr.mxu0 0.0
  %3778 = vmatpush1.msra.mxu0 0.0
  %3779 = vmatprep.subr.mxu0 0.0
  %3780 = vmatpush1.msra.mxu0 0.0
  %3781 = vmatprep.subr.mxu0 0.0
  %3782 = vmatpush1.msra.mxu0 0.0
  %3783 = vmatprep.subr.mxu0 0.0
  %3784 = vmatpush1.msra.mxu0 0.0
  %3785 = vmatprep.subr.mxu0 0.0
  %3786 = vmatpush1.msra.mxu0 0.0
  %3787 = vmatprep.subr.mxu0 0.0
  %3788 = vmatpush1.msra.mxu0 0.0
  %3789 = vmatprep.subr.mxu0 0.0
  %3790 = vmatpush1.msra.mxu0 0.0
  %3791 = vmatprep.subr.mxu0 0.0
  %3792 = vmatpush1.msra.mxu0 0.0
  %3793 = vmatprep.subr.mxu0 0.0
  %3794 = vmatpush1.msra.mxu0 0.0
  %3795 = vmatprep.subr.mxu0 0.0
  %3796 = vmatpush1.msra.mxu0 0.0
  %3797 = vmatprep.subr.mxu0 0.0
  %3798 = vmatpush1.msra.mxu0 %v2193
  %3799 = vmatprep.subr.mxu0 0.0
  %3800 = vmatpush2.msra.mxu0 0.0
  %3801 = vmatprep.subr.mxu0 0.0
  %3802 = vmatpush2.msra.mxu0 0.0
  %3803 = vmatprep.subr.mxu0 0.0
  %3804 = vmatpush2.msra.mxu0 0.0
  %3805 = vmatprep.subr.mxu0 0.0
  %3806 = vmatpush2.msra.mxu0 0.0
  %3807 = vmatprep.subr.mxu0 0.0
  %3808 = vmatpush2.msra.mxu0 0.0
  %3809 = vmatprep.subr.mxu0 0.0
  %3810 = vmatpush2.msra.mxu0 0.0
  %3811 = vmatprep.subr.mxu0 0.0
  %3812 = vmatpush2.msra.mxu0 0.0
  %3813 = vmatprep.subr.mxu0 0.0
  %3814 = vmatpush2.msra.mxu0 0.0
  %3815 = vmatprep.subr.mxu0 0.0
  %3816 = vmatpush2.msra.mxu0 0.0
  %3817 = vmatprep.subr.mxu0 0.0
  %3818 = vmatpush2.msra.mxu0 0.0
  %3819 = vmatprep.subr.mxu0 0.0
  %3820 = vmatpush2.msra.mxu0 0.0
  %3821 = vmatprep.subr.mxu0 0.0
  %3822 = vmatpush2.msra.mxu0 0.0
  %3823 = vmatprep.subr.mxu0 0.0
  %3824 = vmatpush2.msra.mxu0 0.0
  %3825 = vmatprep.subr.mxu0 0.0
  %3826 = vmatpush2.msra.mxu0 0.0
  %3827 = vmatprep.subr.mxu0 0.0
  %3828 = vmatpush2.msra.mxu0 0.0
  %3829 = vmatprep.subr.mxu0 0.0
  %3830 = vmatpush2.msra.mxu0 0.0
  %3831 = vmatprep.mubr.f32.mxu0 0.0
  %3832 = vmatmul.mubr.f32.gmra.mxu0 %v3762
  %v3833 = vpop.f32.mrf.mxu0
  %v3834 = vadd.f32 0.0, %v3833
  %v3835 = vpop.f32.mrf.mxu0
  %3836 = vmatprep.mubr.f32.mxu0 0.0
  %3837 = vmatmul.mubr.f32.gmra.mxu0 %v3765
  %v3838 = vpop.f32.mrf.mxu0
  %v3839 = vadd.f32 0.0, %v3838
  %v3840 = vpop.f32.mrf.mxu0
  %3841 = vdwg.mxu0
  %v3842 = vadd.f32 %v3429, %v3834
  %v3843 = vadd.f32 %v3430, %v3839
  %s3844 = scalar_lea.vmem %s4, 1
  %v3845 = vld [vmem:[%s3844] sm:$0x1]
  %v3847 = vlaneseq
  %v3848 = vshrl.u32 %v3847, 7
  %v3849 = vsub.s32 0, %v3848
  %v3850 = vrot.slane %v3845, %v3849
  %v3852 = vadd.f32 %v3842, %v3850
  %v3853 = vadd.f32 %v3843, %v3850
  %v3854 = vadd.f32 %v2093, %v3852
  %v3855 = vadd.f32 %v2094, %v3853
  %v3856 = vsel %vm65, %v3854, 0.0
  %3857 = vadd.xlane.f32.xlu0 %v3856
  %v3858 = vpop.xlane.xlu0 %3857
  %v3859 = vsel %vm65, %v3855, 0.0
  %3860 = vadd.xlane.f32.xlu0 %v3859
  %v3861 = vpop.xlane.xlu0 %3860
  %v3862 = vmul.f32 %v3858, %v1819
  %v3863 = vmul.f32 %v3861, %v1819
  %v3864 = vsub.f32 %v3854, %v3862
  %v3865 = vsub.f32 %v3855, %v3863
  %v3866 = vmul.f32 %v3864, %v3864
  %v3867 = vmul.f32 %v3865, %v3865
  %v3868 = vsel %vm65, %v3866, 0.0
  %3869 = vadd.xlane.f32.xlu0 %v3868
  %v3870 = vpop.xlane.xlu0 %3869
  %v3871 = vsel %vm65, %v3867, 0.0
  %3872 = vadd.xlane.f32.xlu0 %v3871
  %v3873 = vpop.xlane.xlu0 %3872
  %v3874 = vmul.f32 %v3870, %v1819
  %v3875 = vmul.f32 %v3873, %v1819
  %v3876 = vadd.f32 %v3874, 1e-05
  %v3877 = vadd.f32 %v3875, 1e-05
  %v3878 = vrsqrt.pop %v3876
  %v3879 = vrsqrt.pop %v3877
  %v3880 = vmul.f32 %v3864, %v3878
  %v3881 = vmul.f32 %v3865, %v3879
  %s3882 = scalar_lea.vmem %s5, 1
  %v3883 = vld [vmem:[%s3882] sm:$0x1]
  %v3885 = vlaneseq
  %v3886 = vshrl.u32 %v3885, 7
  %v3887 = vsub.s32 0, %v3886
  %v3888 = vrot.slane %v3883, %v3887
  %v3890 = vmul.f32 %v3880, %v3888
  %v3891 = vmul.f32 %v3881, %v3888
  %s3892 = scalar_lea.vmem %s6, 1
  %v3893 = vld [vmem:[%s3892] sm:$0x1]
  %v3895 = vlaneseq
  %v3896 = vshrl.u32 %v3895, 7
  %v3897 = vsub.s32 0, %v3896
  %v3898 = vrot.slane %v3893, %v3897
  %v3900 = vadd.f32 %v3890, %v3898
  %v3901 = vadd.f32 %v3891, %v3898
  %s3902 = scalar_lea.vmem %s7, 32
  %v3903 = vld [vmem:[%s3902] sm:$0xff]
  %v3904 = vld [vmem:[%s3902 + $0x8] sm:$0xff]
  %v3905 = vld [vmem:[%s3902 + $0x10] sm:$0xff]
  %v3906 = vld [vmem:[%s3902 + $0x18] sm:$0xff]
  %s3907 = scalar_lea.vmem %s8, 1
  %v3908 = vld [vmem:[%s3907] sm:$0x1]
  %v3910 = vlaneseq
  %v3911 = vshrl.u32 %v3910, 7
  %v3912 = vsub.s32 0, %v3911
  %v3913 = vrot.slane %v3908, %v3912
  %v3916 = vsel %vm65, %v3900, 0
  %v3919 = vsel %vm65, %v3901, 0
  %3921 = vmatprep.subr.mxu0 0.0
  %3922 = vmatpush1.msra.mxu0 0.0
  %3923 = vmatprep.subr.mxu0 0.0
  %3924 = vmatpush1.msra.mxu0 0.0
  %3925 = vmatprep.subr.mxu0 0.0
  %3926 = vmatpush1.msra.mxu0 0.0
  %3927 = vmatprep.subr.mxu0 0.0
  %3928 = vmatpush1.msra.mxu0 0.0
  %3929 = vmatprep.subr.mxu0 0.0
  %3930 = vmatpush1.msra.mxu0 0.0
  %3931 = vmatprep.subr.mxu0 0.0
  %3932 = vmatpush1.msra.mxu0 0.0
  %3933 = vmatprep.subr.mxu0 0.0
  %3934 = vmatpush1.msra.mxu0 0.0
  %3935 = vmatprep.subr.mxu0 0.0
  %3936 = vmatpush1.msra.mxu0 0.0
  %3937 = vmatprep.subr.mxu0 0.0
  %3938 = vmatpush1.msra.mxu0 0.0
  %3939 = vmatprep.subr.mxu0 0.0
  %3940 = vmatpush1.msra.mxu0 0.0
  %3941 = vmatprep.subr.mxu0 0.0
  %3942 = vmatpush1.msra.mxu0 0.0
  %3943 = vmatprep.subr.mxu0 0.0
  %3944 = vmatpush1.msra.mxu0 0.0
  %3945 = vmatprep.subr.mxu0 0.0
  %3946 = vmatpush1.msra.mxu0 %v3906
  %3947 = vmatprep.subr.mxu0 0.0
  %3948 = vmatpush1.msra.mxu0 %v3905
  %3949 = vmatprep.subr.mxu0 0.0
  %3950 = vmatpush1.msra.mxu0 %v3904
  %3951 = vmatprep.subr.mxu0 0.0
  %3952 = vmatpush1.msra.mxu0 %v3903
  %3953 = vmatprep.subr.mxu0 0.0
  %3954 = vmatpush2.msra.mxu0 0.0
  %3955 = vmatprep.subr.mxu0 0.0
  %3956 = vmatpush2.msra.mxu0 0.0
  %3957 = vmatprep.subr.mxu0 0.0
  %3958 = vmatpush2.msra.mxu0 0.0
  %3959 = vmatprep.subr.mxu0 0.0
  %3960 = vmatpush2.msra.mxu0 0.0
  %3961 = vmatprep.subr.mxu0 0.0
  %3962 = vmatpush2.msra.mxu0 0.0
  %3963 = vmatprep.subr.mxu0 0.0
  %3964 = vmatpush2.msra.mxu0 0.0
  %3965 = vmatprep.subr.mxu0 0.0
  %3966 = vmatpush2.msra.mxu0 0.0
  %3967 = vmatprep.subr.mxu0 0.0
  %3968 = vmatpush2.msra.mxu0 0.0
  %3969 = vmatprep.subr.mxu0 0.0
  %3970 = vmatpush2.msra.mxu0 0.0
  %3971 = vmatprep.subr.mxu0 0.0
  %3972 = vmatpush2.msra.mxu0 0.0
  %3973 = vmatprep.subr.mxu0 0.0
  %3974 = vmatpush2.msra.mxu0 0.0
  %3975 = vmatprep.subr.mxu0 0.0
  %3976 = vmatpush2.msra.mxu0 0.0
  %3977 = vmatprep.subr.mxu0 0.0
  %3978 = vmatpush2.msra.mxu0 0.0
  %3979 = vmatprep.subr.mxu0 0.0
  %3980 = vmatpush2.msra.mxu0 0.0
  %3981 = vmatprep.subr.mxu0 0.0
  %3982 = vmatpush2.msra.mxu0 0.0
  %3983 = vmatprep.subr.mxu0 0.0
  %3984 = vmatpush2.msra.mxu0 0.0
  %3985 = vmatprep.mubr.f32.mxu0 0.0
  %3986 = vmatmul.mubr.f32.gmra.mxu0 %v3916
  %v3987 = vpop.f32.mrf.mxu0
  %v3988 = vadd.f32 %v3913, %v3987
  %v3989 = vpop.f32.mrf.mxu0
  %3990 = vmatprep.mubr.f32.mxu0 0.0
  %3991 = vmatmul.mubr.f32.gmra.mxu0 %v3919
  %v3992 = vpop.f32.mrf.mxu0
  %v3993 = vadd.f32 %v3913, %v3992
  %v3994 = vpop.f32.mrf.mxu0
  %3995 = vdwg.mxu0
  %v3996 = vmax.f32 %v3988, 0.0
  %v3997 = vmax.f32 %v3993, 0.0
  %s3998 = scalar_lea.vmem %s9, 64
  %v3999 = vld [vmem:[%s3998] sm:$0xff]
  %v4000 = vld [vmem:[%s3998 + $0x8] sm:$0xff]
  %v4001 = vld [vmem:[%s3998 + $0x10] sm:$0xff]
  %v4002 = vld [vmem:[%s3998 + $0x18] sm:$0xff]
  %v4003 = vld [vmem:[%s3998 + $0x20] sm:$0xff]
  %v4004 = vld [vmem:[%s3998 + $0x28] sm:$0xff]
  %v4005 = vld [vmem:[%s3998 + $0x30] sm:$0xff]
  %v4006 = vld [vmem:[%s3998 + $0x38] sm:$0xff]
  %s4007 = scalar_lea.vmem %s10, 1
  %v4008 = vld [vmem:[%s4007] sm:$0x1]
  %v4010 = vlaneseq
  %v4011 = vshrl.u32 %v4010, 7
  %v4012 = vsub.s32 0, %v4011
  %v4013 = vrot.slane %v4008, %v4012
  %v4016 = vsel %vm1967, %v3996, 0
  %v4019 = vsel %vm1967, %v3997, 0
  %4021 = vmatprep.subr.mxu0 0.0
  %4022 = vmatpush1.msra.mxu0 0.0
  %4023 = vmatprep.subr.mxu0 0.0
  %4024 = vmatpush1.msra.mxu0 0.0
  %4025 = vmatprep.subr.mxu0 0.0
  %4026 = vmatpush1.msra.mxu0 0.0
  %4027 = vmatprep.subr.mxu0 0.0
  %4028 = vmatpush1.msra.mxu0 0.0
  %4029 = vmatprep.subr.mxu0 0.0
  %4030 = vmatpush1.msra.mxu0 0.0
  %4031 = vmatprep.subr.mxu0 0.0
  %4032 = vmatpush1.msra.mxu0 0.0
  %4033 = vmatprep.subr.mxu0 0.0
  %4034 = vmatpush1.msra.mxu0 0.0
  %4035 = vmatprep.subr.mxu0 0.0
  %4036 = vmatpush1.msra.mxu0 0.0
  %4037 = vmatprep.subr.mxu0 0.0
  %4038 = vmatpush1.msra.mxu0 %v4006
  %4039 = vmatprep.subr.mxu0 0.0
  %4040 = vmatpush1.msra.mxu0 %v4005
  %4041 = vmatprep.subr.mxu0 0.0
  %4042 = vmatpush1.msra.mxu0 %v4004
  %4043 = vmatprep.subr.mxu0 0.0
  %4044 = vmatpush1.msra.mxu0 %v4003
  %4045 = vmatprep.subr.mxu0 0.0
  %4046 = vmatpush1.msra.mxu0 %v4002
  %4047 = vmatprep.subr.mxu0 0.0
  %4048 = vmatpush1.msra.mxu0 %v4001
  %4049 = vmatprep.subr.mxu0 0.0
  %4050 = vmatpush1.msra.mxu0 %v4000
  %4051 = vmatprep.subr.mxu0 0.0
  %4052 = vmatpush1.msra.mxu0 %v3999
  %4053 = vmatprep.subr.mxu0 0.0
  %4054 = vmatpush2.msra.mxu0 0.0
  %4055 = vmatprep.subr.mxu0 0.0
  %4056 = vmatpush2.msra.mxu0 0.0
  %4057 = vmatprep.subr.mxu0 0.0
  %4058 = vmatpush2.msra.mxu0 0.0
  %4059 = vmatprep.subr.mxu0 0.0
  %4060 = vmatpush2.msra.mxu0 0.0
  %4061 = vmatprep.subr.mxu0 0.0
  %4062 = vmatpush2.msra.mxu0 0.0
  %4063 = vmatprep.subr.mxu0 0.0
  %4064 = vmatpush2.msra.mxu0 0.0
  %4065 = vmatprep.subr.mxu0 0.0
  %4066 = vmatpush2.msra.mxu0 0.0
  %4067 = vmatprep.subr.mxu0 0.0
  %4068 = vmatpush2.msra.mxu0 0.0
  %4069 = vmatprep.subr.mxu0 0.0
  %4070 = vmatpush2.msra.mxu0 0.0
  %4071 = vmatprep.subr.mxu0 0.0
  %4072 = vmatpush2.msra.mxu0 0.0
  %4073 = vmatprep.subr.mxu0 0.0
  %4074 = vmatpush2.msra.mxu0 0.0
  %4075 = vmatprep.subr.mxu0 0.0
  %4076 = vmatpush2.msra.mxu0 0.0
  %4077 = vmatprep.subr.mxu0 0.0
  %4078 = vmatpush2.msra.mxu0 0.0
  %4079 = vmatprep.subr.mxu0 0.0
  %4080 = vmatpush2.msra.mxu0 0.0
  %4081 = vmatprep.subr.mxu0 0.0
  %4082 = vmatpush2.msra.mxu0 0.0
  %4083 = vmatprep.subr.mxu0 0.0
  %4084 = vmatpush2.msra.mxu0 0.0
  %4085 = vmatprep.mubr.f32.mxu0 0.0
  %4086 = vmatmul.mubr.f32.gmra.mxu0 %v4016
  %v4087 = vpop.f32.mrf.mxu0
  %v4088 = vpop.f32.mrf.mxu0
  %4089 = vmatprep.mubr.f32.mxu0 0.0
  %4090 = vmatmul.mubr.f32.gmra.mxu0 %v4019
  %v4091 = vpop.f32.mrf.mxu0
  %v4092 = vadd.f32 %v4013, %v4091
  %v4093 = vpop.f32.mrf.mxu0
  %4094 = vdwg.mxu0
  %v4095 = vadd.f32 %v3901, %v4092
  %v4096 = vsel %vm65, %v4095, 0.0
  %4097 = vadd.xlane.f32.xlu0 %v4096
  %v4098 = vpop.xlane.xlu0 %4097
  %v4099 = vmul.f32 %v4098, %v1819
  %v4100 = vsub.f32 %v4095, %v4099
  %v4101 = vmul.f32 %v4100, %v4100
  %v4102 = vsel %vm65, %v4101, 0.0
  %4103 = vadd.xlane.f32.xlu0 %v4102
  %v4104 = vpop.xlane.xlu0 %4103
  %v4105 = vmul.f32 %v4104, %v1819
  %v4106 = vadd.f32 %v4105, 1e-05
  %v4107 = vrsqrt.pop %v4106
  %v4108 = vmul.f32 %v4100, %v4107
  %s4109 = scalar_lea.vmem %s11, 1
  %v4110 = vld [vmem:[%s4109] sm:$0x1]
  %v4112 = vlaneseq
  %v4113 = vshrl.u32 %v4112, 7
  %v4114 = vsub.s32 0, %v4113
  %v4115 = vrot.slane %v4110, %v4114
  %v4117 = vmul.f32 %v4108, %v4115
  %s4118 = scalar_lea.vmem %s12, 1
  %v4119 = vld [vmem:[%s4118] sm:$0x1]
  %v4121 = vlaneseq
  %v4122 = vshrl.u32 %v4121, 7
  %v4123 = vsub.s32 0, %v4122
  %v4124 = vrot.slane %v4119, %v4123
  %v4126 = vadd.f32 %v4117, %v4124
  %v4127 = vld [vmem:[%s13] sm:$0xff]
  %v4128 = vld [vmem:[%s13 + $0x8] sm:$0xff]
  %v4129 = vld [vmem:[%s13 + $0x10] sm:$0xff]
  %v4130 = vld [vmem:[%s13 + $0x18] sm:$0xff]
  %v4131 = vld [vmem:[#allocation2] sm:$0x1]
  %v4133 = vlaneseq
  %v4134 = vshrl.u32 %v4133, 7
  %v4135 = vsub.s32 0, %v4134
  %v4136 = vrot.slane %v4131, %v4135
  %v4139 = vsel %vm65, %v4126, 0
  %4141 = vmatprep.subr.mxu0 0.0
  %4142 = vmatpush1.msra.mxu0 0.0
  %4143 = vmatprep.subr.mxu0 0.0
  %4144 = vmatpush1.msra.mxu0 0.0
  %4145 = vmatprep.subr.mxu0 0.0
  %4146 = vmatpush1.msra.mxu0 0.0
  %4147 = vmatprep.subr.mxu0 0.0
  %4148 = vmatpush1.msra.mxu0 0.0
  %4149 = vmatprep.subr.mxu0 0.0
  %4150 = vmatpush1.msra.mxu0 0.0
  %4151 = vmatprep.subr.mxu0 0.0
  %4152 = vmatpush1.msra.mxu0 0.0
  %4153 = vmatprep.subr.mxu0 0.0
  %4154 = vmatpush1.msra.mxu0 0.0
  %4155 = vmatprep.subr.mxu0 0.0
  %4156 = vmatpush1.msra.mxu0 0.0
  %4157 = vmatprep.subr.mxu0 0.0
  %4158 = vmatpush1.msra.mxu0 0.0
  %4159 = vmatprep.subr.mxu0 0.0
  %4160 = vmatpush1.msra.mxu0 0.0
  %4161 = vmatprep.subr.mxu0 0.0
  %4162 = vmatpush1.msra.mxu0 0.0
  %4163 = vmatprep.subr.mxu0 0.0
  %4164 = vmatpush1.msra.mxu0 0.0
  %4165 = vmatprep.subr.mxu0 0.0
  %4166 = vmatpush1.msra.mxu0 %v4130
  %4167 = vmatprep.subr.mxu0 0.0
  %4168 = vmatpush1.msra.mxu0 %v4129
  %4169 = vmatprep.subr.mxu0 0.0
  %4170 = vmatpush1.msra.mxu0 %v4128
  %4171 = vmatprep.subr.mxu0 0.0
  %4172 = vmatpush1.msra.mxu0 %v4127
  %4173 = vmatprep.subr.mxu0 0.0
  %4174 = vmatpush2.msra.mxu0 0.0
  %4175 = vmatprep.subr.mxu0 0.0
  %4176 = vmatpush2.msra.mxu0 0.0
  %4177 = vmatprep.subr.mxu0 0.0
  %4178 = vmatpush2.msra.mxu0 0.0
  %4179 = vmatprep.subr.mxu0 0.0
  %4180 = vmatpush2.msra.mxu0 0.0
  %4181 = vmatprep.subr.mxu0 0.0
  %4182 = vmatpush2.msra.mxu0 0.0
  %4183 = vmatprep.subr.mxu0 0.0
  %4184 = vmatpush2.msra.mxu0 0.0
  %4185 = vmatprep.subr.mxu0 0.0
  %4186 = vmatpush2.msra.mxu0 0.0
  %4187 = vmatprep.subr.mxu0 0.0
  %4188 = vmatpush2.msra.mxu0 0.0
  %4189 = vmatprep.subr.mxu0 0.0
  %4190 = vmatpush2.msra.mxu0 0.0
  %4191 = vmatprep.subr.mxu0 0.0
  %4192 = vmatpush2.msra.mxu0 0.0
  %4193 = vmatprep.subr.mxu0 0.0
  %4194 = vmatpush2.msra.mxu0 0.0
  %4195 = vmatprep.subr.mxu0 0.0
  %4196 = vmatpush2.msra.mxu0 0.0
  %4197 = vmatprep.subr.mxu0 0.0
  %4198 = vmatpush2.msra.mxu0 0.0
  %4199 = vmatprep.subr.mxu0 0.0
  %4200 = vmatpush2.msra.mxu0 0.0
  %4201 = vmatprep.subr.mxu0 0.0
  %4202 = vmatpush2.msra.mxu0 0.0
  %4203 = vmatprep.subr.mxu0 0.0
  %4204 = vmatpush2.msra.mxu0 0.0
  %4205 = vmatprep.mubr.f32.mxu0 0.0
  %4206 = vmatmul.mubr.f32.gmra.mxu0 %v4139
  %v4207 = vpop.f32.mrf.mxu0
  %v4208 = vadd.f32 %v4136, %v4207
  %v4209 = vpop.f32.mrf.mxu0
  %4210 = vdwg.mxu0
  %v4211 = vsub.f32 0.0, %v4208
  %v4212 = vmul.f32 %v4211, 1.442695
  %v4213 = vpow.pop %v4212
  %v4214 = vadd.f32 %v4213, 1.0
  %v4215 = vrcp.pop %v4214
  %vm4216 = vcmask 7168
  %4217 = vst.msk [vmem:[%s15] sm:$0xff] %vm4216, %v4215
  // Predicated region
  $region62: #{transformer_model_forward.1} parent=0 // pred_check
    _
  $region63: #{transformer_model_forward.1} parent=0 // pred_check_branch
    %4219 = sbr.rel (0) target = $region65
  $region64: #{transformer_model_forward.1} parent=0 // pred_region
    _
  $region65: #{transformer_model_forward.1} parent=0 // pred_fallthru
    _
  // Predicated region
  $region66: #{transformer_model_forward.1} parent=0 // pred_check
    _
  $region67: #{transformer_model_forward.1} parent=0 // pred_check_branch
    %4221 = sbr.rel (0) target = $region69
  $region68: #{transformer_model_forward.1} parent=0 // pred_region
    _
  $region69: #{transformer_model_forward.1} parent=0 // pred_fallthru
    _

</llo_original>
